<compile_context>
chip_gen: v7x
topology: tpu7x:2x2x1
jax: 0.10.0
libtpu: 0.0.40
codegen_flags: <defaults>
</compile_context>

<pallas_src>
import jax
import jax.numpy as jnp
import numpy as np
from jax.experimental import pallas as pl
from jax.experimental.pallas import tpu as pltpu


# ----------------------------------------------------------------------------
# Fused kernel: conv1+BN+ReLU+pool -> conv2+BN+ReLU+pool -> avgpool+FC
# One grid step per NB-element batch block; everything stays in VMEM.
# ----------------------------------------------------------------------------
def fused_audio_classifier_kernel(
    x_ref,       # (NB, H, W)          f32   input block (Cin=1 squeezed)
    w1_ref,      # (9, C1)             bf16  layer-1 im2col weights (tap-major)
    s1_ref,      # (1, C1)             f32   folded BN scale, layer 1
    b1_ref,      # (1, C1)             f32   folded BN shift (incl. conv bias)
    w2_ref,      # (9*C1, C2)          bf16  layer-2 im2col weights
    s2_ref,      # (1, C2)             f32
    b2_ref,      # (1, C2)             f32
    fcw_ref,     # (C2, K)             f32   FC weight
    fcb_ref,     # (1, K)              f32   FC bias
    out_ref,     # (NB, K)             f32   logits for this batch block
    xpad1_scr,   # VMEM (NB, H+2,  W+2)        f32   halo, layer 1
    xpad2_scr,   # VMEM (NB, H1+2, W1+2, C1)   f32   halo, layer 2
    pool1_scr,   # VMEM (NB*H1, W,  C1)        f32   W-pool staging, layer 1
    pool2_scr,   # VMEM (NB*H2, W1, C2)        f32   W-pool staging, layer 2
):
    NB, H, W = x_ref.shape
    C1 = w1_ref.shape[1]
    C2 = w2_ref.shape[1]
    H1, W1 = H // 2, W // 2        # after pool 1
    H2, W2 = H1 // 2, W1 // 2      # after pool 2
    f32 = jnp.float32

    # ---------------- layer 1: conv3x3 (pad=1, Cin=1) as one im2col matmul --
    # Zero only the 1-px border (interior fully overwritten); done every step
    # so each TensorCore's private scratch is initialized under "parallel".
    xpad1_scr[:, 0:1, :] = jnp.zeros((NB, 1, W + 2), f32)
    xpad1_scr[:, H + 1:H + 2, :] = jnp.zeros((NB, 1, W + 2), f32)
    xpad1_scr[:, :, 0:1] = jnp.zeros((NB, H + 2, 1), f32)
    xpad1_scr[:, :, W + 1:W + 2] = jnp.zeros((NB, H + 2, 1), f32)
    xpad1_scr[:, 1:H + 1, 1:W + 1] = x_ref[...]

    taps1 = [xpad1_scr[:, dy:dy + H, dx:dx + W]            # (NB, H, W) each
             for dy in range(3) for dx in range(3)]
    p1 = jnp.stack(taps1, axis=-1)                         # (NB, H, W, 9)
    p1 = p1.reshape(NB * H * W, 9).astype(jnp.bfloat16)    # single bf16 cast
    y1 = jnp.dot(p1, w1_ref[...], preferred_element_type=f32)   # (M1, C1)
    y1 = jnp.maximum(y1 * s1_ref[...] + b1_ref[...], 0.0)

    # ---------------- maxpool 2x2 / 2 (layer 1) ----------------------------
    # H-pool is a leading-dim reshape + max; W-pool uses sublane-strided
    # scratch reads (avoids full-tensor relayouts).
    hp1 = y1.reshape(NB * H1, 2, W, C1).max(axis=1)        # (NB*H1, W, C1)
    pool1_scr[...] = hp1
    a1 = jnp.maximum(pool1_scr[:, pl.ds(0, W1, stride=2), :],
                     pool1_scr[:, pl.ds(1, W1, stride=2), :])   # (NB*H1, W1, C1)

    # ---------------- layer 2: conv3x3 as one im2col matmul (K=9*C1) -------
    xpad2_scr[:, 0:1, :, :] = jnp.zeros((NB, 1, W1 + 2, C1), f32)
    xpad2_scr[:, H1 + 1:H1 + 2, :, :] = jnp.zeros((NB, 1, W1 + 2, C1), f32)
    xpad2_scr[:, :, 0:1, :] = jnp.zeros((NB, H1 + 2, 1, C1), f32)
    xpad2_scr[:, :, W1 + 1:W1 + 2, :] = jnp.zeros((NB, H1 + 2, 1, C1), f32)
    xpad2_scr[:, 1:H1 + 1, 1:W1 + 1, :] = a1.reshape(NB, H1, W1, C1)

    taps2 = [xpad2_scr[:, dy:dy + H1, dx:dx + W1, :]       # (NB,H1,W1,C1) each
             for dy in range(3) for dx in range(3)]
    p2 = jnp.concatenate(taps2, axis=-1)                   # (NB,H1,W1,9*C1)
    p2 = p2.reshape(NB * H1 * W1, 9 * C1).astype(jnp.bfloat16)
    y2 = jnp.dot(p2, w2_ref[...], preferred_element_type=f32)   # (M2, C2)
    y2 = jnp.maximum(y2 * s2_ref[...] + b2_ref[...], 0.0)

    # ---------------- maxpool 2x2 / 2 (layer 2) ----------------------------
    hp2 = y2.reshape(NB * H2, 2, W1, C2).max(axis=1)       # (NB*H2, W1, C2)
    pool2_scr[...] = hp2
    a2 = jnp.maximum(pool2_scr[:, pl.ds(0, W2, stride=2), :],
                     pool2_scr[:, pl.ds(1, W2, stride=2), :])   # (NB*H2, W2, C2)

    # ---------------- adaptive avg-pool (1,1) + FC head --------------------
    # TODO(synk): Dropout layers are the identity (inference semantics).
    a2b = a2.reshape(NB, H2, W2, C2)
    pooled = jnp.sum(jnp.sum(a2b, axis=1), axis=1) * (1.0 / (H2 * W2))  # (NB,C2)
    out_ref[...] = (jnp.dot(pooled, fcw_ref[...], preferred_element_type=f32)
                    + fcb_ref[...])                         # one (NB, K) store


def audio_classifier_forward(x_nchw, params, *, nb=2):
    """Inference forward of AudioClassifier as a single fused pallas_call."""
    x = x_nchw[:, 0].astype(jnp.float32)                   # (N, H, W): Cin == 1
    N, H, W = x.shape
    # TODO(synk): PyTorch MaxPool2d floors odd spatial sizes; this fused kernel
    # requires H and W divisible by 4 (two 2x2/2 pools).
    assert H % 4 == 0 and W % 4 == 0
    if N % nb != 0:
        nb = 1
    steps = N // nb

    l1, l2 = params["conv"]
    C1 = l1["w_im2col"].shape[-1]
    C2 = l2["w_im2col"].shape[-1]
    K = params["fc_w"].shape[-1]
    H1, W1, H2 = H // 2, W // 2, H // 4

    out = pl.pallas_call(
        fused_audio_classifier_kernel,
        out_shape=jax.ShapeDtypeStruct((steps, nb, K), jnp.float32),
        grid=(steps,),
        in_specs=[
            pl.BlockSpec((nb, H, W), lambda b: (b, 0, 0)),
            pl.BlockSpec((9, C1), lambda b: (0, 0)),
            pl.BlockSpec((1, C1), lambda b: (0, 0)),
            pl.BlockSpec((1, C1), lambda b: (0, 0)),
            pl.BlockSpec((9 * C1, C2), lambda b: (0, 0)),
            pl.BlockSpec((1, C2), lambda b: (0, 0)),
            pl.BlockSpec((1, C2), lambda b: (0, 0)),
            pl.BlockSpec((C2, K), lambda b: (0, 0)),
            pl.BlockSpec((1, K), lambda b: (0, 0)),
        ],
        out_specs=pl.BlockSpec((None, nb, K), lambda b: (b, 0, 0)),
        scratch_shapes=[
            pltpu.VMEM((nb, H + 2, W + 2), jnp.float32),
            pltpu.VMEM((nb, H1 + 2, W1 + 2, C1), jnp.float32),
            pltpu.VMEM((nb * H1, W, C1), jnp.float32),
            pltpu.VMEM((nb * H2, W1, C2), jnp.float32),
        ],
        compiler_params=pltpu.CompilerParams(
            dimension_semantics=("parallel",)),   # v7x: batch blocks across TCs
    )(x, l1["w_im2col"], l1["scale"], l1["shift"],
      l2["w_im2col"], l2["scale"], l2["shift"],
      params["fc_w"], params["fc_b"])
    return out.reshape(N, K)


# ----------------------------------------------------------------------------
# Deterministic parameter construction (eval-mode BN folded into scale/shift)
# ----------------------------------------------------------------------------
def make_params(key, num_classes=10):
    conv_layers = []
    in_ch, out_ch = 1, 64
    eps = 1e-5
    for _ in range(2):                                   # num_layers = 2
        key, k1, k2, k3, k4, k5, k6 = jax.random.split(key, 7)
        w = 0.1 * jax.random.normal(k1, (3, 3, in_ch, out_ch), jnp.float32)
        b = 0.1 * jax.random.normal(k2, (out_ch,), jnp.float32)
        gamma = 1.0 + 0.1 * jax.random.normal(k3, (out_ch,), jnp.float32)
        beta = 0.1 * jax.random.normal(k4, (out_ch,), jnp.float32)
        rmean = 0.1 * jax.random.normal(k5, (out_ch,), jnp.float32)
        rvar = 1.0 + 0.1 * jax.random.uniform(k6, (out_ch,), jnp.float32)
        scale = gamma / jnp.sqrt(rvar + eps)
        shift = beta + scale * (b - rmean)               # fold conv bias + BN
        conv_layers.append({
            "w4": w,                                     # (3,3,ci,co) for ref
            # im2col layout: row = (3*dy+dx)*ci + cin  — matches the kernel's
            # tap-major concatenation order; MXU operands in bf16.
            "w_im2col": w.reshape(9 * in_ch, out_ch).astype(jnp.bfloat16),
            "scale": scale.reshape(1, out_ch),
            "shift": shift.reshape(1, out_ch),
        })
        in_ch, out_ch = out_ch, out_ch * 2
    key, kf1, kf2 = jax.random.split(key, 3)
    fc_w = 0.1 * jax.random.normal(kf1, (in_ch, num_classes), jnp.float32)
    fc_b = 0.1 * jax.random.normal(kf2, (1, num_classes), jnp.float32)
    return {"conv": conv_layers, "fc_w": fc_w, "fc_b": fc_b}


def reference_forward(x_nchw, params):
    # Pure-JAX reference (mirrors the kernel's bf16 MXU convs, f32 everything
    # else).
    x = jnp.transpose(x_nchw, (0, 2, 3, 1)).astype(jnp.float32)   # NHWC
    for layer in params["conv"]:
        w = layer["w4"]
        y = jax.lax.conv_general_dilated(
            x.astype(jnp.bfloat16), w.astype(jnp.bfloat16),
            window_strides=(1, 1), padding=((1, 1), (1, 1)),
            dimension_numbers=("NHWC", "HWIO", "NHWC"),
            preferred_element_type=jnp.float32)
        y = y * layer["scale"][0] + layer["shift"][0]
        y = jnp.maximum(y, 0.0)
        n, h, wdt, c = y.shape
        y = y.reshape(n, h // 2, 2, wdt // 2, 2, c).max(axis=(2, 4))
        x = y
    pooled = x.mean(axis=(1, 2))
    return pooled @ params["fc_w"] + params["fc_b"]


if __name__ == "__main__":
    key = jax.random.PRNGKey(0)
    key, kx = jax.random.split(key)

    num_classes = 10
    # Small input consistent with the module: NCHW, 1 input channel.
    # batch=4 with nb=2 -> grid of 2 batch-blocks (both v7x TensorCores busy).
    x = jax.random.normal(kx, (4, 1, 16, 16), jnp.float32)
    params = make_params(key, num_classes=num_classes)

    out = jax.block_until_ready(audio_classifier_forward(x, params, nb=2))
    ref = jax.block_until_ready(reference_forward(x, params))

    np.testing.assert_allclose(np.asarray(out), np.asarray(ref),
                               rtol=2e-3, atol=2e-3)
    assert out.shape == (4, num_classes)
    print("KERNEL_OK")
</pallas_src>

<mosaic_0001>
module attributes {stable_mosaic.version = 11 : i64} {
  func.func @fused_audio_classifier_kernel(%arg0: i32, %arg1: memref<2x16x16xf32, #tpu.memory_space<vmem>>, %arg2: memref<9x64xbf16, #tpu.memory_space<vmem>>, %arg3: memref<1x64xf32, #tpu.memory_space<vmem>>, %arg4: memref<1x64xf32, #tpu.memory_space<vmem>>, %arg5: memref<576x128xbf16, #tpu.memory_space<vmem>>, %arg6: memref<1x128xf32, #tpu.memory_space<vmem>>, %arg7: memref<1x128xf32, #tpu.memory_space<vmem>>, %arg8: memref<128x10xf32, #tpu.memory_space<vmem>>, %arg9: memref<1x10xf32, #tpu.memory_space<vmem>>, %arg10: memref<1x2x10xf32, #tpu.memory_space<vmem>>, %arg11: memref<2x18x18xf32, #tpu.memory_space<vmem>>, %arg12: memref<2x10x10x64xf32, #tpu.memory_space<vmem>>, %arg13: memref<16x16x64xf32, #tpu.memory_space<vmem>>, %arg14: memref<8x8x128xf32, #tpu.memory_space<vmem>>) attributes {dimension_semantics = [#tpu.dimension_semantics<parallel>], iteration_bounds = array<i64: 2>, scalar_prefetch = 0 : i64, scratch_operands = 4 : i64, tpu.core_type = #tpu.core_type<tc>, window_params = [{transform_indices = @transform_0, window_bounds = array<i64: 2, 16, 16>}, {pipeline_mode = #tpu.pipeline_mode<synchronous>, transform_indices = @transform_1, window_bounds = array<i64: 9, 64>}, {pipeline_mode = #tpu.pipeline_mode<synchronous>, transform_indices = @transform_2, window_bounds = array<i64: 1, 64>}, {pipeline_mode = #tpu.pipeline_mode<synchronous>, transform_indices = @transform_3, window_bounds = array<i64: 1, 64>}, {pipeline_mode = #tpu.pipeline_mode<synchronous>, transform_indices = @transform_4, window_bounds = array<i64: 576, 128>}, {pipeline_mode = #tpu.pipeline_mode<synchronous>, transform_indices = @transform_5, window_bounds = array<i64: 1, 128>}, {pipeline_mode = #tpu.pipeline_mode<synchronous>, transform_indices = @transform_6, window_bounds = array<i64: 1, 128>}, {pipeline_mode = #tpu.pipeline_mode<synchronous>, transform_indices = @transform_7, window_bounds = array<i64: 128, 10>}, {pipeline_mode = #tpu.pipeline_mode<synchronous>, transform_indices = @transform_8, window_bounds = array<i64: 1, 10>}, {transform_indices = @transform_9, window_bounds = array<i64: 1, 2, 10>}]} {
    %cst = arith.constant 0.000000e+00 : f32
    %0 = vector.broadcast %cst : f32 to vector<2x1x18xf32>
    %c0 = arith.constant 0 : index
    %c0_0 = arith.constant 0 : index
    %c0_1 = arith.constant 0 : index
    %1 = vector.load %arg11[%c0, %c0_0, %c0_1] : memref<2x18x18xf32, #tpu.memory_space<vmem>>, vector<2x1x18xf32>
    tpu.vector_store %arg11[%c0, %c0_0, %c0_1], %0 {strides = array<i32>} : memref<2x18x18xf32, #tpu.memory_space<vmem>>, vector<2x1x18xf32>,
    %cst_2 = arith.constant 0.000000e+00 : f32
    %2 = vector.broadcast %cst_2 : f32 to vector<2x1x18xf32>
    %c0_3 = arith.constant 0 : index
    %c17 = arith.constant 17 : index
    %c0_4 = arith.constant 0 : index
    %3 = vector.load %arg11[%c0_3, %c17, %c0_4] : memref<2x18x18xf32, #tpu.memory_space<vmem>>, vector<2x1x18xf32>
    tpu.vector_store %arg11[%c0_3, %c17, %c0_4], %2 {strides = array<i32>} : memref<2x18x18xf32, #tpu.memory_space<vmem>>, vector<2x1x18xf32>,
    %cst_5 = arith.constant 0.000000e+00 : f32
    %4 = vector.broadcast %cst_5 : f32 to vector<2x18x1xf32>
    %c0_6 = arith.constant 0 : index
    %c0_7 = arith.constant 0 : index
    %c0_8 = arith.constant 0 : index
    %5 = vector.load %arg11[%c0_6, %c0_7, %c0_8] : memref<2x18x18xf32, #tpu.memory_space<vmem>>, vector<2x18x1xf32>
    tpu.vector_store %arg11[%c0_6, %c0_7, %c0_8], %4 {strides = array<i32>} : memref<2x18x18xf32, #tpu.memory_space<vmem>>, vector<2x18x1xf32>,
    %cst_9 = arith.constant 0.000000e+00 : f32
    %6 = vector.broadcast %cst_9 : f32 to vector<2x18x1xf32>
    %c0_10 = arith.constant 0 : index
    %c0_11 = arith.constant 0 : index
    %c17_12 = arith.constant 17 : index
    %7 = vector.load %arg11[%c0_10, %c0_11, %c17_12] : memref<2x18x18xf32, #tpu.memory_space<vmem>>, vector<2x18x1xf32>
    tpu.vector_store %arg11[%c0_10, %c0_11, %c17_12], %6 {strides = array<i32>} : memref<2x18x18xf32, #tpu.memory_space<vmem>>, vector<2x18x1xf32>,
    %c0_13 = arith.constant 0 : index
    %c0_14 = arith.constant 0 : index
    %c0_15 = arith.constant 0 : index
    %8 = vector.load %arg1[%c0_13, %c0_14, %c0_15] : memref<2x16x16xf32, #tpu.memory_space<vmem>>, vector<2x16x16xf32>
    %c0_16 = arith.constant 0 : index
    %c1 = arith.constant 1 : index
    %c1_17 = arith.constant 1 : index
    %9 = vector.load %arg11[%c0_16, %c1, %c1_17] : memref<2x18x18xf32, #tpu.memory_space<vmem>>, vector<2x16x16xf32>
    tpu.vector_store %arg11[%c0_16, %c1, %c1_17], %8 {strides = array<i32>} : memref<2x18x18xf32, #tpu.memory_space<vmem>>, vector<2x16x16xf32>,
    %c0_18 = arith.constant 0 : index
    %c0_19 = arith.constant 0 : index
    %c0_20 = arith.constant 0 : index
    %10 = vector.load %arg11[%c0_18, %c0_19, %c0_20] : memref<2x18x18xf32, #tpu.memory_space<vmem>>, vector<2x16x16xf32>
    %c0_21 = arith.constant 0 : index
    %c0_22 = arith.constant 0 : index
    %c1_23 = arith.constant 1 : index
    %11 = vector.load %arg11[%c0_21, %c0_22, %c1_23] : memref<2x18x18xf32, #tpu.memory_space<vmem>>, vector<2x16x16xf32>
    %c0_24 = arith.constant 0 : index
    %c0_25 = arith.constant 0 : index
    %c2 = arith.constant 2 : index
    %12 = vector.load %arg11[%c0_24, %c0_25, %c2] : memref<2x18x18xf32, #tpu.memory_space<vmem>>, vector<2x16x16xf32>
    %c0_26 = arith.constant 0 : index
    %c1_27 = arith.constant 1 : index
    %c0_28 = arith.constant 0 : index
    %13 = vector.load %arg11[%c0_26, %c1_27, %c0_28] : memref<2x18x18xf32, #tpu.memory_space<vmem>>, vector<2x16x16xf32>
    %c0_29 = arith.constant 0 : index
    %c1_30 = arith.constant 1 : index
    %c1_31 = arith.constant 1 : index
    %14 = vector.load %arg11[%c0_29, %c1_30, %c1_31] : memref<2x18x18xf32, #tpu.memory_space<vmem>>, vector<2x16x16xf32>
    %c0_32 = arith.constant 0 : index
    %c1_33 = arith.constant 1 : index
    %c2_34 = arith.constant 2 : index
    %15 = vector.load %arg11[%c0_32, %c1_33, %c2_34] : memref<2x18x18xf32, #tpu.memory_space<vmem>>, vector<2x16x16xf32>
    %c0_35 = arith.constant 0 : index
    %c2_36 = arith.constant 2 : index
    %c0_37 = arith.constant 0 : index
    %16 = vector.load %arg11[%c0_35, %c2_36, %c0_37] : memref<2x18x18xf32, #tpu.memory_space<vmem>>, vector<2x16x16xf32>
    %c0_38 = arith.constant 0 : index
    %c2_39 = arith.constant 2 : index
    %c1_40 = arith.constant 1 : index
    %17 = vector.load %arg11[%c0_38, %c2_39, %c1_40] : memref<2x18x18xf32, #tpu.memory_space<vmem>>, vector<2x16x16xf32>
    %c0_41 = arith.constant 0 : index
    %c2_42 = arith.constant 2 : index
    %c2_43 = arith.constant 2 : index
    %18 = vector.load %arg11[%c0_41, %c2_42, %c2_43] : memref<2x18x18xf32, #tpu.memory_space<vmem>>, vector<2x16x16xf32>
    %19 = vector.shape_cast %10 : vector<2x16x16xf32> to vector<2x16x16x1xf32>
    %20 = vector.shape_cast %11 : vector<2x16x16xf32> to vector<2x16x16x1xf32>
    %21 = vector.shape_cast %12 : vector<2x16x16xf32> to vector<2x16x16x1xf32>
    %22 = vector.shape_cast %13 : vector<2x16x16xf32> to vector<2x16x16x1xf32>
    %23 = vector.shape_cast %14 : vector<2x16x16xf32> to vector<2x16x16x1xf32>
    %24 = vector.shape_cast %15 : vector<2x16x16xf32> to vector<2x16x16x1xf32>
    %25 = vector.shape_cast %16 : vector<2x16x16xf32> to vector<2x16x16x1xf32>
    %26 = vector.shape_cast %17 : vector<2x16x16xf32> to vector<2x16x16x1xf32>
    %27 = vector.shape_cast %18 : vector<2x16x16xf32> to vector<2x16x16x1xf32>
    %28 = tpu.concatenate %19, %20, %21, %22, %23, %24, %25, %26, %27 in 3 : vector<2x16x16x1xf32>, vector<2x16x16x1xf32>, vector<2x16x16x1xf32>, vector<2x16x16x1xf32>, vector<2x16x16x1xf32>, vector<2x16x16x1xf32>, vector<2x16x16x1xf32>, vector<2x16x16x1xf32>, vector<2x16x16x1xf32> -> vector<2x16x16x9xf32>
    %29 = vector.shape_cast %28 : vector<2x16x16x9xf32> to vector<512x9xf32>
    %30 = arith.truncf %29 : vector<512x9xf32> to vector<512x9xbf16>
    %c0_44 = arith.constant 0 : index
    %c0_45 = arith.constant 0 : index
    %31 = vector.load %arg2[%c0_44, %c0_45] : memref<9x64xbf16, #tpu.memory_space<vmem>>, vector<9x64xbf16>
    %cst_46 = arith.constant dense<0.000000e+00> : vector<512x64xf32>
    %32 = tpu.matmul %30, %31, %cst_46 {dimension_numbers = #tpu.dot_dimension_numbers<[1], [0], [0], [1], [0, 0, 1, 1], [], []>} : vector<512x9xbf16>, vector<9x64xbf16>, vector<512x64xf32> -> vector<512x64xf32>
    %c0_47 = arith.constant 0 : index
    %c0_48 = arith.constant 0 : index
    %33 = vector.load %arg3[%c0_47, %c0_48] : memref<1x64xf32, #tpu.memory_space<vmem>>, vector<1x64xf32>
    %34 = vector.broadcast %33 : vector<1x64xf32> to vector<512x64xf32>
    %35 = arith.mulf %32, %34 : vector<512x64xf32>
    %c0_49 = arith.constant 0 : index
    %c0_50 = arith.constant 0 : index
    %36 = vector.load %arg4[%c0_49, %c0_50] : memref<1x64xf32, #tpu.memory_space<vmem>>, vector<1x64xf32>
    %37 = vector.broadcast %36 : vector<1x64xf32> to vector<512x64xf32>
    %38 = arith.addf %35, %37 : vector<512x64xf32>
    %cst_51 = arith.constant 0.000000e+00 : f32
    %39 = vector.broadcast %cst_51 : f32 to vector<512x64xf32>
    %40 = arith.maximumf %38, %39 : vector<512x64xf32>
    %41 = vector.shape_cast %40 : vector<512x64xf32> to vector<16x2x16x64xf32>
    %cst_52 = arith.constant dense<0xFF800000> : vector<16x16x64xf32>
    %42 = vector.multi_reduction <maximumf>, %41, %cst_52 [1] : vector<16x2x16x64xf32> to vector<16x16x64xf32>
    %c0_53 = arith.constant 0 : index
    %c0_54 = arith.constant 0 : index
    %c0_55 = arith.constant 0 : index
    %43 = vector.load %arg13[%c0_53, %c0_54, %c0_55] : memref<16x16x64xf32, #tpu.memory_space<vmem>>, vector<16x16x64xf32>
    tpu.vector_store %arg13[%c0_53, %c0_54, %c0_55], %42 {strides = array<i32>} : memref<16x16x64xf32, #tpu.memory_space<vmem>>, vector<16x16x64xf32>,
    %c0_56 = arith.constant 0 : index
    %c0_57 = arith.constant 0 : index
    %c0_58 = arith.constant 0 : index
    %44 = tpu.strided_load %arg13[%c0_56, %c0_57, %c0_58] {strides = array<i32: 1, 2, 1>} : memref<16x16x64xf32, #tpu.memory_space<vmem>>, vector<16x8x64xf32>
    %c0_59 = arith.constant 0 : index
    %c1_60 = arith.constant 1 : index
    %c0_61 = arith.constant 0 : index
    %45 = tpu.strided_load %arg13[%c0_59, %c1_60, %c0_61] {strides = array<i32: 1, 2, 1>} : memref<16x16x64xf32, #tpu.memory_space<vmem>>, vector<16x8x64xf32>
    %46 = arith.maximumf %44, %45 : vector<16x8x64xf32>
    %cst_62 = arith.constant 0.000000e+00 : f32
    %47 = vector.broadcast %cst_62 : f32 to vector<2x1x10x64xf32>
    %c0_63 = arith.constant 0 : index
    %c0_64 = arith.constant 0 : index
    %c0_65 = arith.constant 0 : index
    %c0_66 = arith.constant 0 : index
    %48 = vector.load %arg12[%c0_63, %c0_64, %c0_65, %c0_66] : memref<2x10x10x64xf32, #tpu.memory_space<vmem>>, vector<2x1x10x64xf32>
    tpu.vector_store %arg12[%c0_63, %c0_64, %c0_65, %c0_66], %47 {strides = array<i32>} : memref<2x10x10x64xf32, #tpu.memory_space<vmem>>, vector<2x1x10x64xf32>,
    %cst_67 = arith.constant 0.000000e+00 : f32
    %49 = vector.broadcast %cst_67 : f32 to vector<2x1x10x64xf32>
    %c0_68 = arith.constant 0 : index
    %c9 = arith.constant 9 : index
    %c0_69 = arith.constant 0 : index
    %c0_70 = arith.constant 0 : index
    %50 = vector.load %arg12[%c0_68, %c9, %c0_69, %c0_70] : memref<2x10x10x64xf32, #tpu.memory_space<vmem>>, vector<2x1x10x64xf32>
    tpu.vector_store %arg12[%c0_68, %c9, %c0_69, %c0_70], %49 {strides = array<i32>} : memref<2x10x10x64xf32, #tpu.memory_space<vmem>>, vector<2x1x10x64xf32>,
    %cst_71 = arith.constant 0.000000e+00 : f32
    %51 = vector.broadcast %cst_71 : f32 to vector<2x10x1x64xf32>
    %c0_72 = arith.constant 0 : index
    %c0_73 = arith.constant 0 : index
    %c0_74 = arith.constant 0 : index
    %c0_75 = arith.constant 0 : index
    %52 = vector.load %arg12[%c0_72, %c0_73, %c0_74, %c0_75] : memref<2x10x10x64xf32, #tpu.memory_space<vmem>>, vector<2x10x1x64xf32>
    tpu.vector_store %arg12[%c0_72, %c0_73, %c0_74, %c0_75], %51 {strides = array<i32>} : memref<2x10x10x64xf32, #tpu.memory_space<vmem>>, vector<2x10x1x64xf32>,
    %cst_76 = arith.constant 0.000000e+00 : f32
    %53 = vector.broadcast %cst_76 : f32 to vector<2x10x1x64xf32>
    %c0_77 = arith.constant 0 : index
    %c0_78 = arith.constant 0 : index
    %c9_79 = arith.constant 9 : index
    %c0_80 = arith.constant 0 : index
    %54 = vector.load %arg12[%c0_77, %c0_78, %c9_79, %c0_80] : memref<2x10x10x64xf32, #tpu.memory_space<vmem>>, vector<2x10x1x64xf32>
    tpu.vector_store %arg12[%c0_77, %c0_78, %c9_79, %c0_80], %53 {strides = array<i32>} : memref<2x10x10x64xf32, #tpu.memory_space<vmem>>, vector<2x10x1x64xf32>,
    %55 = vector.shape_cast %46 : vector<16x8x64xf32> to vector<2x8x8x64xf32>
    %c0_81 = arith.constant 0 : index
    %c1_82 = arith.constant 1 : index
    %c1_83 = arith.constant 1 : index
    %c0_84 = arith.constant 0 : index
    %56 = vector.load %arg12[%c0_81, %c1_82, %c1_83, %c0_84] : memref<2x10x10x64xf32, #tpu.memory_space<vmem>>, vector<2x8x8x64xf32>
    tpu.vector_store %arg12[%c0_81, %c1_82, %c1_83, %c0_84], %55 {strides = array<i32>} : memref<2x10x10x64xf32, #tpu.memory_space<vmem>>, vector<2x8x8x64xf32>,
    %c0_85 = arith.constant 0 : index
    %c0_86 = arith.constant 0 : index
    %c0_87 = arith.constant 0 : index
    %c0_88 = arith.constant 0 : index
    %57 = vector.load %arg12[%c0_85, %c0_86, %c0_87, %c0_88] : memref<2x10x10x64xf32, #tpu.memory_space<vmem>>, vector<2x8x8x64xf32>
    %c0_89 = arith.constant 0 : index
    %c0_90 = arith.constant 0 : index
    %c1_91 = arith.constant 1 : index
    %c0_92 = arith.constant 0 : index
    %58 = vector.load %arg12[%c0_89, %c0_90, %c1_91, %c0_92] : memref<2x10x10x64xf32, #tpu.memory_space<vmem>>, vector<2x8x8x64xf32>
    %c0_93 = arith.constant 0 : index
    %c0_94 = arith.constant 0 : index
    %c2_95 = arith.constant 2 : index
    %c0_96 = arith.constant 0 : index
    %59 = vector.load %arg12[%c0_93, %c0_94, %c2_95, %c0_96] : memref<2x10x10x64xf32, #tpu.memory_space<vmem>>, vector<2x8x8x64xf32>
    %c0_97 = arith.constant 0 : index
    %c1_98 = arith.constant 1 : index
    %c0_99 = arith.constant 0 : index
    %c0_100 = arith.constant 0 : index
    %60 = vector.load %arg12[%c0_97, %c1_98, %c0_99, %c0_100] : memref<2x10x10x64xf32, #tpu.memory_space<vmem>>, vector<2x8x8x64xf32>
    %c0_101 = arith.constant 0 : index
    %c1_102 = arith.constant 1 : index
    %c1_103 = arith.constant 1 : index
    %c0_104 = arith.constant 0 : index
    %61 = vector.load %arg12[%c0_101, %c1_102, %c1_103, %c0_104] : memref<2x10x10x64xf32, #tpu.memory_space<vmem>>, vector<2x8x8x64xf32>
    %c0_105 = arith.constant 0 : index
    %c1_106 = arith.constant 1 : index
    %c2_107 = arith.constant 2 : index
    %c0_108 = arith.constant 0 : index
    %62 = vector.load %arg12[%c0_105, %c1_106, %c2_107, %c0_108] : memref<2x10x10x64xf32, #tpu.memory_space<vmem>>, vector<2x8x8x64xf32>
    %c0_109 = arith.constant 0 : index
    %c2_110 = arith.constant 2 : index
    %c0_111 = arith.constant 0 : index
    %c0_112 = arith.constant 0 : index
    %63 = vector.load %arg12[%c0_109, %c2_110, %c0_111, %c0_112] : memref<2x10x10x64xf32, #tpu.memory_space<vmem>>, vector<2x8x8x64xf32>
    %c0_113 = arith.constant 0 : index
    %c2_114 = arith.constant 2 : index
    %c1_115 = arith.constant 1 : index
    %c0_116 = arith.constant 0 : index
    %64 = vector.load %arg12[%c0_113, %c2_114, %c1_115, %c0_116] : memref<2x10x10x64xf32, #tpu.memory_space<vmem>>, vector<2x8x8x64xf32>
    %c0_117 = arith.constant 0 : index
    %c2_118 = arith.constant 2 : index
    %c2_119 = arith.constant 2 : index
    %c0_120 = arith.constant 0 : index
    %65 = vector.load %arg12[%c0_117, %c2_118, %c2_119, %c0_120] : memref<2x10x10x64xf32, #tpu.memory_space<vmem>>, vector<2x8x8x64xf32>
    %66 = tpu.concatenate %57, %58, %59, %60, %61, %62, %63, %64, %65 in 3 : vector<2x8x8x64xf32>, vector<2x8x8x64xf32>, vector<2x8x8x64xf32>, vector<2x8x8x64xf32>, vector<2x8x8x64xf32>, vector<2x8x8x64xf32>, vector<2x8x8x64xf32>, vector<2x8x8x64xf32>, vector<2x8x8x64xf32> -> vector<2x8x8x576xf32>
    %67 = vector.shape_cast %66 : vector<2x8x8x576xf32> to vector<128x576xf32>
    %68 = arith.truncf %67 : vector<128x576xf32> to vector<128x576xbf16>
    %c0_121 = arith.constant 0 : index
    %c0_122 = arith.constant 0 : index
    %69 = vector.load %arg5[%c0_121, %c0_122] : memref<576x128xbf16, #tpu.memory_space<vmem>>, vector<576x128xbf16>
    %cst_123 = arith.constant dense<0.000000e+00> : vector<128x128xf32>
    %70 = tpu.matmul %68, %69, %cst_123 {dimension_numbers = #tpu.dot_dimension_numbers<[1], [0], [0], [1], [0, 0, 1, 1], [], []>} : vector<128x576xbf16>, vector<576x128xbf16>, vector<128x128xf32> -> vector<128x128xf32>
    %c0_124 = arith.constant 0 : index
    %c0_125 = arith.constant 0 : index
    %71 = vector.load %arg6[%c0_124, %c0_125] : memref<1x128xf32, #tpu.memory_space<vmem>>, vector<1x128xf32>
    %72 = vector.broadcast %71 : vector<1x128xf32> to vector<128x128xf32>
    %73 = arith.mulf %70, %72 : vector<128x128xf32>
    %c0_126 = arith.constant 0 : index
    %c0_127 = arith.constant 0 : index
    %74 = vector.load %arg7[%c0_126, %c0_127] : memref<1x128xf32, #tpu.memory_space<vmem>>, vector<1x128xf32>
    %75 = vector.broadcast %74 : vector<1x128xf32> to vector<128x128xf32>
    %76 = arith.addf %73, %75 : vector<128x128xf32>
    %cst_128 = arith.constant 0.000000e+00 : f32
    %77 = vector.broadcast %cst_128 : f32 to vector<128x128xf32>
    %78 = arith.maximumf %76, %77 : vector<128x128xf32>
    %79 = vector.shape_cast %78 : vector<128x128xf32> to vector<8x2x8x128xf32>
    %cst_129 = arith.constant dense<0xFF800000> : vector<8x8x128xf32>
    %80 = vector.multi_reduction <maximumf>, %79, %cst_129 [1] : vector<8x2x8x128xf32> to vector<8x8x128xf32>
    %c0_130 = arith.constant 0 : index
    %c0_131 = arith.constant 0 : index
    %c0_132 = arith.constant 0 : index
    %81 = vector.load %arg14[%c0_130, %c0_131, %c0_132] : memref<8x8x128xf32, #tpu.memory_space<vmem>>, vector<8x8x128xf32>
    tpu.vector_store %arg14[%c0_130, %c0_131, %c0_132], %80 {strides = array<i32>} : memref<8x8x128xf32, #tpu.memory_space<vmem>>, vector<8x8x128xf32>,
    %c0_133 = arith.constant 0 : index
    %c0_134 = arith.constant 0 : index
    %c0_135 = arith.constant 0 : index
    %82 = tpu.strided_load %arg14[%c0_133, %c0_134, %c0_135] {strides = array<i32: 1, 2, 1>} : memref<8x8x128xf32, #tpu.memory_space<vmem>>, vector<8x4x128xf32>
    %c0_136 = arith.constant 0 : index
    %c1_137 = arith.constant 1 : index
    %c0_138 = arith.constant 0 : index
    %83 = tpu.strided_load %arg14[%c0_136, %c1_137, %c0_138] {strides = array<i32: 1, 2, 1>} : memref<8x8x128xf32, #tpu.memory_space<vmem>>, vector<8x4x128xf32>
    %84 = arith.maximumf %82, %83 : vector<8x4x128xf32>
    %85 = vector.shape_cast %84 : vector<8x4x128xf32> to vector<2x4x4x128xf32>
    %cst_139 = arith.constant dense<0.000000e+00> : vector<2x4x128xf32>
    %86 = vector.multi_reduction <add>, %85, %cst_139 [1] : vector<2x4x4x128xf32> to vector<2x4x128xf32>
    %cst_140 = arith.constant dense<0.000000e+00> : vector<2x128xf32>
    %87 = vector.multi_reduction <add>, %86, %cst_140 [1] : vector<2x4x128xf32> to vector<2x128xf32>
    %cst_141 = arith.constant 6.250000e-02 : f32
    %88 = vector.broadcast %cst_141 : f32 to vector<2x128xf32>
    %89 = arith.mulf %87, %88 : vector<2x128xf32>
    %c0_142 = arith.constant 0 : index
    %c0_143 = arith.constant 0 : index
    %90 = vector.load %arg8[%c0_142, %c0_143] : memref<128x10xf32, #tpu.memory_space<vmem>>, vector<128x10xf32>
    %cst_144 = arith.constant dense<0.000000e+00> : vector<2x10xf32>
    %91 = tpu.matmul %89, %90, %cst_144 {dimension_numbers = #tpu.dot_dimension_numbers<[1], [0], [0], [1], [0, 0, 1, 1], [], []>} : vector<2x128xf32>, vector<128x10xf32>, vector<2x10xf32> -> vector<2x10xf32>
    %c0_145 = arith.constant 0 : index
    %c0_146 = arith.constant 0 : index
    %92 = vector.load %arg9[%c0_145, %c0_146] : memref<1x10xf32, #tpu.memory_space<vmem>>, vector<1x10xf32>
    %93 = vector.broadcast %92 : vector<1x10xf32> to vector<2x10xf32>
    %94 = arith.addf %91, %93 : vector<2x10xf32>
    %c0_147 = arith.constant 0 : index
    %c0_148 = arith.constant 0 : index
    %c0_149 = arith.constant 0 : index
    %95 = vector.load %arg10[%c0_147, %c0_148, %c0_149] : memref<1x2x10xf32, #tpu.memory_space<vmem>>, vector<1x2x10xf32>
    %96 = vector.shape_cast %95 : vector<1x2x10xf32> to vector<2x10xf32>
    %97 = vector.shape_cast %94 : vector<2x10xf32> to vector<1x2x10xf32>
    tpu.vector_store %arg10[%c0_147, %c0_148, %c0_149], %97 {strides = array<i32>} : memref<1x2x10xf32, #tpu.memory_space<vmem>>, vector<1x2x10xf32>,
    return
  }
  func.func @transform_0(%arg0: i32) -> (i32, i32, i32) {
    %c0_i32 = arith.constant 0 : i32
    %c0_i32_0 = arith.constant 0 : i32
    %c0_i32_1 = arith.constant 0 : i32
    return %arg0, %c0_i32, %c0_i32_0 : i32, i32, i32
  }
  func.func @transform_1(%arg0: i32) -> (i32, i32) {
    %c0_i32 = arith.constant 0 : i32
    %c0_i32_0 = arith.constant 0 : i32
    %c0_i32_1 = arith.constant 0 : i32
    return %c0_i32, %c0_i32_0 : i32, i32
  }
  func.func @transform_2(%arg0: i32) -> (i32, i32) {
    %c0_i32 = arith.constant 0 : i32
    %c0_i32_0 = arith.constant 0 : i32
    %c0_i32_1 = arith.constant 0 : i32
    return %c0_i32, %c0_i32_0 : i32, i32
  }
  func.func @transform_3(%arg0: i32) -> (i32, i32) {
    %c0_i32 = arith.constant 0 : i32
    %c0_i32_0 = arith.constant 0 : i32
    %c0_i32_1 = arith.constant 0 : i32
    return %c0_i32, %c0_i32_0 : i32, i32
  }
  func.func @transform_4(%arg0: i32) -> (i32, i32) {
    %c0_i32 = arith.constant 0 : i32
    %c0_i32_0 = arith.constant 0 : i32
    %c0_i32_1 = arith.constant 0 : i32
    return %c0_i32, %c0_i32_0 : i32, i32
  }
  func.func @transform_5(%arg0: i32) -> (i32, i32) {
    %c0_i32 = arith.constant 0 : i32
    %c0_i32_0 = arith.constant 0 : i32
    %c0_i32_1 = arith.constant 0 : i32
    return %c0_i32, %c0_i32_0 : i32, i32
  }
  func.func @transform_6(%arg0: i32) -> (i32, i32) {
    %c0_i32 = arith.constant 0 : i32
    %c0_i32_0 = arith.constant 0 : i32
    %c0_i32_1 = arith.constant 0 : i32
    return %c0_i32, %c0_i32_0 : i32, i32
  }
  func.func @transform_7(%arg0: i32) -> (i32, i32) {
    %c0_i32 = arith.constant 0 : i32
    %c0_i32_0 = arith.constant 0 : i32
    %c0_i32_1 = arith.constant 0 : i32
    return %c0_i32, %c0_i32_0 : i32, i32
  }
  func.func @transform_8(%arg0: i32) -> (i32, i32) {
    %c0_i32 = arith.constant 0 : i32
    %c0_i32_0 = arith.constant 0 : i32
    %c0_i32_1 = arith.constant 0 : i32
    return %c0_i32, %c0_i32_0 : i32, i32
  }
  func.func @transform_9(%arg0: i32) -> (i32, i32, i32) {
    %c0_i32 = arith.constant 0 : i32
    %c0_i32_0 = arith.constant 0 : i32
    %c0_i32_1 = arith.constant 0 : i32
    return %arg0, %c0_i32, %c0_i32_0 : i32, i32, i32
  }
}

</mosaic_0001>

<llo_original>
// kernel: tpu_custom_call.1
$region0: #{tpu_custom_call.1}
  #allocation0 [shape = 'u32[]', space=smem, size = 0x4, offset = 0x4, fixed_abs, tag = 'smem constant byte address 0x4 - core index']
  #allocation1 [shape = 'u32[144,128]{1,0:T(1,128)}', space=vmem, size = 0x12000, scoped, tag = 'internal scratch']
  #allocation2 [shape = 'f32[2,18,18]{2,1,0:T(8,128)}', space=vmem, size = 0x6000, scoped, tag = 'scratch operand']
  #allocation3 [shape = 'f32[2,10,10,64]{3,2,1,0:T(8,128)}', space=vmem, size = 0x28000, scoped, tag = 'scratch operand']
  #allocation4 [shape = 'f32[16,16,64]{2,1,0:T(8,128)}', space=vmem, size = 0x20000, scoped, tag = 'scratch operand']
  #allocation5 [shape = 'f32[8,8,128]{2,1,0:T(8,128)}', space=vmem, size = 0x8000, scoped, tag = 'scratch operand']
  %s0 = inlined_call_operand.vmem [shape: f32[4,16,16], index: 0, kind: input, shape index: {}]
  %s1 = inlined_call_operand.vmem [shape: bf16[9,64], index: 1, kind: input, shape index: {}]
  %s2 = inlined_call_operand.vmem [shape: f32[1,64], index: 2, kind: input, shape index: {}]
  %s3 = inlined_call_operand.vmem [shape: f32[1,64], index: 3, kind: input, shape index: {}]
  %s4 = inlined_call_operand.hbm [shape: bf16[576,128], index: 4, kind: input, shape index: {}]
  %s5 = inlined_call_operand.vmem [shape: f32[1,128], index: 5, kind: input, shape index: {}]
  %s6 = inlined_call_operand.vmem [shape: f32[1,128], index: 6, kind: input, shape index: {}]
  %s7 = inlined_call_operand.vmem [shape: f32[128,10], index: 7, kind: input, shape index: {}]
  %s8 = inlined_call_operand.vmem [shape: f32[1,10], index: 8, kind: input, shape index: {}]
  %s9 = inlined_call_operand.hbm [shape: f32[2,2,10], index: 9, kind: output, shape index: {}]
  %s10 = sld [smem:[#allocation0]]
  $region73: #{tpu_custom_call.1} parent=0
    _
  %s12 = ssub.s32 1, %s10
  %s13 = scalar_select 0, %s12, %s10
  $region1: #{tpu_custom_call.1} parent=0
    #allocation6 [shape = 'u8[147456]{0}', space=vmem, size = 0x24000, scoped, tag = 'input window, operand 4, single buffered']
    #allocation7 [shape = 's32[2]{0}', space=sflag, size = 0x8, scoped, tag = 'scoped memory for tpu_custom_call.1']
    #allocation8 [shape = 's32[2]{0}', space=sflag, size = 0x8, scoped, tag = 'scoped memory for tpu_custom_call.1']
    #allocation9 [shape = 'u8[2048]{0}', space=vmem, size = 0x800, scoped, tag = 'output window, operand 0']
    %14 = vsyncpa [#allocation7], 0
    %15 = vsyncpa [#allocation8], 0
    %s16 = scalar_lea.sflag [#allocation8], 1
    %17 = vsyncpa %s16, 0
    loop: start=0, step=1, limit=4
    $region2: #{tpu_custom_call.1} parent=1 // loop_pre_header
      _
    $region3: #{tpu_custom_call.1} parent=1 // loop_header
      %s19 = sphi 0, %s23
      %p20 = scmp.ge.s32.totalorder %s19, 4
      %s29 = sphi 0, %s31
      %s32 = sphi 0, %s29
      %s33 = sphi 0, %s32
      %s49 = sphi 0, %s33
      %s53 = sphi 0, %s53
      %s55 = sphi 0, %s53
      %s56 = sphi 0, %s55
      %s70 = sphi 0, %s56
      %s74 = sphi 0, %s74
      %s76 = sphi 0, %s74
      %s77 = sphi 0, %s76
      %s91 = sphi 0, %s77
      %s95 = sphi 0, %s95
      %s97 = sphi 0, %s95
      %s98 = sphi 0, %s97
      %s112 = sphi 0, %s98
      %s116 = sphi 0, %s116
      %s118 = sphi 0, %s116
      %s119 = sphi 0, %s118
      %s133 = sphi 0, %s119
      %s137 = sphi 0, %s137
      %s139 = sphi 0, %s137
      %s140 = sphi 0, %s139
      %s154 = sphi 0, %s140
      %s158 = sphi 0, %s158
      %s160 = sphi 0, %s158
      %s161 = sphi 0, %s160
      %s175 = sphi 0, %s161
      %s179 = sphi 0, %s179
      %s181 = sphi 0, %s179
      %s182 = sphi 0, %s181
      %s196 = sphi 0, %s182
      %s200 = sphi 0, %s200
      %s202 = sphi 0, %s200
      %s203 = sphi 0, %s202
      %s217 = sphi 0, %s203
      %s223 = sphi 0, %s225
      %s226 = sphi 0, %s223
      %s227 = sphi 0, %s226
      %s243 = sphi 0, %s227
    $region4: #{tpu_custom_call.1} parent=1 // loop_header_branch
      %22 = sbr.rel (%p20) target = $region8
    $region5: #{tpu_custom_call.1} parent=1 // loop_body
      %s24 = ssub.s32 %s19, 1
      %s25 = ssub.s32 %s19, 2
      %s26 = sadd.s32 %s19, 1
      %s27 = ssub.s32 %s19, %s26
      %p28 = scmp.eq.s32.totalorder %s27, 0
      %s30 = sadd.s32 %s29, 1
      %s31 = scalar_select %p28, %s29, %s30
      %p34 = pneg %p28
      %p35 = scmp.eq.s32.totalorder %s19, 1
      %p36 = por %p34, %p35
      %p37 = scmp.ne.s32.totalorder %s29, %s32
      %p38 = scmp.eq.s32.totalorder %s19, 0
      %p39 = por %p37, %p38
      %p40 = scmp.ne.s32.totalorder %s29, %s32
      %p41 = scmp.eq.s32.totalorder %s24, 1
      %p42 = por %p40, %p41
      %p43 = scmp.ne.s32.totalorder %s32, %s33
      %p44 = scmp.eq.s32.totalorder %s24, 0
      %p45 = por %p43, %p44
      %p46 = scmp.ne.s32.totalorder %s32, %s33
      %p47 = scmp.eq.s32.totalorder %s25, 1
      %p48 = por %p46, %p47
      %p50 = scmp.ne.s32.totalorder %s33, %s49
      %p51 = scmp.eq.s32.totalorder %s25, 0
      %p52 = por %p50, %p51
      %s54 = sadd.s32 %s53, 1
      %p57 = scmp.eq.s32.totalorder %s19, 1
      %p58 = scmp.ne.s32.totalorder %s53, %s55
      %p59 = scmp.eq.s32.totalorder %s19, 0
      %p60 = por %p58, %p59
      %p61 = scmp.ne.s32.totalorder %s53, %s55
      %p62 = scmp.eq.s32.totalorder %s24, 1
      %p63 = por %p61, %p62
      %p64 = scmp.ne.s32.totalorder %s55, %s56
      %p65 = scmp.eq.s32.totalorder %s24, 0
      %p66 = por %p64, %p65
      %p67 = scmp.ne.s32.totalorder %s55, %s56
      %p68 = scmp.eq.s32.totalorder %s25, 1
      %p69 = por %p67, %p68
      %p71 = scmp.ne.s32.totalorder %s56, %s70
      %p72 = scmp.eq.s32.totalorder %s25, 0
      %p73 = por %p71, %p72
      %s75 = sadd.s32 %s74, 1
      %p78 = scmp.eq.s32.totalorder %s19, 1
      %p79 = scmp.ne.s32.totalorder %s74, %s76
      %p80 = scmp.eq.s32.totalorder %s19, 0
      %p81 = por %p79, %p80
      %p82 = scmp.ne.s32.totalorder %s74, %s76
      %p83 = scmp.eq.s32.totalorder %s24, 1
      %p84 = por %p82, %p83
      %p85 = scmp.ne.s32.totalorder %s76, %s77
      %p86 = scmp.eq.s32.totalorder %s24, 0
      %p87 = por %p85, %p86
      %p88 = scmp.ne.s32.totalorder %s76, %s77
      %p89 = scmp.eq.s32.totalorder %s25, 1
      %p90 = por %p88, %p89
      %p92 = scmp.ne.s32.totalorder %s77, %s91
      %p93 = scmp.eq.s32.totalorder %s25, 0
      %p94 = por %p92, %p93
      %s96 = sadd.s32 %s95, 1
      %p99 = scmp.eq.s32.totalorder %s19, 1
      %p100 = scmp.ne.s32.totalorder %s95, %s97
      %p101 = scmp.eq.s32.totalorder %s19, 0
      %p102 = por %p100, %p101
      %p103 = scmp.ne.s32.totalorder %s95, %s97
      %p104 = scmp.eq.s32.totalorder %s24, 1
      %p105 = por %p103, %p104
      %p106 = scmp.ne.s32.totalorder %s97, %s98
      %p107 = scmp.eq.s32.totalorder %s24, 0
      %p108 = por %p106, %p107
      %p109 = scmp.ne.s32.totalorder %s97, %s98
      %p110 = scmp.eq.s32.totalorder %s25, 1
      %p111 = por %p109, %p110
      %p113 = scmp.ne.s32.totalorder %s98, %s112
      %p114 = scmp.eq.s32.totalorder %s25, 0
      %p115 = por %p113, %p114
      %s117 = sadd.s32 %s116, 1
      %p120 = scmp.eq.s32.totalorder %s19, 1
      %p121 = scmp.ne.s32.totalorder %s116, %s118
      %p122 = scmp.eq.s32.totalorder %s19, 0
      %p123 = por %p121, %p122
      %p124 = scmp.ne.s32.totalorder %s116, %s118
      %p125 = scmp.eq.s32.totalorder %s24, 1
      %p126 = por %p124, %p125
      %p127 = scmp.ne.s32.totalorder %s118, %s119
      %p128 = scmp.eq.s32.totalorder %s24, 0
      %p129 = por %p127, %p128
      %p130 = scmp.ne.s32.totalorder %s118, %s119
      %p131 = scmp.eq.s32.totalorder %s25, 1
      %p132 = por %p130, %p131
      %p134 = scmp.ne.s32.totalorder %s119, %s133
      %p135 = scmp.eq.s32.totalorder %s25, 0
      %p136 = por %p134, %p135
      %s138 = sadd.s32 %s137, 1
      %p141 = scmp.eq.s32.totalorder %s19, 1
      %p142 = scmp.ne.s32.totalorder %s137, %s139
      %p143 = scmp.eq.s32.totalorder %s19, 0
      %p144 = por %p142, %p143
      %p145 = scmp.ne.s32.totalorder %s137, %s139
      %p146 = scmp.eq.s32.totalorder %s24, 1
      %p147 = por %p145, %p146
      %p148 = scmp.ne.s32.totalorder %s139, %s140
      %p149 = scmp.eq.s32.totalorder %s24, 0
      %p150 = por %p148, %p149
      %p151 = scmp.ne.s32.totalorder %s139, %s140
      %p152 = scmp.eq.s32.totalorder %s25, 1
      %p153 = por %p151, %p152
      %p155 = scmp.ne.s32.totalorder %s140, %s154
      %p156 = scmp.eq.s32.totalorder %s25, 0
      %p157 = por %p155, %p156
      %s159 = sadd.s32 %s158, 1
      %p162 = scmp.eq.s32.totalorder %s19, 1
      %p163 = scmp.ne.s32.totalorder %s158, %s160
      %p164 = scmp.eq.s32.totalorder %s19, 0
      %p165 = por %p163, %p164
      %p166 = scmp.ne.s32.totalorder %s158, %s160
      %p167 = scmp.eq.s32.totalorder %s24, 1
      %p168 = por %p166, %p167
      %p169 = scmp.ne.s32.totalorder %s160, %s161
      %p170 = scmp.eq.s32.totalorder %s24, 0
      %p171 = por %p169, %p170
      %p172 = scmp.ne.s32.totalorder %s160, %s161
      %p173 = scmp.eq.s32.totalorder %s25, 1
      %p174 = por %p172, %p173
      %p176 = scmp.ne.s32.totalorder %s161, %s175
      %p177 = scmp.eq.s32.totalorder %s25, 0
      %p178 = por %p176, %p177
      %s180 = sadd.s32 %s179, 1
      %p183 = scmp.eq.s32.totalorder %s19, 1
      %p184 = scmp.ne.s32.totalorder %s179, %s181
      %p185 = scmp.eq.s32.totalorder %s19, 0
      %p186 = por %p184, %p185
      %p187 = scmp.ne.s32.totalorder %s179, %s181
      %p188 = scmp.eq.s32.totalorder %s24, 1
      %p189 = por %p187, %p188
      %p190 = scmp.ne.s32.totalorder %s181, %s182
      %p191 = scmp.eq.s32.totalorder %s24, 0
      %p192 = por %p190, %p191
      %p193 = scmp.ne.s32.totalorder %s181, %s182
      %p194 = scmp.eq.s32.totalorder %s25, 1
      %p195 = por %p193, %p194
      %p197 = scmp.ne.s32.totalorder %s182, %s196
      %p198 = scmp.eq.s32.totalorder %s25, 0
      %p199 = por %p197, %p198
      %s201 = sadd.s32 %s200, 1
      %p204 = scmp.eq.s32.totalorder %s19, 1
      %p205 = scmp.ne.s32.totalorder %s200, %s202
      %p206 = scmp.eq.s32.totalorder %s19, 0
      %p207 = por %p205, %p206
      %p208 = scmp.ne.s32.totalorder %s200, %s202
      %p209 = scmp.eq.s32.totalorder %s24, 1
      %p210 = por %p208, %p209
      %p211 = scmp.ne.s32.totalorder %s202, %s203
      %p212 = scmp.eq.s32.totalorder %s24, 0
      %p213 = por %p211, %p212
      %p214 = scmp.ne.s32.totalorder %s202, %s203
      %p215 = scmp.eq.s32.totalorder %s25, 1
      %p216 = por %p214, %p215
      %p218 = scmp.ne.s32.totalorder %s203, %s217
      %p219 = scmp.eq.s32.totalorder %s25, 0
      %p220 = por %p218, %p219
      %s221 = ssub.s32 %s19, %s26
      %p222 = scmp.eq.s32.totalorder %s221, 0
      %s224 = sadd.s32 %s223, 1
      %s225 = scalar_select %p222, %s223, %s224
      %p228 = pneg %p222
      %p229 = scmp.eq.s32.totalorder %s19, 1
      %p230 = por %p228, %p229
      %p231 = scmp.ne.s32.totalorder %s223, %s226
      %p232 = scmp.eq.s32.totalorder %s19, 0
      %p233 = por %p231, %p232
      %p234 = scmp.ne.s32.totalorder %s223, %s226
      %p235 = scmp.eq.s32.totalorder %s24, 1
      %p236 = por %p234, %p235
      %p237 = scmp.ne.s32.totalorder %s226, %s227
      %p238 = scmp.eq.s32.totalorder %s24, 0
      %p239 = por %p237, %p238
      %p240 = scmp.ne.s32.totalorder %s226, %s227
      %p241 = scmp.eq.s32.totalorder %s25, 1
      %p242 = por %p240, %p241
      %p244 = scmp.ne.s32.totalorder %s227, %s243
      %p245 = scmp.eq.s32.totalorder %s25, 0
      %p246 = por %p244, %p245
      %p247 = scmp.le.s32.totalorder 1, %s19
      %p248 = scmp.lt.s32.totalorder %s19, 3
      %p249 = pnand %p247, %p248
      %p250 = pneg %p249
      // Predicated region
      $region9: #{tpu_custom_call.1} parent=5 // pred_check
        _
      $region10: #{tpu_custom_call.1} parent=5 // pred_check_branch
        %252 = sbr.rel (%p249) target = $region12
      $region11: #{tpu_custom_call.1} parent=5 // pred_region
        %s253 = ssub.s32 %s19, 1
        // Predicated region
        $region13: #{tpu_custom_call.1} parent=11 // pred_check
          %p254 = pneg %p66
        $region14: #{tpu_custom_call.1} parent=11 // pred_check_branch
          %256 = sbr.rel (%p254) target = $region16
        $region15: #{tpu_custom_call.1} parent=11 // pred_region
          _
        $region16: #{tpu_custom_call.1} parent=11 // pred_fallthru
          _
        // Predicated region
        $region17: #{tpu_custom_call.1} parent=11 // pred_check
          %p257 = pneg %p87
        $region18: #{tpu_custom_call.1} parent=11 // pred_check_branch
          %259 = sbr.rel (%p257) target = $region20
        $region19: #{tpu_custom_call.1} parent=11 // pred_region
          _
        $region20: #{tpu_custom_call.1} parent=11 // pred_fallthru
          _
        // Predicated region
        $region21: #{tpu_custom_call.1} parent=11 // pred_check
          %p260 = pneg %p108
        $region22: #{tpu_custom_call.1} parent=11 // pred_check_branch
          %262 = sbr.rel (%p260) target = $region24
        $region23: #{tpu_custom_call.1} parent=11 // pred_region
          _
        $region24: #{tpu_custom_call.1} parent=11 // pred_fallthru
          _
        // Predicated region
        $region25: #{tpu_custom_call.1} parent=11 // pred_check
          %p263 = pneg %p129
        $region26: #{tpu_custom_call.1} parent=11 // pred_check_branch
          %265 = sbr.rel (%p263) target = $region28
        $region27: #{tpu_custom_call.1} parent=11 // pred_region
          %s267 = ssub.s32 4608, 4608
          %268 = vsyncadd [#allocation7], %s267
          %s269 = sshll.u32 [#allocation6], 4
          %s270 = int_to_ptr.vmem [resolvable:$true] %s269
          %275 = dma.hbm_to_vmem [thread:$0]  %s4, 4608, %s270, [#allocation7], 64, 64, 4
        $region28: #{tpu_custom_call.1} parent=11 // pred_fallthru
          _
        // Predicated region
        $region29: #{tpu_custom_call.1} parent=11 // pred_check
          %p276 = pneg %p150
        $region30: #{tpu_custom_call.1} parent=11 // pred_check_branch
          %278 = sbr.rel (%p276) target = $region32
        $region31: #{tpu_custom_call.1} parent=11 // pred_region
          _
        $region32: #{tpu_custom_call.1} parent=11 // pred_fallthru
          _
        // Predicated region
        $region33: #{tpu_custom_call.1} parent=11 // pred_check
          %p279 = pneg %p171
        $region34: #{tpu_custom_call.1} parent=11 // pred_check_branch
          %281 = sbr.rel (%p279) target = $region36
        $region35: #{tpu_custom_call.1} parent=11 // pred_region
          _
        $region36: #{tpu_custom_call.1} parent=11 // pred_fallthru
          _
        // Predicated region
        $region37: #{tpu_custom_call.1} parent=11 // pred_check
          %p282 = pneg %p192
        $region38: #{tpu_custom_call.1} parent=11 // pred_check_branch
          %284 = sbr.rel (%p282) target = $region40
        $region39: #{tpu_custom_call.1} parent=11 // pred_region
          _
        $region40: #{tpu_custom_call.1} parent=11 // pred_fallthru
          _
        // Predicated region
        $region41: #{tpu_custom_call.1} parent=11 // pred_check
          %p285 = pneg %p213
        $region42: #{tpu_custom_call.1} parent=11 // pred_check_branch
          %287 = sbr.rel (%p285) target = $region44
        $region43: #{tpu_custom_call.1} parent=11 // pred_region
          _
        $region44: #{tpu_custom_call.1} parent=11 // pred_fallthru
          _
      $region12: #{tpu_custom_call.1} parent=5 // pred_fallthru
        _
      %p288 = scmp.lt.s32.totalorder %s19, 2
      // Predicated region
      $region45: #{tpu_custom_call.1} parent=5 // pred_check
        %p289 = pneg %p288
      $region46: #{tpu_custom_call.1} parent=5 // pred_check_branch
        %291 = sbr.rel (%p289) target = $region48
      $region47: #{tpu_custom_call.1} parent=5 // pred_region
        // Predicated region
        $region49: #{tpu_custom_call.1} parent=47 // pred_check
          %p292 = pneg %p39
        $region50: #{tpu_custom_call.1} parent=47 // pred_check_branch
          %294 = sbr.rel (%p292) target = $region52
        $region51: #{tpu_custom_call.1} parent=47 // pred_region
          %s295 = smul.u32 2, %s19
          %p296 = scmp.lt.s32.totalorder %s295, 3
          %s297 = scalar_select %p296, %s295, 3
          %s298 = smul.addr %s297, 2
          %s299 = smul.addr %s298, 8
          %s300 = scalar_lea.vmem %s0, %s299
          %s301 = smul.u32 2, %s19
        $region52: #{tpu_custom_call.1} parent=47 // pred_fallthru
          _
      $region48: #{tpu_custom_call.1} parent=5 // pred_fallthru
        _
      %p302 = scmp.le.s32.totalorder 1, %s19
      %p303 = scmp.lt.s32.totalorder %s19, 3
      %p304 = pnand %p302, %p303
      %p305 = pneg %p304
      // Predicated region
      $region53: #{tpu_custom_call.1} parent=5 // pred_check
        _
      $region54: #{tpu_custom_call.1} parent=5 // pred_check_branch
        %307 = sbr.rel (%p304) target = $region56
      $region55: #{tpu_custom_call.1} parent=5 // pred_region
        %s308 = ssub.s32 %s19, 1
        // Predicated region
        $region57: #{tpu_custom_call.1} parent=55 // pred_check
          %p309 = pneg %p129
        $region58: #{tpu_custom_call.1} parent=55 // pred_check_branch
          %311 = sbr.rel (%p309) target = $region60
        $region59: #{tpu_custom_call.1} parent=55 // pred_region
          %312 = dma.done [#allocation7], 4608
        $region60: #{tpu_custom_call.1} parent=55 // pred_fallthru
          _
        %s313 = smul.u32 2, %s24
        %p314 = scmp.lt.s32.totalorder %s313, 3
        %s315 = scalar_select %p314, %s313, 3
        %s316 = smul.addr %s315, 2
        %s317 = smul.addr %s316, 8
        %s318 = scalar_lea.vmem %s0, %s317
        %p319 = pneg %p45
        %p320 = pneg %p42
        %p321 = pneg %p66
        %p322 = pneg %p63
        %p323 = pneg %p87
        %p324 = pneg %p84
        %p325 = pneg %p108
        %p326 = pneg %p105
        %p327 = pneg %p129
        %p328 = pneg %p126
        %p329 = pneg %p150
        %p330 = pneg %p147
        %p331 = pneg %p171
        %p332 = pneg %p168
        %p333 = pneg %p192
        %p334 = pneg %p189
        %p335 = pneg %p213
        %p336 = pneg %p210
        %p337 = pneg %p239
        %p338 = pneg %p236
        %s339 = sand.u32 %s226, 1
        %s340 = scalar_lea.sflag [#allocation8], %s339
        %s341 = sand.u32 %s226, 1
        %s342 = smul.addr %s341, 2
        %s343 = scalar_lea.vmem [#allocation9], %s342
        %s344 = smul.u32 2, %s24
        %p345 = scmp.lt.s32.totalorder %s344, 3
        %s346 = scalar_select %p345, %s344, 3
        %s347 = smul.addr %s346, 2
        %s348 = smul.addr %s347, 8
        %s349 = scalar_lea.vmem %s0, %s348
        %s350 = smul.u32 2, %s24
        %vm352 = vcmask 139264
        %353 = vst.msk [vmem:[#allocation2] sm:$0x1] %vm352, 0.0
        %354 = vst.msk [vmem:[#allocation2 + $0x18] sm:$0x1] %vm352, 0.0
        %355 = vst.msk [vmem:[#allocation2 + $0x11] sm:$0x1] %vm352, 0.0
        %356 = vst.msk [vmem:[#allocation2 + $0x29] sm:$0x1] %vm352, 0.0
        %vm357 = vcmask 7168
        %358 = vst.msk [vmem:[#allocation2] sm:$0xff] %vm357, 0.0
        %359 = vst.msk [vmem:[#allocation2 + $0x8] sm:$0xff] %vm357, 0.0
        %vm360 = vcmask 1024
        %361 = vst.msk [vmem:[#allocation2 + $0x10] sm:$0x3] %vm360, 0.0
        %362 = vst.msk [vmem:[#allocation2 + $0x18] sm:$0xff] %vm357, 0.0
        %363 = vst.msk [vmem:[#allocation2 + $0x20] sm:$0xff] %vm357, 0.0
        %364 = vst.msk [vmem:[#allocation2 + $0x28] sm:$0x3] %vm360, 0.0
        %vm365 = vcmask 146568
        %366 = vst.msk [vmem:[#allocation2] sm:$0xff] %vm365, 0.0
        %367 = vst.msk [vmem:[#allocation2 + $0x8] sm:$0xff] %vm365, 0.0
        %vm368 = vcmask 140424
        %369 = vst.msk [vmem:[#allocation2 + $0x10] sm:$0x3] %vm368, 0.0
        %370 = vst.msk [vmem:[#allocation2 + $0x18] sm:$0xff] %vm365, 0.0
        %371 = vst.msk [vmem:[#allocation2 + $0x20] sm:$0xff] %vm365, 0.0
        %372 = vst.msk [vmem:[#allocation2 + $0x28] sm:$0x3] %vm368, 0.0
        %v373 = vld [vmem:[%s349] sm:$0xff]
        %v374 = vld [vmem:[%s349 + $0x8] sm:$0xff]
        %v375 = vld [vmem:[%s349 + $0x10] sm:$0xff]
        %v376 = vld [vmem:[%s349 + $0x18] sm:$0xff]
        %381 = vrot.lane.b32.xlu0 %v373, 1
        %v382 = vpop.permute.xlu0 %381
        %383 = vrot.lane.b32.xlu0 %v374, 1
        %v384 = vpop.permute.xlu0 %383
        %385 = vrot.lane.b32.xlu0 %v375, 1
        %v386 = vpop.permute.xlu0 %385
        %387 = vrot.lane.b32.xlu0 %v376, 1
        %v388 = vpop.permute.xlu0 %387
        %vm393 = vcmask 138248
        %394 = vst.msk [vmem:[#allocation2 + $0x1] sm:$0xff] %vm393, %v382
        %395 = vst.msk [vmem:[#allocation2 + $0x9] sm:$0xff] %vm393, %v384
        %396 = vst.msk [vmem:[#allocation2 + $0x19] sm:$0xff] %vm393, %v386
        %397 = vst.msk [vmem:[#allocation2 + $0x21] sm:$0xff] %vm393, %v388
        %v398 = vld [vmem:[#allocation2] sm:$0xff]
        %v399 = vld [vmem:[#allocation2 + $0x8] sm:$0xff]
        %v400 = vld [vmem:[#allocation2 + $0x18] sm:$0xff]
        %v401 = vld [vmem:[#allocation2 + $0x20] sm:$0xff]
        %v402 = vld [vmem:[#allocation2 + $0x1] sm:$0xff]
        %v403 = vld [vmem:[#allocation2 + $0x9] sm:$0xff]
        %v404 = vld [vmem:[#allocation2 + $0x19] sm:$0xff]
        %v405 = vld [vmem:[#allocation2 + $0x21] sm:$0xff]
        %v406 = vld [vmem:[#allocation2 + $0x2] sm:$0xff]
        %v407 = vld [vmem:[#allocation2 + $0xa] sm:$0xff]
        %v408 = vld [vmem:[#allocation2 + $0x1a] sm:$0xff]
        %v409 = vld [vmem:[#allocation2 + $0x22] sm:$0xff]
        %v410 = vlaneseq
        %v411 = vshrl.u32 %v410, 7
        %v412 = vsub.s32 0, %v411
        %v413 = vrot.slane %v398, %v412
        %415 = vbcast.lane.b32.xlu0 %v413, 256
        %v416 = vpop.permute.xlu0 %415
        %s418 = sor.u32 256, 8
        %419 = vbcast.lane.b32.xlu0 %v413, %s418
        %v420 = vpop.permute.xlu0 %419
        %v421 = vlaneseq
        %v422 = vshrl.u32 %v421, 7
        %v423 = vsub.s32 1, %v422
        %v424 = vrot.slane %v398, %v423
        %426 = vbcast.lane.b32.xlu0 %v424, 256
        %v427 = vpop.permute.xlu0 %426
        %s429 = sor.u32 256, 8
        %430 = vbcast.lane.b32.xlu0 %v424, %s429
        %v431 = vpop.permute.xlu0 %430
        %v432 = vlaneseq
        %v433 = vshrl.u32 %v432, 7
        %v434 = vsub.s32 2, %v433
        %v435 = vrot.slane %v398, %v434
        %437 = vbcast.lane.b32.xlu0 %v435, 256
        %v438 = vpop.permute.xlu0 %437
        %s440 = sor.u32 256, 8
        %441 = vbcast.lane.b32.xlu0 %v435, %s440
        %v442 = vpop.permute.xlu0 %441
        %v443 = vlaneseq
        %v444 = vshrl.u32 %v443, 7
        %v445 = vsub.s32 3, %v444
        %v446 = vrot.slane %v398, %v445
        %448 = vbcast.lane.b32.xlu0 %v446, 256
        %v449 = vpop.permute.xlu0 %448
        %s451 = sor.u32 256, 8
        %452 = vbcast.lane.b32.xlu0 %v446, %s451
        %v453 = vpop.permute.xlu0 %452
        %v454 = vlaneseq
        %v455 = vshrl.u32 %v454, 7
        %v456 = vsub.s32 4, %v455
        %v457 = vrot.slane %v398, %v456
        %459 = vbcast.lane.b32.xlu0 %v457, 256
        %v460 = vpop.permute.xlu0 %459
        %s462 = sor.u32 256, 8
        %463 = vbcast.lane.b32.xlu0 %v457, %s462
        %v464 = vpop.permute.xlu0 %463
        %v465 = vlaneseq
        %v466 = vshrl.u32 %v465, 7
        %v467 = vsub.s32 5, %v466
        %v468 = vrot.slane %v398, %v467
        %470 = vbcast.lane.b32.xlu0 %v468, 256
        %v471 = vpop.permute.xlu0 %470
        %s473 = sor.u32 256, 8
        %474 = vbcast.lane.b32.xlu0 %v468, %s473
        %v475 = vpop.permute.xlu0 %474
        %v476 = vlaneseq
        %v477 = vshrl.u32 %v476, 7
        %v478 = vsub.s32 6, %v477
        %v479 = vrot.slane %v398, %v478
        %481 = vbcast.lane.b32.xlu0 %v479, 256
        %v482 = vpop.permute.xlu0 %481
        %s484 = sor.u32 256, 8
        %485 = vbcast.lane.b32.xlu0 %v479, %s484
        %v486 = vpop.permute.xlu0 %485
        %v487 = vlaneseq
        %v488 = vshrl.u32 %v487, 7
        %v489 = vsub.s32 7, %v488
        %v490 = vrot.slane %v398, %v489
        %492 = vbcast.lane.b32.xlu0 %v490, 256
        %v493 = vpop.permute.xlu0 %492
        %s495 = sor.u32 256, 8
        %496 = vbcast.lane.b32.xlu0 %v490, %s495
        %v497 = vpop.permute.xlu0 %496
        %v498 = vlaneseq
        %v499 = vshrl.u32 %v498, 7
        %v500 = vsub.s32 0, %v499
        %v501 = vrot.slane %v399, %v500
        %503 = vbcast.lane.b32.xlu0 %v501, 256
        %v504 = vpop.permute.xlu0 %503
        %s506 = sor.u32 256, 8
        %507 = vbcast.lane.b32.xlu0 %v501, %s506
        %v508 = vpop.permute.xlu0 %507
        %v509 = vlaneseq
        %v510 = vshrl.u32 %v509, 7
        %v511 = vsub.s32 1, %v510
        %v512 = vrot.slane %v399, %v511
        %514 = vbcast.lane.b32.xlu0 %v512, 256
        %v515 = vpop.permute.xlu0 %514
        %s517 = sor.u32 256, 8
        %518 = vbcast.lane.b32.xlu0 %v512, %s517
        %v519 = vpop.permute.xlu0 %518
        %v520 = vlaneseq
        %v521 = vshrl.u32 %v520, 7
        %v522 = vsub.s32 2, %v521
        %v523 = vrot.slane %v399, %v522
        %525 = vbcast.lane.b32.xlu0 %v523, 256
        %v526 = vpop.permute.xlu0 %525
        %s528 = sor.u32 256, 8
        %529 = vbcast.lane.b32.xlu0 %v523, %s528
        %v530 = vpop.permute.xlu0 %529
        %v531 = vlaneseq
        %v532 = vshrl.u32 %v531, 7
        %v533 = vsub.s32 3, %v532
        %v534 = vrot.slane %v399, %v533
        %536 = vbcast.lane.b32.xlu0 %v534, 256
        %v537 = vpop.permute.xlu0 %536
        %s539 = sor.u32 256, 8
        %540 = vbcast.lane.b32.xlu0 %v534, %s539
        %v541 = vpop.permute.xlu0 %540
        %v542 = vlaneseq
        %v543 = vshrl.u32 %v542, 7
        %v544 = vsub.s32 4, %v543
        %v545 = vrot.slane %v399, %v544
        %547 = vbcast.lane.b32.xlu0 %v545, 256
        %v548 = vpop.permute.xlu0 %547
        %s550 = sor.u32 256, 8
        %551 = vbcast.lane.b32.xlu0 %v545, %s550
        %v552 = vpop.permute.xlu0 %551
        %v553 = vlaneseq
        %v554 = vshrl.u32 %v553, 7
        %v555 = vsub.s32 5, %v554
        %v556 = vrot.slane %v399, %v555
        %558 = vbcast.lane.b32.xlu0 %v556, 256
        %v559 = vpop.permute.xlu0 %558
        %s561 = sor.u32 256, 8
        %562 = vbcast.lane.b32.xlu0 %v556, %s561
        %v563 = vpop.permute.xlu0 %562
        %v564 = vlaneseq
        %v565 = vshrl.u32 %v564, 7
        %v566 = vsub.s32 6, %v565
        %v567 = vrot.slane %v399, %v566
        %569 = vbcast.lane.b32.xlu0 %v567, 256
        %v570 = vpop.permute.xlu0 %569
        %s572 = sor.u32 256, 8
        %573 = vbcast.lane.b32.xlu0 %v567, %s572
        %v574 = vpop.permute.xlu0 %573
        %v575 = vlaneseq
        %v576 = vshrl.u32 %v575, 7
        %v577 = vsub.s32 7, %v576
        %v578 = vrot.slane %v399, %v577
        %580 = vbcast.lane.b32.xlu0 %v578, 256
        %v581 = vpop.permute.xlu0 %580
        %s583 = sor.u32 256, 8
        %584 = vbcast.lane.b32.xlu0 %v578, %s583
        %v585 = vpop.permute.xlu0 %584
        %v586 = vlaneseq
        %v587 = vshrl.u32 %v586, 7
        %v588 = vsub.s32 0, %v587
        %v589 = vrot.slane %v400, %v588
        %591 = vbcast.lane.b32.xlu0 %v589, 256
        %v592 = vpop.permute.xlu0 %591
        %s594 = sor.u32 256, 8
        %595 = vbcast.lane.b32.xlu0 %v589, %s594
        %v596 = vpop.permute.xlu0 %595
        %v597 = vlaneseq
        %v598 = vshrl.u32 %v597, 7
        %v599 = vsub.s32 1, %v598
        %v600 = vrot.slane %v400, %v599
        %602 = vbcast.lane.b32.xlu0 %v600, 256
        %v603 = vpop.permute.xlu0 %602
        %s605 = sor.u32 256, 8
        %606 = vbcast.lane.b32.xlu0 %v600, %s605
        %v607 = vpop.permute.xlu0 %606
        %v608 = vlaneseq
        %v609 = vshrl.u32 %v608, 7
        %v610 = vsub.s32 2, %v609
        %v611 = vrot.slane %v400, %v610
        %613 = vbcast.lane.b32.xlu0 %v611, 256
        %v614 = vpop.permute.xlu0 %613
        %s616 = sor.u32 256, 8
        %617 = vbcast.lane.b32.xlu0 %v611, %s616
        %v618 = vpop.permute.xlu0 %617
        %v619 = vlaneseq
        %v620 = vshrl.u32 %v619, 7
        %v621 = vsub.s32 3, %v620
        %v622 = vrot.slane %v400, %v621
        %624 = vbcast.lane.b32.xlu0 %v622, 256
        %v625 = vpop.permute.xlu0 %624
        %s627 = sor.u32 256, 8
        %628 = vbcast.lane.b32.xlu0 %v622, %s627
        %v629 = vpop.permute.xlu0 %628
        %v630 = vlaneseq
        %v631 = vshrl.u32 %v630, 7
        %v632 = vsub.s32 4, %v631
        %v633 = vrot.slane %v400, %v632
        %635 = vbcast.lane.b32.xlu0 %v633, 256
        %v636 = vpop.permute.xlu0 %635
        %s638 = sor.u32 256, 8
        %639 = vbcast.lane.b32.xlu0 %v633, %s638
        %v640 = vpop.permute.xlu0 %639
        %v641 = vlaneseq
        %v642 = vshrl.u32 %v641, 7
        %v643 = vsub.s32 5, %v642
        %v644 = vrot.slane %v400, %v643
        %646 = vbcast.lane.b32.xlu0 %v644, 256
        %v647 = vpop.permute.xlu0 %646
        %s649 = sor.u32 256, 8
        %650 = vbcast.lane.b32.xlu0 %v644, %s649
        %v651 = vpop.permute.xlu0 %650
        %v652 = vlaneseq
        %v653 = vshrl.u32 %v652, 7
        %v654 = vsub.s32 6, %v653
        %v655 = vrot.slane %v400, %v654
        %657 = vbcast.lane.b32.xlu0 %v655, 256
        %v658 = vpop.permute.xlu0 %657
        %s660 = sor.u32 256, 8
        %661 = vbcast.lane.b32.xlu0 %v655, %s660
        %v662 = vpop.permute.xlu0 %661
        %v663 = vlaneseq
        %v664 = vshrl.u32 %v663, 7
        %v665 = vsub.s32 7, %v664
        %v666 = vrot.slane %v400, %v665
        %668 = vbcast.lane.b32.xlu0 %v666, 256
        %v669 = vpop.permute.xlu0 %668
        %s671 = sor.u32 256, 8
        %672 = vbcast.lane.b32.xlu0 %v666, %s671
        %v673 = vpop.permute.xlu0 %672
        %v674 = vlaneseq
        %v675 = vshrl.u32 %v674, 7
        %v676 = vsub.s32 0, %v675
        %v677 = vrot.slane %v401, %v676
        %679 = vbcast.lane.b32.xlu0 %v677, 256
        %v680 = vpop.permute.xlu0 %679
        %s682 = sor.u32 256, 8
        %683 = vbcast.lane.b32.xlu0 %v677, %s682
        %v684 = vpop.permute.xlu0 %683
        %v685 = vlaneseq
        %v686 = vshrl.u32 %v685, 7
        %v687 = vsub.s32 1, %v686
        %v688 = vrot.slane %v401, %v687
        %690 = vbcast.lane.b32.xlu0 %v688, 256
        %v691 = vpop.permute.xlu0 %690
        %s693 = sor.u32 256, 8
        %694 = vbcast.lane.b32.xlu0 %v688, %s693
        %v695 = vpop.permute.xlu0 %694
        %v696 = vlaneseq
        %v697 = vshrl.u32 %v696, 7
        %v698 = vsub.s32 2, %v697
        %v699 = vrot.slane %v401, %v698
        %701 = vbcast.lane.b32.xlu0 %v699, 256
        %v702 = vpop.permute.xlu0 %701
        %s704 = sor.u32 256, 8
        %705 = vbcast.lane.b32.xlu0 %v699, %s704
        %v706 = vpop.permute.xlu0 %705
        %v707 = vlaneseq
        %v708 = vshrl.u32 %v707, 7
        %v709 = vsub.s32 3, %v708
        %v710 = vrot.slane %v401, %v709
        %712 = vbcast.lane.b32.xlu0 %v710, 256
        %v713 = vpop.permute.xlu0 %712
        %s715 = sor.u32 256, 8
        %716 = vbcast.lane.b32.xlu0 %v710, %s715
        %v717 = vpop.permute.xlu0 %716
        %v718 = vlaneseq
        %v719 = vshrl.u32 %v718, 7
        %v720 = vsub.s32 4, %v719
        %v721 = vrot.slane %v401, %v720
        %723 = vbcast.lane.b32.xlu0 %v721, 256
        %v724 = vpop.permute.xlu0 %723
        %s726 = sor.u32 256, 8
        %727 = vbcast.lane.b32.xlu0 %v721, %s726
        %v728 = vpop.permute.xlu0 %727
        %v729 = vlaneseq
        %v730 = vshrl.u32 %v729, 7
        %v731 = vsub.s32 5, %v730
        %v732 = vrot.slane %v401, %v731
        %734 = vbcast.lane.b32.xlu0 %v732, 256
        %v735 = vpop.permute.xlu0 %734
        %s737 = sor.u32 256, 8
        %738 = vbcast.lane.b32.xlu0 %v732, %s737
        %v739 = vpop.permute.xlu0 %738
        %v740 = vlaneseq
        %v741 = vshrl.u32 %v740, 7
        %v742 = vsub.s32 6, %v741
        %v743 = vrot.slane %v401, %v742
        %745 = vbcast.lane.b32.xlu0 %v743, 256
        %v746 = vpop.permute.xlu0 %745
        %s748 = sor.u32 256, 8
        %749 = vbcast.lane.b32.xlu0 %v743, %s748
        %v750 = vpop.permute.xlu0 %749
        %v751 = vlaneseq
        %v752 = vshrl.u32 %v751, 7
        %v753 = vsub.s32 7, %v752
        %v754 = vrot.slane %v401, %v753
        %756 = vbcast.lane.b32.xlu0 %v754, 256
        %v757 = vpop.permute.xlu0 %756
        %s759 = sor.u32 256, 8
        %760 = vbcast.lane.b32.xlu0 %v754, %s759
        %v761 = vpop.permute.xlu0 %760
        %s763 = sor.u32 256, 1
        %764 = vbcast.lane.b32.xlu0 %v413, %s763
        %v765 = vpop.permute.xlu0 %764
        %s767 = sor.u32 256, 9
        %768 = vbcast.lane.b32.xlu0 %v413, %s767
        %v769 = vpop.permute.xlu0 %768
        %s771 = sor.u32 256, 1
        %772 = vbcast.lane.b32.xlu0 %v424, %s771
        %v773 = vpop.permute.xlu0 %772
        %s775 = sor.u32 256, 9
        %776 = vbcast.lane.b32.xlu0 %v424, %s775
        %v777 = vpop.permute.xlu0 %776
        %s779 = sor.u32 256, 1
        %780 = vbcast.lane.b32.xlu0 %v435, %s779
        %v781 = vpop.permute.xlu0 %780
        %s783 = sor.u32 256, 9
        %784 = vbcast.lane.b32.xlu0 %v435, %s783
        %v785 = vpop.permute.xlu0 %784
        %s787 = sor.u32 256, 1
        %788 = vbcast.lane.b32.xlu0 %v446, %s787
        %v789 = vpop.permute.xlu0 %788
        %s791 = sor.u32 256, 9
        %792 = vbcast.lane.b32.xlu0 %v446, %s791
        %v793 = vpop.permute.xlu0 %792
        %s795 = sor.u32 256, 1
        %796 = vbcast.lane.b32.xlu0 %v457, %s795
        %v797 = vpop.permute.xlu0 %796
        %s799 = sor.u32 256, 9
        %800 = vbcast.lane.b32.xlu0 %v457, %s799
        %v801 = vpop.permute.xlu0 %800
        %s803 = sor.u32 256, 1
        %804 = vbcast.lane.b32.xlu0 %v468, %s803
        %v805 = vpop.permute.xlu0 %804
        %s807 = sor.u32 256, 9
        %808 = vbcast.lane.b32.xlu0 %v468, %s807
        %v809 = vpop.permute.xlu0 %808
        %s811 = sor.u32 256, 1
        %812 = vbcast.lane.b32.xlu0 %v479, %s811
        %v813 = vpop.permute.xlu0 %812
        %s815 = sor.u32 256, 9
        %816 = vbcast.lane.b32.xlu0 %v479, %s815
        %v817 = vpop.permute.xlu0 %816
        %s819 = sor.u32 256, 1
        %820 = vbcast.lane.b32.xlu0 %v490, %s819
        %v821 = vpop.permute.xlu0 %820
        %s823 = sor.u32 256, 9
        %824 = vbcast.lane.b32.xlu0 %v490, %s823
        %v825 = vpop.permute.xlu0 %824
        %s827 = sor.u32 256, 1
        %828 = vbcast.lane.b32.xlu0 %v501, %s827
        %v829 = vpop.permute.xlu0 %828
        %s831 = sor.u32 256, 9
        %832 = vbcast.lane.b32.xlu0 %v501, %s831
        %v833 = vpop.permute.xlu0 %832
        %s835 = sor.u32 256, 1
        %836 = vbcast.lane.b32.xlu0 %v512, %s835
        %v837 = vpop.permute.xlu0 %836
        %s839 = sor.u32 256, 9
        %840 = vbcast.lane.b32.xlu0 %v512, %s839
        %v841 = vpop.permute.xlu0 %840
        %s843 = sor.u32 256, 1
        %844 = vbcast.lane.b32.xlu0 %v523, %s843
        %v845 = vpop.permute.xlu0 %844
        %s847 = sor.u32 256, 9
        %848 = vbcast.lane.b32.xlu0 %v523, %s847
        %v849 = vpop.permute.xlu0 %848
        %s851 = sor.u32 256, 1
        %852 = vbcast.lane.b32.xlu0 %v534, %s851
        %v853 = vpop.permute.xlu0 %852
        %s855 = sor.u32 256, 9
        %856 = vbcast.lane.b32.xlu0 %v534, %s855
        %v857 = vpop.permute.xlu0 %856
        %s859 = sor.u32 256, 1
        %860 = vbcast.lane.b32.xlu0 %v545, %s859
        %v861 = vpop.permute.xlu0 %860
        %s863 = sor.u32 256, 9
        %864 = vbcast.lane.b32.xlu0 %v545, %s863
        %v865 = vpop.permute.xlu0 %864
        %s867 = sor.u32 256, 1
        %868 = vbcast.lane.b32.xlu0 %v556, %s867
        %v869 = vpop.permute.xlu0 %868
        %s871 = sor.u32 256, 9
        %872 = vbcast.lane.b32.xlu0 %v556, %s871
        %v873 = vpop.permute.xlu0 %872
        %s875 = sor.u32 256, 1
        %876 = vbcast.lane.b32.xlu0 %v567, %s875
        %v877 = vpop.permute.xlu0 %876
        %s879 = sor.u32 256, 9
        %880 = vbcast.lane.b32.xlu0 %v567, %s879
        %v881 = vpop.permute.xlu0 %880
        %s883 = sor.u32 256, 1
        %884 = vbcast.lane.b32.xlu0 %v578, %s883
        %v885 = vpop.permute.xlu0 %884
        %s887 = sor.u32 256, 9
        %888 = vbcast.lane.b32.xlu0 %v578, %s887
        %v889 = vpop.permute.xlu0 %888
        %s891 = sor.u32 256, 1
        %892 = vbcast.lane.b32.xlu0 %v589, %s891
        %v893 = vpop.permute.xlu0 %892
        %s895 = sor.u32 256, 9
        %896 = vbcast.lane.b32.xlu0 %v589, %s895
        %v897 = vpop.permute.xlu0 %896
        %s899 = sor.u32 256, 1
        %900 = vbcast.lane.b32.xlu0 %v600, %s899
        %v901 = vpop.permute.xlu0 %900
        %s903 = sor.u32 256, 9
        %904 = vbcast.lane.b32.xlu0 %v600, %s903
        %v905 = vpop.permute.xlu0 %904
        %s907 = sor.u32 256, 1
        %908 = vbcast.lane.b32.xlu0 %v611, %s907
        %v909 = vpop.permute.xlu0 %908
        %s911 = sor.u32 256, 9
        %912 = vbcast.lane.b32.xlu0 %v611, %s911
        %v913 = vpop.permute.xlu0 %912
        %s915 = sor.u32 256, 1
        %916 = vbcast.lane.b32.xlu0 %v622, %s915
        %v917 = vpop.permute.xlu0 %916
        %s919 = sor.u32 256, 9
        %920 = vbcast.lane.b32.xlu0 %v622, %s919
        %v921 = vpop.permute.xlu0 %920
        %s923 = sor.u32 256, 1
        %924 = vbcast.lane.b32.xlu0 %v633, %s923
        %v925 = vpop.permute.xlu0 %924
        %s927 = sor.u32 256, 9
        %928 = vbcast.lane.b32.xlu0 %v633, %s927
        %v929 = vpop.permute.xlu0 %928
        %s931 = sor.u32 256, 1
        %932 = vbcast.lane.b32.xlu0 %v644, %s931
        %v933 = vpop.permute.xlu0 %932
        %s935 = sor.u32 256, 9
        %936 = vbcast.lane.b32.xlu0 %v644, %s935
        %v937 = vpop.permute.xlu0 %936
        %s939 = sor.u32 256, 1
        %940 = vbcast.lane.b32.xlu0 %v655, %s939
        %v941 = vpop.permute.xlu0 %940
        %s943 = sor.u32 256, 9
        %944 = vbcast.lane.b32.xlu0 %v655, %s943
        %v945 = vpop.permute.xlu0 %944
        %s947 = sor.u32 256, 1
        %948 = vbcast.lane.b32.xlu0 %v666, %s947
        %v949 = vpop.permute.xlu0 %948
        %s951 = sor.u32 256, 9
        %952 = vbcast.lane.b32.xlu0 %v666, %s951
        %v953 = vpop.permute.xlu0 %952
        %s955 = sor.u32 256, 1
        %956 = vbcast.lane.b32.xlu0 %v677, %s955
        %v957 = vpop.permute.xlu0 %956
        %s959 = sor.u32 256, 9
        %960 = vbcast.lane.b32.xlu0 %v677, %s959
        %v961 = vpop.permute.xlu0 %960
        %s963 = sor.u32 256, 1
        %964 = vbcast.lane.b32.xlu0 %v688, %s963
        %v965 = vpop.permute.xlu0 %964
        %s967 = sor.u32 256, 9
        %968 = vbcast.lane.b32.xlu0 %v688, %s967
        %v969 = vpop.permute.xlu0 %968
        %s971 = sor.u32 256, 1
        %972 = vbcast.lane.b32.xlu0 %v699, %s971
        %v973 = vpop.permute.xlu0 %972
        %s975 = sor.u32 256, 9
        %976 = vbcast.lane.b32.xlu0 %v699, %s975
        %v977 = vpop.permute.xlu0 %976
        %s979 = sor.u32 256, 1
        %980 = vbcast.lane.b32.xlu0 %v710, %s979
        %v981 = vpop.permute.xlu0 %980
        %s983 = sor.u32 256, 9
        %984 = vbcast.lane.b32.xlu0 %v710, %s983
        %v985 = vpop.permute.xlu0 %984
        %s987 = sor.u32 256, 1
        %988 = vbcast.lane.b32.xlu0 %v721, %s987
        %v989 = vpop.permute.xlu0 %988
        %s991 = sor.u32 256, 9
        %992 = vbcast.lane.b32.xlu0 %v721, %s991
        %v993 = vpop.permute.xlu0 %992
        %s995 = sor.u32 256, 1
        %996 = vbcast.lane.b32.xlu0 %v732, %s995
        %v997 = vpop.permute.xlu0 %996
        %s999 = sor.u32 256, 9
        %1000 = vbcast.lane.b32.xlu0 %v732, %s999
        %v1001 = vpop.permute.xlu0 %1000
        %s1003 = sor.u32 256, 1
        %1004 = vbcast.lane.b32.xlu0 %v743, %s1003
        %v1005 = vpop.permute.xlu0 %1004
        %s1007 = sor.u32 256, 9
        %1008 = vbcast.lane.b32.xlu0 %v743, %s1007
        %v1009 = vpop.permute.xlu0 %1008
        %s1011 = sor.u32 256, 1
        %1012 = vbcast.lane.b32.xlu0 %v754, %s1011
        %v1013 = vpop.permute.xlu0 %1012
        %s1015 = sor.u32 256, 9
        %1016 = vbcast.lane.b32.xlu0 %v754, %s1015
        %v1017 = vpop.permute.xlu0 %1016
        %s1019 = sor.u32 256, 2
        %1020 = vbcast.lane.b32.xlu0 %v413, %s1019
        %v1021 = vpop.permute.xlu0 %1020
        %s1023 = sor.u32 256, 10
        %1024 = vbcast.lane.b32.xlu0 %v413, %s1023
        %v1025 = vpop.permute.xlu0 %1024
        %s1027 = sor.u32 256, 2
        %1028 = vbcast.lane.b32.xlu0 %v424, %s1027
        %v1029 = vpop.permute.xlu0 %1028
        %s1031 = sor.u32 256, 10
        %1032 = vbcast.lane.b32.xlu0 %v424, %s1031
        %v1033 = vpop.permute.xlu0 %1032
        %s1035 = sor.u32 256, 2
        %1036 = vbcast.lane.b32.xlu0 %v435, %s1035
        %v1037 = vpop.permute.xlu0 %1036
        %s1039 = sor.u32 256, 10
        %1040 = vbcast.lane.b32.xlu0 %v435, %s1039
        %v1041 = vpop.permute.xlu0 %1040
        %s1043 = sor.u32 256, 2
        %1044 = vbcast.lane.b32.xlu0 %v446, %s1043
        %v1045 = vpop.permute.xlu0 %1044
        %s1047 = sor.u32 256, 10
        %1048 = vbcast.lane.b32.xlu0 %v446, %s1047
        %v1049 = vpop.permute.xlu0 %1048
        %s1051 = sor.u32 256, 2
        %1052 = vbcast.lane.b32.xlu0 %v457, %s1051
        %v1053 = vpop.permute.xlu0 %1052
        %s1055 = sor.u32 256, 10
        %1056 = vbcast.lane.b32.xlu0 %v457, %s1055
        %v1057 = vpop.permute.xlu0 %1056
        %s1059 = sor.u32 256, 2
        %1060 = vbcast.lane.b32.xlu0 %v468, %s1059
        %v1061 = vpop.permute.xlu0 %1060
        %s1063 = sor.u32 256, 10
        %1064 = vbcast.lane.b32.xlu0 %v468, %s1063
        %v1065 = vpop.permute.xlu0 %1064
        %s1067 = sor.u32 256, 2
        %1068 = vbcast.lane.b32.xlu0 %v479, %s1067
        %v1069 = vpop.permute.xlu0 %1068
        %s1071 = sor.u32 256, 10
        %1072 = vbcast.lane.b32.xlu0 %v479, %s1071
        %v1073 = vpop.permute.xlu0 %1072
        %s1075 = sor.u32 256, 2
        %1076 = vbcast.lane.b32.xlu0 %v490, %s1075
        %v1077 = vpop.permute.xlu0 %1076
        %s1079 = sor.u32 256, 10
        %1080 = vbcast.lane.b32.xlu0 %v490, %s1079
        %v1081 = vpop.permute.xlu0 %1080
        %s1083 = sor.u32 256, 2
        %1084 = vbcast.lane.b32.xlu0 %v501, %s1083
        %v1085 = vpop.permute.xlu0 %1084
        %s1087 = sor.u32 256, 10
        %1088 = vbcast.lane.b32.xlu0 %v501, %s1087
        %v1089 = vpop.permute.xlu0 %1088
        %s1091 = sor.u32 256, 2
        %1092 = vbcast.lane.b32.xlu0 %v512, %s1091
        %v1093 = vpop.permute.xlu0 %1092
        %s1095 = sor.u32 256, 10
        %1096 = vbcast.lane.b32.xlu0 %v512, %s1095
        %v1097 = vpop.permute.xlu0 %1096
        %s1099 = sor.u32 256, 2
        %1100 = vbcast.lane.b32.xlu0 %v523, %s1099
        %v1101 = vpop.permute.xlu0 %1100
        %s1103 = sor.u32 256, 10
        %1104 = vbcast.lane.b32.xlu0 %v523, %s1103
        %v1105 = vpop.permute.xlu0 %1104
        %s1107 = sor.u32 256, 2
        %1108 = vbcast.lane.b32.xlu0 %v534, %s1107
        %v1109 = vpop.permute.xlu0 %1108
        %s1111 = sor.u32 256, 10
        %1112 = vbcast.lane.b32.xlu0 %v534, %s1111
        %v1113 = vpop.permute.xlu0 %1112
        %s1115 = sor.u32 256, 2
        %1116 = vbcast.lane.b32.xlu0 %v545, %s1115
        %v1117 = vpop.permute.xlu0 %1116
        %s1119 = sor.u32 256, 10
        %1120 = vbcast.lane.b32.xlu0 %v545, %s1119
        %v1121 = vpop.permute.xlu0 %1120
        %s1123 = sor.u32 256, 2
        %1124 = vbcast.lane.b32.xlu0 %v556, %s1123
        %v1125 = vpop.permute.xlu0 %1124
        %s1127 = sor.u32 256, 10
        %1128 = vbcast.lane.b32.xlu0 %v556, %s1127
        %v1129 = vpop.permute.xlu0 %1128
        %s1131 = sor.u32 256, 2
        %1132 = vbcast.lane.b32.xlu0 %v567, %s1131
        %v1133 = vpop.permute.xlu0 %1132
        %s1135 = sor.u32 256, 10
        %1136 = vbcast.lane.b32.xlu0 %v567, %s1135
        %v1137 = vpop.permute.xlu0 %1136
        %s1139 = sor.u32 256, 2
        %1140 = vbcast.lane.b32.xlu0 %v578, %s1139
        %v1141 = vpop.permute.xlu0 %1140
        %s1143 = sor.u32 256, 10
        %1144 = vbcast.lane.b32.xlu0 %v578, %s1143
        %v1145 = vpop.permute.xlu0 %1144
        %s1147 = sor.u32 256, 2
        %1148 = vbcast.lane.b32.xlu0 %v589, %s1147
        %v1149 = vpop.permute.xlu0 %1148
        %s1151 = sor.u32 256, 10
        %1152 = vbcast.lane.b32.xlu0 %v589, %s1151
        %v1153 = vpop.permute.xlu0 %1152
        %s1155 = sor.u32 256, 2
        %1156 = vbcast.lane.b32.xlu0 %v600, %s1155
        %v1157 = vpop.permute.xlu0 %1156
        %s1159 = sor.u32 256, 10
        %1160 = vbcast.lane.b32.xlu0 %v600, %s1159
        %v1161 = vpop.permute.xlu0 %1160
        %s1163 = sor.u32 256, 2
        %1164 = vbcast.lane.b32.xlu0 %v611, %s1163
        %v1165 = vpop.permute.xlu0 %1164
        %s1167 = sor.u32 256, 10
        %1168 = vbcast.lane.b32.xlu0 %v611, %s1167
        %v1169 = vpop.permute.xlu0 %1168
        %s1171 = sor.u32 256, 2
        %1172 = vbcast.lane.b32.xlu0 %v622, %s1171
        %v1173 = vpop.permute.xlu0 %1172
        %s1175 = sor.u32 256, 10
        %1176 = vbcast.lane.b32.xlu0 %v622, %s1175
        %v1177 = vpop.permute.xlu0 %1176
        %s1179 = sor.u32 256, 2
        %1180 = vbcast.lane.b32.xlu0 %v633, %s1179
        %v1181 = vpop.permute.xlu0 %1180
        %s1183 = sor.u32 256, 10
        %1184 = vbcast.lane.b32.xlu0 %v633, %s1183
        %v1185 = vpop.permute.xlu0 %1184
        %s1187 = sor.u32 256, 2
        %1188 = vbcast.lane.b32.xlu0 %v644, %s1187
        %v1189 = vpop.permute.xlu0 %1188
        %s1191 = sor.u32 256, 10
        %1192 = vbcast.lane.b32.xlu0 %v644, %s1191
        %v1193 = vpop.permute.xlu0 %1192
        %s1195 = sor.u32 256, 2
        %1196 = vbcast.lane.b32.xlu0 %v655, %s1195
        %v1197 = vpop.permute.xlu0 %1196
        %s1199 = sor.u32 256, 10
        %1200 = vbcast.lane.b32.xlu0 %v655, %s1199
        %v1201 = vpop.permute.xlu0 %1200
        %s1203 = sor.u32 256, 2
        %1204 = vbcast.lane.b32.xlu0 %v666, %s1203
        %v1205 = vpop.permute.xlu0 %1204
        %s1207 = sor.u32 256, 10
        %1208 = vbcast.lane.b32.xlu0 %v666, %s1207
        %v1209 = vpop.permute.xlu0 %1208
        %s1211 = sor.u32 256, 2
        %1212 = vbcast.lane.b32.xlu0 %v677, %s1211
        %v1213 = vpop.permute.xlu0 %1212
        %s1215 = sor.u32 256, 10
        %1216 = vbcast.lane.b32.xlu0 %v677, %s1215
        %v1217 = vpop.permute.xlu0 %1216
        %s1219 = sor.u32 256, 2
        %1220 = vbcast.lane.b32.xlu0 %v688, %s1219
        %v1221 = vpop.permute.xlu0 %1220
        %s1223 = sor.u32 256, 10
        %1224 = vbcast.lane.b32.xlu0 %v688, %s1223
        %v1225 = vpop.permute.xlu0 %1224
        %s1227 = sor.u32 256, 2
        %1228 = vbcast.lane.b32.xlu0 %v699, %s1227
        %v1229 = vpop.permute.xlu0 %1228
        %s1231 = sor.u32 256, 10
        %1232 = vbcast.lane.b32.xlu0 %v699, %s1231
        %v1233 = vpop.permute.xlu0 %1232
        %s1235 = sor.u32 256, 2
        %1236 = vbcast.lane.b32.xlu0 %v710, %s1235
        %v1237 = vpop.permute.xlu0 %1236
        %s1239 = sor.u32 256, 10
        %1240 = vbcast.lane.b32.xlu0 %v710, %s1239
        %v1241 = vpop.permute.xlu0 %1240
        %s1243 = sor.u32 256, 2
        %1244 = vbcast.lane.b32.xlu0 %v721, %s1243
        %v1245 = vpop.permute.xlu0 %1244
        %s1247 = sor.u32 256, 10
        %1248 = vbcast.lane.b32.xlu0 %v721, %s1247
        %v1249 = vpop.permute.xlu0 %1248
        %s1251 = sor.u32 256, 2
        %1252 = vbcast.lane.b32.xlu0 %v732, %s1251
        %v1253 = vpop.permute.xlu0 %1252
        %s1255 = sor.u32 256, 10
        %1256 = vbcast.lane.b32.xlu0 %v732, %s1255
        %v1257 = vpop.permute.xlu0 %1256
        %s1259 = sor.u32 256, 2
        %1260 = vbcast.lane.b32.xlu0 %v743, %s1259
        %v1261 = vpop.permute.xlu0 %1260
        %s1263 = sor.u32 256, 10
        %1264 = vbcast.lane.b32.xlu0 %v743, %s1263
        %v1265 = vpop.permute.xlu0 %1264
        %s1267 = sor.u32 256, 2
        %1268 = vbcast.lane.b32.xlu0 %v754, %s1267
        %v1269 = vpop.permute.xlu0 %1268
        %s1271 = sor.u32 256, 10
        %1272 = vbcast.lane.b32.xlu0 %v754, %s1271
        %v1273 = vpop.permute.xlu0 %1272
        %v1274 = vlaneseq
        %v1275 = vshrl.u32 %v1274, 7
        %v1276 = vsub.s32 0, %v1275
        %v1277 = vrot.slane %v402, %v1276
        %1279 = vbcast.lane.b32.xlu0 %v1277, 256
        %v1280 = vpop.permute.xlu0 %1279
        %s1282 = sor.u32 256, 8
        %1283 = vbcast.lane.b32.xlu0 %v1277, %s1282
        %v1284 = vpop.permute.xlu0 %1283
        %v1285 = vlaneseq
        %v1286 = vshrl.u32 %v1285, 7
        %v1287 = vsub.s32 1, %v1286
        %v1288 = vrot.slane %v402, %v1287
        %1290 = vbcast.lane.b32.xlu0 %v1288, 256
        %v1291 = vpop.permute.xlu0 %1290
        %s1293 = sor.u32 256, 8
        %1294 = vbcast.lane.b32.xlu0 %v1288, %s1293
        %v1295 = vpop.permute.xlu0 %1294
        %v1296 = vlaneseq
        %v1297 = vshrl.u32 %v1296, 7
        %v1298 = vsub.s32 2, %v1297
        %v1299 = vrot.slane %v402, %v1298
        %1301 = vbcast.lane.b32.xlu0 %v1299, 256
        %v1302 = vpop.permute.xlu0 %1301
        %s1304 = sor.u32 256, 8
        %1305 = vbcast.lane.b32.xlu0 %v1299, %s1304
        %v1306 = vpop.permute.xlu0 %1305
        %v1307 = vlaneseq
        %v1308 = vshrl.u32 %v1307, 7
        %v1309 = vsub.s32 3, %v1308
        %v1310 = vrot.slane %v402, %v1309
        %1312 = vbcast.lane.b32.xlu0 %v1310, 256
        %v1313 = vpop.permute.xlu0 %1312
        %s1315 = sor.u32 256, 8
        %1316 = vbcast.lane.b32.xlu0 %v1310, %s1315
        %v1317 = vpop.permute.xlu0 %1316
        %v1318 = vlaneseq
        %v1319 = vshrl.u32 %v1318, 7
        %v1320 = vsub.s32 4, %v1319
        %v1321 = vrot.slane %v402, %v1320
        %1323 = vbcast.lane.b32.xlu0 %v1321, 256
        %v1324 = vpop.permute.xlu0 %1323
        %s1326 = sor.u32 256, 8
        %1327 = vbcast.lane.b32.xlu0 %v1321, %s1326
        %v1328 = vpop.permute.xlu0 %1327
        %v1329 = vlaneseq
        %v1330 = vshrl.u32 %v1329, 7
        %v1331 = vsub.s32 5, %v1330
        %v1332 = vrot.slane %v402, %v1331
        %1334 = vbcast.lane.b32.xlu0 %v1332, 256
        %v1335 = vpop.permute.xlu0 %1334
        %s1337 = sor.u32 256, 8
        %1338 = vbcast.lane.b32.xlu0 %v1332, %s1337
        %v1339 = vpop.permute.xlu0 %1338
        %v1340 = vlaneseq
        %v1341 = vshrl.u32 %v1340, 7
        %v1342 = vsub.s32 6, %v1341
        %v1343 = vrot.slane %v402, %v1342
        %1345 = vbcast.lane.b32.xlu0 %v1343, 256
        %v1346 = vpop.permute.xlu0 %1345
        %s1348 = sor.u32 256, 8
        %1349 = vbcast.lane.b32.xlu0 %v1343, %s1348
        %v1350 = vpop.permute.xlu0 %1349
        %v1351 = vlaneseq
        %v1352 = vshrl.u32 %v1351, 7
        %v1353 = vsub.s32 7, %v1352
        %v1354 = vrot.slane %v402, %v1353
        %1356 = vbcast.lane.b32.xlu0 %v1354, 256
        %v1357 = vpop.permute.xlu0 %1356
        %s1359 = sor.u32 256, 8
        %1360 = vbcast.lane.b32.xlu0 %v1354, %s1359
        %v1361 = vpop.permute.xlu0 %1360
        %v1362 = vlaneseq
        %v1363 = vshrl.u32 %v1362, 7
        %v1364 = vsub.s32 0, %v1363
        %v1365 = vrot.slane %v403, %v1364
        %1367 = vbcast.lane.b32.xlu0 %v1365, 256
        %v1368 = vpop.permute.xlu0 %1367
        %s1370 = sor.u32 256, 8
        %1371 = vbcast.lane.b32.xlu0 %v1365, %s1370
        %v1372 = vpop.permute.xlu0 %1371
        %v1373 = vlaneseq
        %v1374 = vshrl.u32 %v1373, 7
        %v1375 = vsub.s32 1, %v1374
        %v1376 = vrot.slane %v403, %v1375
        %1378 = vbcast.lane.b32.xlu0 %v1376, 256
        %v1379 = vpop.permute.xlu0 %1378
        %s1381 = sor.u32 256, 8
        %1382 = vbcast.lane.b32.xlu0 %v1376, %s1381
        %v1383 = vpop.permute.xlu0 %1382
        %v1384 = vlaneseq
        %v1385 = vshrl.u32 %v1384, 7
        %v1386 = vsub.s32 2, %v1385
        %v1387 = vrot.slane %v403, %v1386
        %1389 = vbcast.lane.b32.xlu0 %v1387, 256
        %v1390 = vpop.permute.xlu0 %1389
        %s1392 = sor.u32 256, 8
        %1393 = vbcast.lane.b32.xlu0 %v1387, %s1392
        %v1394 = vpop.permute.xlu0 %1393
        %v1395 = vlaneseq
        %v1396 = vshrl.u32 %v1395, 7
        %v1397 = vsub.s32 3, %v1396
        %v1398 = vrot.slane %v403, %v1397
        %1400 = vbcast.lane.b32.xlu0 %v1398, 256
        %v1401 = vpop.permute.xlu0 %1400
        %s1403 = sor.u32 256, 8
        %1404 = vbcast.lane.b32.xlu0 %v1398, %s1403
        %v1405 = vpop.permute.xlu0 %1404
        %v1406 = vlaneseq
        %v1407 = vshrl.u32 %v1406, 7
        %v1408 = vsub.s32 4, %v1407
        %v1409 = vrot.slane %v403, %v1408
        %1411 = vbcast.lane.b32.xlu0 %v1409, 256
        %v1412 = vpop.permute.xlu0 %1411
        %s1414 = sor.u32 256, 8
        %1415 = vbcast.lane.b32.xlu0 %v1409, %s1414
        %v1416 = vpop.permute.xlu0 %1415
        %v1417 = vlaneseq
        %v1418 = vshrl.u32 %v1417, 7
        %v1419 = vsub.s32 5, %v1418
        %v1420 = vrot.slane %v403, %v1419
        %1422 = vbcast.lane.b32.xlu0 %v1420, 256
        %v1423 = vpop.permute.xlu0 %1422
        %s1425 = sor.u32 256, 8
        %1426 = vbcast.lane.b32.xlu0 %v1420, %s1425
        %v1427 = vpop.permute.xlu0 %1426
        %v1428 = vlaneseq
        %v1429 = vshrl.u32 %v1428, 7
        %v1430 = vsub.s32 6, %v1429
        %v1431 = vrot.slane %v403, %v1430
        %1433 = vbcast.lane.b32.xlu0 %v1431, 256
        %v1434 = vpop.permute.xlu0 %1433
        %s1436 = sor.u32 256, 8
        %1437 = vbcast.lane.b32.xlu0 %v1431, %s1436
        %v1438 = vpop.permute.xlu0 %1437
        %v1439 = vlaneseq
        %v1440 = vshrl.u32 %v1439, 7
        %v1441 = vsub.s32 7, %v1440
        %v1442 = vrot.slane %v403, %v1441
        %1444 = vbcast.lane.b32.xlu0 %v1442, 256
        %v1445 = vpop.permute.xlu0 %1444
        %s1447 = sor.u32 256, 8
        %1448 = vbcast.lane.b32.xlu0 %v1442, %s1447
        %v1449 = vpop.permute.xlu0 %1448
        %v1450 = vlaneseq
        %v1451 = vshrl.u32 %v1450, 7
        %v1452 = vsub.s32 0, %v1451
        %v1453 = vrot.slane %v404, %v1452
        %1455 = vbcast.lane.b32.xlu0 %v1453, 256
        %v1456 = vpop.permute.xlu0 %1455
        %s1458 = sor.u32 256, 8
        %1459 = vbcast.lane.b32.xlu0 %v1453, %s1458
        %v1460 = vpop.permute.xlu0 %1459
        %v1461 = vlaneseq
        %v1462 = vshrl.u32 %v1461, 7
        %v1463 = vsub.s32 1, %v1462
        %v1464 = vrot.slane %v404, %v1463
        %1466 = vbcast.lane.b32.xlu0 %v1464, 256
        %v1467 = vpop.permute.xlu0 %1466
        %s1469 = sor.u32 256, 8
        %1470 = vbcast.lane.b32.xlu0 %v1464, %s1469
        %v1471 = vpop.permute.xlu0 %1470
        %v1472 = vlaneseq
        %v1473 = vshrl.u32 %v1472, 7
        %v1474 = vsub.s32 2, %v1473
        %v1475 = vrot.slane %v404, %v1474
        %1477 = vbcast.lane.b32.xlu0 %v1475, 256
        %v1478 = vpop.permute.xlu0 %1477
        %s1480 = sor.u32 256, 8
        %1481 = vbcast.lane.b32.xlu0 %v1475, %s1480
        %v1482 = vpop.permute.xlu0 %1481
        %v1483 = vlaneseq
        %v1484 = vshrl.u32 %v1483, 7
        %v1485 = vsub.s32 3, %v1484
        %v1486 = vrot.slane %v404, %v1485
        %1488 = vbcast.lane.b32.xlu0 %v1486, 256
        %v1489 = vpop.permute.xlu0 %1488
        %s1491 = sor.u32 256, 8
        %1492 = vbcast.lane.b32.xlu0 %v1486, %s1491
        %v1493 = vpop.permute.xlu0 %1492
        %v1494 = vlaneseq
        %v1495 = vshrl.u32 %v1494, 7
        %v1496 = vsub.s32 4, %v1495
        %v1497 = vrot.slane %v404, %v1496
        %1499 = vbcast.lane.b32.xlu0 %v1497, 256
        %v1500 = vpop.permute.xlu0 %1499
        %s1502 = sor.u32 256, 8
        %1503 = vbcast.lane.b32.xlu0 %v1497, %s1502
        %v1504 = vpop.permute.xlu0 %1503
        %v1505 = vlaneseq
        %v1506 = vshrl.u32 %v1505, 7
        %v1507 = vsub.s32 5, %v1506
        %v1508 = vrot.slane %v404, %v1507
        %1510 = vbcast.lane.b32.xlu0 %v1508, 256
        %v1511 = vpop.permute.xlu0 %1510
        %s1513 = sor.u32 256, 8
        %1514 = vbcast.lane.b32.xlu0 %v1508, %s1513
        %v1515 = vpop.permute.xlu0 %1514
        %v1516 = vlaneseq
        %v1517 = vshrl.u32 %v1516, 7
        %v1518 = vsub.s32 6, %v1517
        %v1519 = vrot.slane %v404, %v1518
        %1521 = vbcast.lane.b32.xlu0 %v1519, 256
        %v1522 = vpop.permute.xlu0 %1521
        %s1524 = sor.u32 256, 8
        %1525 = vbcast.lane.b32.xlu0 %v1519, %s1524
        %v1526 = vpop.permute.xlu0 %1525
        %v1527 = vlaneseq
        %v1528 = vshrl.u32 %v1527, 7
        %v1529 = vsub.s32 7, %v1528
        %v1530 = vrot.slane %v404, %v1529
        %1532 = vbcast.lane.b32.xlu0 %v1530, 256
        %v1533 = vpop.permute.xlu0 %1532
        %s1535 = sor.u32 256, 8
        %1536 = vbcast.lane.b32.xlu0 %v1530, %s1535
        %v1537 = vpop.permute.xlu0 %1536
        %v1538 = vlaneseq
        %v1539 = vshrl.u32 %v1538, 7
        %v1540 = vsub.s32 0, %v1539
        %v1541 = vrot.slane %v405, %v1540
        %1543 = vbcast.lane.b32.xlu0 %v1541, 256
        %v1544 = vpop.permute.xlu0 %1543
        %s1546 = sor.u32 256, 8
        %1547 = vbcast.lane.b32.xlu0 %v1541, %s1546
        %v1548 = vpop.permute.xlu0 %1547
        %v1549 = vlaneseq
        %v1550 = vshrl.u32 %v1549, 7
        %v1551 = vsub.s32 1, %v1550
        %v1552 = vrot.slane %v405, %v1551
        %1554 = vbcast.lane.b32.xlu0 %v1552, 256
        %v1555 = vpop.permute.xlu0 %1554
        %s1557 = sor.u32 256, 8
        %1558 = vbcast.lane.b32.xlu0 %v1552, %s1557
        %v1559 = vpop.permute.xlu0 %1558
        %v1560 = vlaneseq
        %v1561 = vshrl.u32 %v1560, 7
        %v1562 = vsub.s32 2, %v1561
        %v1563 = vrot.slane %v405, %v1562
        %1565 = vbcast.lane.b32.xlu0 %v1563, 256
        %v1566 = vpop.permute.xlu0 %1565
        %s1568 = sor.u32 256, 8
        %1569 = vbcast.lane.b32.xlu0 %v1563, %s1568
        %v1570 = vpop.permute.xlu0 %1569
        %v1571 = vlaneseq
        %v1572 = vshrl.u32 %v1571, 7
        %v1573 = vsub.s32 3, %v1572
        %v1574 = vrot.slane %v405, %v1573
        %1576 = vbcast.lane.b32.xlu0 %v1574, 256
        %v1577 = vpop.permute.xlu0 %1576
        %s1579 = sor.u32 256, 8
        %1580 = vbcast.lane.b32.xlu0 %v1574, %s1579
        %v1581 = vpop.permute.xlu0 %1580
        %v1582 = vlaneseq
        %v1583 = vshrl.u32 %v1582, 7
        %v1584 = vsub.s32 4, %v1583
        %v1585 = vrot.slane %v405, %v1584
        %1587 = vbcast.lane.b32.xlu0 %v1585, 256
        %v1588 = vpop.permute.xlu0 %1587
        %s1590 = sor.u32 256, 8
        %1591 = vbcast.lane.b32.xlu0 %v1585, %s1590
        %v1592 = vpop.permute.xlu0 %1591
        %v1593 = vlaneseq
        %v1594 = vshrl.u32 %v1593, 7
        %v1595 = vsub.s32 5, %v1594
        %v1596 = vrot.slane %v405, %v1595
        %1598 = vbcast.lane.b32.xlu0 %v1596, 256
        %v1599 = vpop.permute.xlu0 %1598
        %s1601 = sor.u32 256, 8
        %1602 = vbcast.lane.b32.xlu0 %v1596, %s1601
        %v1603 = vpop.permute.xlu0 %1602
        %v1604 = vlaneseq
        %v1605 = vshrl.u32 %v1604, 7
        %v1606 = vsub.s32 6, %v1605
        %v1607 = vrot.slane %v405, %v1606
        %1609 = vbcast.lane.b32.xlu0 %v1607, 256
        %v1610 = vpop.permute.xlu0 %1609
        %s1612 = sor.u32 256, 8
        %1613 = vbcast.lane.b32.xlu0 %v1607, %s1612
        %v1614 = vpop.permute.xlu0 %1613
        %v1615 = vlaneseq
        %v1616 = vshrl.u32 %v1615, 7
        %v1617 = vsub.s32 7, %v1616
        %v1618 = vrot.slane %v405, %v1617
        %1620 = vbcast.lane.b32.xlu0 %v1618, 256
        %v1621 = vpop.permute.xlu0 %1620
        %s1623 = sor.u32 256, 8
        %1624 = vbcast.lane.b32.xlu0 %v1618, %s1623
        %v1625 = vpop.permute.xlu0 %1624
        %s1627 = sor.u32 256, 1
        %1628 = vbcast.lane.b32.xlu0 %v1277, %s1627
        %v1629 = vpop.permute.xlu0 %1628
        %s1631 = sor.u32 256, 9
        %1632 = vbcast.lane.b32.xlu0 %v1277, %s1631
        %v1633 = vpop.permute.xlu0 %1632
        %s1635 = sor.u32 256, 1
        %1636 = vbcast.lane.b32.xlu0 %v1288, %s1635
        %v1637 = vpop.permute.xlu0 %1636
        %s1639 = sor.u32 256, 9
        %1640 = vbcast.lane.b32.xlu0 %v1288, %s1639
        %v1641 = vpop.permute.xlu0 %1640
        %s1643 = sor.u32 256, 1
        %1644 = vbcast.lane.b32.xlu0 %v1299, %s1643
        %v1645 = vpop.permute.xlu0 %1644
        %s1647 = sor.u32 256, 9
        %1648 = vbcast.lane.b32.xlu0 %v1299, %s1647
        %v1649 = vpop.permute.xlu0 %1648
        %s1651 = sor.u32 256, 1
        %1652 = vbcast.lane.b32.xlu0 %v1310, %s1651
        %v1653 = vpop.permute.xlu0 %1652
        %s1655 = sor.u32 256, 9
        %1656 = vbcast.lane.b32.xlu0 %v1310, %s1655
        %v1657 = vpop.permute.xlu0 %1656
        %s1659 = sor.u32 256, 1
        %1660 = vbcast.lane.b32.xlu0 %v1321, %s1659
        %v1661 = vpop.permute.xlu0 %1660
        %s1663 = sor.u32 256, 9
        %1664 = vbcast.lane.b32.xlu0 %v1321, %s1663
        %v1665 = vpop.permute.xlu0 %1664
        %s1667 = sor.u32 256, 1
        %1668 = vbcast.lane.b32.xlu0 %v1332, %s1667
        %v1669 = vpop.permute.xlu0 %1668
        %s1671 = sor.u32 256, 9
        %1672 = vbcast.lane.b32.xlu0 %v1332, %s1671
        %v1673 = vpop.permute.xlu0 %1672
        %s1675 = sor.u32 256, 1
        %1676 = vbcast.lane.b32.xlu0 %v1343, %s1675
        %v1677 = vpop.permute.xlu0 %1676
        %s1679 = sor.u32 256, 9
        %1680 = vbcast.lane.b32.xlu0 %v1343, %s1679
        %v1681 = vpop.permute.xlu0 %1680
        %s1683 = sor.u32 256, 1
        %1684 = vbcast.lane.b32.xlu0 %v1354, %s1683
        %v1685 = vpop.permute.xlu0 %1684
        %s1687 = sor.u32 256, 9
        %1688 = vbcast.lane.b32.xlu0 %v1354, %s1687
        %v1689 = vpop.permute.xlu0 %1688
        %s1691 = sor.u32 256, 1
        %1692 = vbcast.lane.b32.xlu0 %v1365, %s1691
        %v1693 = vpop.permute.xlu0 %1692
        %s1695 = sor.u32 256, 9
        %1696 = vbcast.lane.b32.xlu0 %v1365, %s1695
        %v1697 = vpop.permute.xlu0 %1696
        %s1699 = sor.u32 256, 1
        %1700 = vbcast.lane.b32.xlu0 %v1376, %s1699
        %v1701 = vpop.permute.xlu0 %1700
        %s1703 = sor.u32 256, 9
        %1704 = vbcast.lane.b32.xlu0 %v1376, %s1703
        %v1705 = vpop.permute.xlu0 %1704
        %s1707 = sor.u32 256, 1
        %1708 = vbcast.lane.b32.xlu0 %v1387, %s1707
        %v1709 = vpop.permute.xlu0 %1708
        %s1711 = sor.u32 256, 9
        %1712 = vbcast.lane.b32.xlu0 %v1387, %s1711
        %v1713 = vpop.permute.xlu0 %1712
        %s1715 = sor.u32 256, 1
        %1716 = vbcast.lane.b32.xlu0 %v1398, %s1715
        %v1717 = vpop.permute.xlu0 %1716
        %s1719 = sor.u32 256, 9
        %1720 = vbcast.lane.b32.xlu0 %v1398, %s1719
        %v1721 = vpop.permute.xlu0 %1720
        %s1723 = sor.u32 256, 1
        %1724 = vbcast.lane.b32.xlu0 %v1409, %s1723
        %v1725 = vpop.permute.xlu0 %1724
        %s1727 = sor.u32 256, 9
        %1728 = vbcast.lane.b32.xlu0 %v1409, %s1727
        %v1729 = vpop.permute.xlu0 %1728
        %s1731 = sor.u32 256, 1
        %1732 = vbcast.lane.b32.xlu0 %v1420, %s1731
        %v1733 = vpop.permute.xlu0 %1732
        %s1735 = sor.u32 256, 9
        %1736 = vbcast.lane.b32.xlu0 %v1420, %s1735
        %v1737 = vpop.permute.xlu0 %1736
        %s1739 = sor.u32 256, 1
        %1740 = vbcast.lane.b32.xlu0 %v1431, %s1739
        %v1741 = vpop.permute.xlu0 %1740
        %s1743 = sor.u32 256, 9
        %1744 = vbcast.lane.b32.xlu0 %v1431, %s1743
        %v1745 = vpop.permute.xlu0 %1744
        %s1747 = sor.u32 256, 1
        %1748 = vbcast.lane.b32.xlu0 %v1442, %s1747
        %v1749 = vpop.permute.xlu0 %1748
        %s1751 = sor.u32 256, 9
        %1752 = vbcast.lane.b32.xlu0 %v1442, %s1751
        %v1753 = vpop.permute.xlu0 %1752
        %s1755 = sor.u32 256, 1
        %1756 = vbcast.lane.b32.xlu0 %v1453, %s1755
        %v1757 = vpop.permute.xlu0 %1756
        %s1759 = sor.u32 256, 9
        %1760 = vbcast.lane.b32.xlu0 %v1453, %s1759
        %v1761 = vpop.permute.xlu0 %1760
        %s1763 = sor.u32 256, 1
        %1764 = vbcast.lane.b32.xlu0 %v1464, %s1763
        %v1765 = vpop.permute.xlu0 %1764
        %s1767 = sor.u32 256, 9
        %1768 = vbcast.lane.b32.xlu0 %v1464, %s1767
        %v1769 = vpop.permute.xlu0 %1768
        %s1771 = sor.u32 256, 1
        %1772 = vbcast.lane.b32.xlu0 %v1475, %s1771
        %v1773 = vpop.permute.xlu0 %1772
        %s1775 = sor.u32 256, 9
        %1776 = vbcast.lane.b32.xlu0 %v1475, %s1775
        %v1777 = vpop.permute.xlu0 %1776
        %s1779 = sor.u32 256, 1
        %1780 = vbcast.lane.b32.xlu0 %v1486, %s1779
        %v1781 = vpop.permute.xlu0 %1780
        %s1783 = sor.u32 256, 9
        %1784 = vbcast.lane.b32.xlu0 %v1486, %s1783
        %v1785 = vpop.permute.xlu0 %1784
        %s1787 = sor.u32 256, 1
        %1788 = vbcast.lane.b32.xlu0 %v1497, %s1787
        %v1789 = vpop.permute.xlu0 %1788
        %s1791 = sor.u32 256, 9
        %1792 = vbcast.lane.b32.xlu0 %v1497, %s1791
        %v1793 = vpop.permute.xlu0 %1792
        %s1795 = sor.u32 256, 1
        %1796 = vbcast.lane.b32.xlu0 %v1508, %s1795
        %v1797 = vpop.permute.xlu0 %1796
        %s1799 = sor.u32 256, 9
        %1800 = vbcast.lane.b32.xlu0 %v1508, %s1799
        %v1801 = vpop.permute.xlu0 %1800
        %s1803 = sor.u32 256, 1
        %1804 = vbcast.lane.b32.xlu0 %v1519, %s1803
        %v1805 = vpop.permute.xlu0 %1804
        %s1807 = sor.u32 256, 9
        %1808 = vbcast.lane.b32.xlu0 %v1519, %s1807
        %v1809 = vpop.permute.xlu0 %1808
        %s1811 = sor.u32 256, 1
        %1812 = vbcast.lane.b32.xlu0 %v1530, %s1811
        %v1813 = vpop.permute.xlu0 %1812
        %s1815 = sor.u32 256, 9
        %1816 = vbcast.lane.b32.xlu0 %v1530, %s1815
        %v1817 = vpop.permute.xlu0 %1816
        %s1819 = sor.u32 256, 1
        %1820 = vbcast.lane.b32.xlu0 %v1541, %s1819
        %v1821 = vpop.permute.xlu0 %1820
        %s1823 = sor.u32 256, 9
        %1824 = vbcast.lane.b32.xlu0 %v1541, %s1823
        %v1825 = vpop.permute.xlu0 %1824
        %s1827 = sor.u32 256, 1
        %1828 = vbcast.lane.b32.xlu0 %v1552, %s1827
        %v1829 = vpop.permute.xlu0 %1828
        %s1831 = sor.u32 256, 9
        %1832 = vbcast.lane.b32.xlu0 %v1552, %s1831
        %v1833 = vpop.permute.xlu0 %1832
        %s1835 = sor.u32 256, 1
        %1836 = vbcast.lane.b32.xlu0 %v1563, %s1835
        %v1837 = vpop.permute.xlu0 %1836
        %s1839 = sor.u32 256, 9
        %1840 = vbcast.lane.b32.xlu0 %v1563, %s1839
        %v1841 = vpop.permute.xlu0 %1840
        %s1843 = sor.u32 256, 1
        %1844 = vbcast.lane.b32.xlu0 %v1574, %s1843
        %v1845 = vpop.permute.xlu0 %1844
        %s1847 = sor.u32 256, 9
        %1848 = vbcast.lane.b32.xlu0 %v1574, %s1847
        %v1849 = vpop.permute.xlu0 %1848
        %s1851 = sor.u32 256, 1
        %1852 = vbcast.lane.b32.xlu0 %v1585, %s1851
        %v1853 = vpop.permute.xlu0 %1852
        %s1855 = sor.u32 256, 9
        %1856 = vbcast.lane.b32.xlu0 %v1585, %s1855
        %v1857 = vpop.permute.xlu0 %1856
        %s1859 = sor.u32 256, 1
        %1860 = vbcast.lane.b32.xlu0 %v1596, %s1859
        %v1861 = vpop.permute.xlu0 %1860
        %s1863 = sor.u32 256, 9
        %1864 = vbcast.lane.b32.xlu0 %v1596, %s1863
        %v1865 = vpop.permute.xlu0 %1864
        %s1867 = sor.u32 256, 1
        %1868 = vbcast.lane.b32.xlu0 %v1607, %s1867
        %v1869 = vpop.permute.xlu0 %1868
        %s1871 = sor.u32 256, 9
        %1872 = vbcast.lane.b32.xlu0 %v1607, %s1871
        %v1873 = vpop.permute.xlu0 %1872
        %s1875 = sor.u32 256, 1
        %1876 = vbcast.lane.b32.xlu0 %v1618, %s1875
        %v1877 = vpop.permute.xlu0 %1876
        %s1879 = sor.u32 256, 9
        %1880 = vbcast.lane.b32.xlu0 %v1618, %s1879
        %v1881 = vpop.permute.xlu0 %1880
        %s1883 = sor.u32 256, 2
        %1884 = vbcast.lane.b32.xlu0 %v1277, %s1883
        %v1885 = vpop.permute.xlu0 %1884
        %s1887 = sor.u32 256, 10
        %1888 = vbcast.lane.b32.xlu0 %v1277, %s1887
        %v1889 = vpop.permute.xlu0 %1888
        %s1891 = sor.u32 256, 2
        %1892 = vbcast.lane.b32.xlu0 %v1288, %s1891
        %v1893 = vpop.permute.xlu0 %1892
        %s1895 = sor.u32 256, 10
        %1896 = vbcast.lane.b32.xlu0 %v1288, %s1895
        %v1897 = vpop.permute.xlu0 %1896
        %s1899 = sor.u32 256, 2
        %1900 = vbcast.lane.b32.xlu0 %v1299, %s1899
        %v1901 = vpop.permute.xlu0 %1900
        %s1903 = sor.u32 256, 10
        %1904 = vbcast.lane.b32.xlu0 %v1299, %s1903
        %v1905 = vpop.permute.xlu0 %1904
        %s1907 = sor.u32 256, 2
        %1908 = vbcast.lane.b32.xlu0 %v1310, %s1907
        %v1909 = vpop.permute.xlu0 %1908
        %s1911 = sor.u32 256, 10
        %1912 = vbcast.lane.b32.xlu0 %v1310, %s1911
        %v1913 = vpop.permute.xlu0 %1912
        %s1915 = sor.u32 256, 2
        %1916 = vbcast.lane.b32.xlu0 %v1321, %s1915
        %v1917 = vpop.permute.xlu0 %1916
        %s1919 = sor.u32 256, 10
        %1920 = vbcast.lane.b32.xlu0 %v1321, %s1919
        %v1921 = vpop.permute.xlu0 %1920
        %s1923 = sor.u32 256, 2
        %1924 = vbcast.lane.b32.xlu0 %v1332, %s1923
        %v1925 = vpop.permute.xlu0 %1924
        %s1927 = sor.u32 256, 10
        %1928 = vbcast.lane.b32.xlu0 %v1332, %s1927
        %v1929 = vpop.permute.xlu0 %1928
        %s1931 = sor.u32 256, 2
        %1932 = vbcast.lane.b32.xlu0 %v1343, %s1931
        %v1933 = vpop.permute.xlu0 %1932
        %s1935 = sor.u32 256, 10
        %1936 = vbcast.lane.b32.xlu0 %v1343, %s1935
        %v1937 = vpop.permute.xlu0 %1936
        %s1939 = sor.u32 256, 2
        %1940 = vbcast.lane.b32.xlu0 %v1354, %s1939
        %v1941 = vpop.permute.xlu0 %1940
        %s1943 = sor.u32 256, 10
        %1944 = vbcast.lane.b32.xlu0 %v1354, %s1943
        %v1945 = vpop.permute.xlu0 %1944
        %s1947 = sor.u32 256, 2
        %1948 = vbcast.lane.b32.xlu0 %v1365, %s1947
        %v1949 = vpop.permute.xlu0 %1948
        %s1951 = sor.u32 256, 10
        %1952 = vbcast.lane.b32.xlu0 %v1365, %s1951
        %v1953 = vpop.permute.xlu0 %1952
        %s1955 = sor.u32 256, 2
        %1956 = vbcast.lane.b32.xlu0 %v1376, %s1955
        %v1957 = vpop.permute.xlu0 %1956
        %s1959 = sor.u32 256, 10
        %1960 = vbcast.lane.b32.xlu0 %v1376, %s1959
        %v1961 = vpop.permute.xlu0 %1960
        %s1963 = sor.u32 256, 2
        %1964 = vbcast.lane.b32.xlu0 %v1387, %s1963
        %v1965 = vpop.permute.xlu0 %1964
        %s1967 = sor.u32 256, 10
        %1968 = vbcast.lane.b32.xlu0 %v1387, %s1967
        %v1969 = vpop.permute.xlu0 %1968
        %s1971 = sor.u32 256, 2
        %1972 = vbcast.lane.b32.xlu0 %v1398, %s1971
        %v1973 = vpop.permute.xlu0 %1972
        %s1975 = sor.u32 256, 10
        %1976 = vbcast.lane.b32.xlu0 %v1398, %s1975
        %v1977 = vpop.permute.xlu0 %1976
        %s1979 = sor.u32 256, 2
        %1980 = vbcast.lane.b32.xlu0 %v1409, %s1979
        %v1981 = vpop.permute.xlu0 %1980
        %s1983 = sor.u32 256, 10
        %1984 = vbcast.lane.b32.xlu0 %v1409, %s1983
        %v1985 = vpop.permute.xlu0 %1984
        %s1987 = sor.u32 256, 2
        %1988 = vbcast.lane.b32.xlu0 %v1420, %s1987
        %v1989 = vpop.permute.xlu0 %1988
        %s1991 = sor.u32 256, 10
        %1992 = vbcast.lane.b32.xlu0 %v1420, %s1991
        %v1993 = vpop.permute.xlu0 %1992
        %s1995 = sor.u32 256, 2
        %1996 = vbcast.lane.b32.xlu0 %v1431, %s1995
        %v1997 = vpop.permute.xlu0 %1996
        %s1999 = sor.u32 256, 10
        %2000 = vbcast.lane.b32.xlu0 %v1431, %s1999
        %v2001 = vpop.permute.xlu0 %2000
        %s2003 = sor.u32 256, 2
        %2004 = vbcast.lane.b32.xlu0 %v1442, %s2003
        %v2005 = vpop.permute.xlu0 %2004
        %s2007 = sor.u32 256, 10
        %2008 = vbcast.lane.b32.xlu0 %v1442, %s2007
        %v2009 = vpop.permute.xlu0 %2008
        %s2011 = sor.u32 256, 2
        %2012 = vbcast.lane.b32.xlu0 %v1453, %s2011
        %v2013 = vpop.permute.xlu0 %2012
        %s2015 = sor.u32 256, 10
        %2016 = vbcast.lane.b32.xlu0 %v1453, %s2015
        %v2017 = vpop.permute.xlu0 %2016
        %s2019 = sor.u32 256, 2
        %2020 = vbcast.lane.b32.xlu0 %v1464, %s2019
        %v2021 = vpop.permute.xlu0 %2020
        %s2023 = sor.u32 256, 10
        %2024 = vbcast.lane.b32.xlu0 %v1464, %s2023
        %v2025 = vpop.permute.xlu0 %2024
        %s2027 = sor.u32 256, 2
        %2028 = vbcast.lane.b32.xlu0 %v1475, %s2027
        %v2029 = vpop.permute.xlu0 %2028
        %s2031 = sor.u32 256, 10
        %2032 = vbcast.lane.b32.xlu0 %v1475, %s2031
        %v2033 = vpop.permute.xlu0 %2032
        %s2035 = sor.u32 256, 2
        %2036 = vbcast.lane.b32.xlu0 %v1486, %s2035
        %v2037 = vpop.permute.xlu0 %2036
        %s2039 = sor.u32 256, 10
        %2040 = vbcast.lane.b32.xlu0 %v1486, %s2039
        %v2041 = vpop.permute.xlu0 %2040
        %s2043 = sor.u32 256, 2
        %2044 = vbcast.lane.b32.xlu0 %v1497, %s2043
        %v2045 = vpop.permute.xlu0 %2044
        %s2047 = sor.u32 256, 10
        %2048 = vbcast.lane.b32.xlu0 %v1497, %s2047
        %v2049 = vpop.permute.xlu0 %2048
        %s2051 = sor.u32 256, 2
        %2052 = vbcast.lane.b32.xlu0 %v1508, %s2051
        %v2053 = vpop.permute.xlu0 %2052
        %s2055 = sor.u32 256, 10
        %2056 = vbcast.lane.b32.xlu0 %v1508, %s2055
        %v2057 = vpop.permute.xlu0 %2056
        %s2059 = sor.u32 256, 2
        %2060 = vbcast.lane.b32.xlu0 %v1519, %s2059
        %v2061 = vpop.permute.xlu0 %2060
        %s2063 = sor.u32 256, 10
        %2064 = vbcast.lane.b32.xlu0 %v1519, %s2063
        %v2065 = vpop.permute.xlu0 %2064
        %s2067 = sor.u32 256, 2
        %2068 = vbcast.lane.b32.xlu0 %v1530, %s2067
        %v2069 = vpop.permute.xlu0 %2068
        %s2071 = sor.u32 256, 10
        %2072 = vbcast.lane.b32.xlu0 %v1530, %s2071
        %v2073 = vpop.permute.xlu0 %2072
        %s2075 = sor.u32 256, 2
        %2076 = vbcast.lane.b32.xlu0 %v1541, %s2075
        %v2077 = vpop.permute.xlu0 %2076
        %s2079 = sor.u32 256, 10
        %2080 = vbcast.lane.b32.xlu0 %v1541, %s2079
        %v2081 = vpop.permute.xlu0 %2080
        %s2083 = sor.u32 256, 2
        %2084 = vbcast.lane.b32.xlu0 %v1552, %s2083
        %v2085 = vpop.permute.xlu0 %2084
        %s2087 = sor.u32 256, 10
        %2088 = vbcast.lane.b32.xlu0 %v1552, %s2087
        %v2089 = vpop.permute.xlu0 %2088
        %s2091 = sor.u32 256, 2
        %2092 = vbcast.lane.b32.xlu0 %v1563, %s2091
        %v2093 = vpop.permute.xlu0 %2092
        %s2095 = sor.u32 256, 10
        %2096 = vbcast.lane.b32.xlu0 %v1563, %s2095
        %v2097 = vpop.permute.xlu0 %2096
        %s2099 = sor.u32 256, 2
        %2100 = vbcast.lane.b32.xlu0 %v1574, %s2099
        %v2101 = vpop.permute.xlu0 %2100
        %s2103 = sor.u32 256, 10
        %2104 = vbcast.lane.b32.xlu0 %v1574, %s2103
        %v2105 = vpop.permute.xlu0 %2104
        %s2107 = sor.u32 256, 2
        %2108 = vbcast.lane.b32.xlu0 %v1585, %s2107
        %v2109 = vpop.permute.xlu0 %2108
        %s2111 = sor.u32 256, 10
        %2112 = vbcast.lane.b32.xlu0 %v1585, %s2111
        %v2113 = vpop.permute.xlu0 %2112
        %s2115 = sor.u32 256, 2
        %2116 = vbcast.lane.b32.xlu0 %v1596, %s2115
        %v2117 = vpop.permute.xlu0 %2116
        %s2119 = sor.u32 256, 10
        %2120 = vbcast.lane.b32.xlu0 %v1596, %s2119
        %v2121 = vpop.permute.xlu0 %2120
        %s2123 = sor.u32 256, 2
        %2124 = vbcast.lane.b32.xlu0 %v1607, %s2123
        %v2125 = vpop.permute.xlu0 %2124
        %s2127 = sor.u32 256, 10
        %2128 = vbcast.lane.b32.xlu0 %v1607, %s2127
        %v2129 = vpop.permute.xlu0 %2128
        %s2131 = sor.u32 256, 2
        %2132 = vbcast.lane.b32.xlu0 %v1618, %s2131
        %v2133 = vpop.permute.xlu0 %2132
        %s2135 = sor.u32 256, 10
        %2136 = vbcast.lane.b32.xlu0 %v1618, %s2135
        %v2137 = vpop.permute.xlu0 %2136
        %v2138 = vlaneseq
        %v2139 = vshrl.u32 %v2138, 7
        %v2140 = vsub.s32 0, %v2139
        %v2141 = vrot.slane %v406, %v2140
        %2143 = vbcast.lane.b32.xlu0 %v2141, 256
        %v2144 = vpop.permute.xlu0 %2143
        %s2146 = sor.u32 256, 8
        %2147 = vbcast.lane.b32.xlu0 %v2141, %s2146
        %v2148 = vpop.permute.xlu0 %2147
        %v2149 = vlaneseq
        %v2150 = vshrl.u32 %v2149, 7
        %v2151 = vsub.s32 1, %v2150
        %v2152 = vrot.slane %v406, %v2151
        %2154 = vbcast.lane.b32.xlu0 %v2152, 256
        %v2155 = vpop.permute.xlu0 %2154
        %s2157 = sor.u32 256, 8
        %2158 = vbcast.lane.b32.xlu0 %v2152, %s2157
        %v2159 = vpop.permute.xlu0 %2158
        %v2160 = vlaneseq
        %v2161 = vshrl.u32 %v2160, 7
        %v2162 = vsub.s32 2, %v2161
        %v2163 = vrot.slane %v406, %v2162
        %2165 = vbcast.lane.b32.xlu0 %v2163, 256
        %v2166 = vpop.permute.xlu0 %2165
        %s2168 = sor.u32 256, 8
        %2169 = vbcast.lane.b32.xlu0 %v2163, %s2168
        %v2170 = vpop.permute.xlu0 %2169
        %v2171 = vlaneseq
        %v2172 = vshrl.u32 %v2171, 7
        %v2173 = vsub.s32 3, %v2172
        %v2174 = vrot.slane %v406, %v2173
        %2176 = vbcast.lane.b32.xlu0 %v2174, 256
        %v2177 = vpop.permute.xlu0 %2176
        %s2179 = sor.u32 256, 8
        %2180 = vbcast.lane.b32.xlu0 %v2174, %s2179
        %v2181 = vpop.permute.xlu0 %2180
        %v2182 = vlaneseq
        %v2183 = vshrl.u32 %v2182, 7
        %v2184 = vsub.s32 4, %v2183
        %v2185 = vrot.slane %v406, %v2184
        %2187 = vbcast.lane.b32.xlu0 %v2185, 256
        %v2188 = vpop.permute.xlu0 %2187
        %s2190 = sor.u32 256, 8
        %2191 = vbcast.lane.b32.xlu0 %v2185, %s2190
        %v2192 = vpop.permute.xlu0 %2191
        %v2193 = vlaneseq
        %v2194 = vshrl.u32 %v2193, 7
        %v2195 = vsub.s32 5, %v2194
        %v2196 = vrot.slane %v406, %v2195
        %2198 = vbcast.lane.b32.xlu0 %v2196, 256
        %v2199 = vpop.permute.xlu0 %2198
        %s2201 = sor.u32 256, 8
        %2202 = vbcast.lane.b32.xlu0 %v2196, %s2201
        %v2203 = vpop.permute.xlu0 %2202
        %v2204 = vlaneseq
        %v2205 = vshrl.u32 %v2204, 7
        %v2206 = vsub.s32 6, %v2205
        %v2207 = vrot.slane %v406, %v2206
        %2209 = vbcast.lane.b32.xlu0 %v2207, 256
        %v2210 = vpop.permute.xlu0 %2209
        %s2212 = sor.u32 256, 8
        %2213 = vbcast.lane.b32.xlu0 %v2207, %s2212
        %v2214 = vpop.permute.xlu0 %2213
        %v2215 = vlaneseq
        %v2216 = vshrl.u32 %v2215, 7
        %v2217 = vsub.s32 7, %v2216
        %v2218 = vrot.slane %v406, %v2217
        %2220 = vbcast.lane.b32.xlu0 %v2218, 256
        %v2221 = vpop.permute.xlu0 %2220
        %s2223 = sor.u32 256, 8
        %2224 = vbcast.lane.b32.xlu0 %v2218, %s2223
        %v2225 = vpop.permute.xlu0 %2224
        %v2226 = vlaneseq
        %v2227 = vshrl.u32 %v2226, 7
        %v2228 = vsub.s32 0, %v2227
        %v2229 = vrot.slane %v407, %v2228
        %2231 = vbcast.lane.b32.xlu0 %v2229, 256
        %v2232 = vpop.permute.xlu0 %2231
        %s2234 = sor.u32 256, 8
        %2235 = vbcast.lane.b32.xlu0 %v2229, %s2234
        %v2236 = vpop.permute.xlu0 %2235
        %v2237 = vlaneseq
        %v2238 = vshrl.u32 %v2237, 7
        %v2239 = vsub.s32 1, %v2238
        %v2240 = vrot.slane %v407, %v2239
        %2242 = vbcast.lane.b32.xlu0 %v2240, 256
        %v2243 = vpop.permute.xlu0 %2242
        %s2245 = sor.u32 256, 8
        %2246 = vbcast.lane.b32.xlu0 %v2240, %s2245
        %v2247 = vpop.permute.xlu0 %2246
        %v2248 = vlaneseq
        %v2249 = vshrl.u32 %v2248, 7
        %v2250 = vsub.s32 2, %v2249
        %v2251 = vrot.slane %v407, %v2250
        %2253 = vbcast.lane.b32.xlu0 %v2251, 256
        %v2254 = vpop.permute.xlu0 %2253
        %s2256 = sor.u32 256, 8
        %2257 = vbcast.lane.b32.xlu0 %v2251, %s2256
        %v2258 = vpop.permute.xlu0 %2257
        %v2259 = vlaneseq
        %v2260 = vshrl.u32 %v2259, 7
        %v2261 = vsub.s32 3, %v2260
        %v2262 = vrot.slane %v407, %v2261
        %2264 = vbcast.lane.b32.xlu0 %v2262, 256
        %v2265 = vpop.permute.xlu0 %2264
        %s2267 = sor.u32 256, 8
        %2268 = vbcast.lane.b32.xlu0 %v2262, %s2267
        %v2269 = vpop.permute.xlu0 %2268
        %v2270 = vlaneseq
        %v2271 = vshrl.u32 %v2270, 7
        %v2272 = vsub.s32 4, %v2271
        %v2273 = vrot.slane %v407, %v2272
        %2275 = vbcast.lane.b32.xlu0 %v2273, 256
        %v2276 = vpop.permute.xlu0 %2275
        %s2278 = sor.u32 256, 8
        %2279 = vbcast.lane.b32.xlu0 %v2273, %s2278
        %v2280 = vpop.permute.xlu0 %2279
        %v2281 = vlaneseq
        %v2282 = vshrl.u32 %v2281, 7
        %v2283 = vsub.s32 5, %v2282
        %v2284 = vrot.slane %v407, %v2283
        %2286 = vbcast.lane.b32.xlu0 %v2284, 256
        %v2287 = vpop.permute.xlu0 %2286
        %s2289 = sor.u32 256, 8
        %2290 = vbcast.lane.b32.xlu0 %v2284, %s2289
        %v2291 = vpop.permute.xlu0 %2290
        %v2292 = vlaneseq
        %v2293 = vshrl.u32 %v2292, 7
        %v2294 = vsub.s32 6, %v2293
        %v2295 = vrot.slane %v407, %v2294
        %2297 = vbcast.lane.b32.xlu0 %v2295, 256
        %v2298 = vpop.permute.xlu0 %2297
        %s2300 = sor.u32 256, 8
        %2301 = vbcast.lane.b32.xlu0 %v2295, %s2300
        %v2302 = vpop.permute.xlu0 %2301
        %v2303 = vlaneseq
        %v2304 = vshrl.u32 %v2303, 7
        %v2305 = vsub.s32 7, %v2304
        %v2306 = vrot.slane %v407, %v2305
        %2308 = vbcast.lane.b32.xlu0 %v2306, 256
        %v2309 = vpop.permute.xlu0 %2308
        %s2311 = sor.u32 256, 8
        %2312 = vbcast.lane.b32.xlu0 %v2306, %s2311
        %v2313 = vpop.permute.xlu0 %2312
        %v2314 = vlaneseq
        %v2315 = vshrl.u32 %v2314, 7
        %v2316 = vsub.s32 0, %v2315
        %v2317 = vrot.slane %v408, %v2316
        %2319 = vbcast.lane.b32.xlu0 %v2317, 256
        %v2320 = vpop.permute.xlu0 %2319
        %s2322 = sor.u32 256, 8
        %2323 = vbcast.lane.b32.xlu0 %v2317, %s2322
        %v2324 = vpop.permute.xlu0 %2323
        %v2325 = vlaneseq
        %v2326 = vshrl.u32 %v2325, 7
        %v2327 = vsub.s32 1, %v2326
        %v2328 = vrot.slane %v408, %v2327
        %2330 = vbcast.lane.b32.xlu0 %v2328, 256
        %v2331 = vpop.permute.xlu0 %2330
        %s2333 = sor.u32 256, 8
        %2334 = vbcast.lane.b32.xlu0 %v2328, %s2333
        %v2335 = vpop.permute.xlu0 %2334
        %v2336 = vlaneseq
        %v2337 = vshrl.u32 %v2336, 7
        %v2338 = vsub.s32 2, %v2337
        %v2339 = vrot.slane %v408, %v2338
        %2341 = vbcast.lane.b32.xlu0 %v2339, 256
        %v2342 = vpop.permute.xlu0 %2341
        %s2344 = sor.u32 256, 8
        %2345 = vbcast.lane.b32.xlu0 %v2339, %s2344
        %v2346 = vpop.permute.xlu0 %2345
        %v2347 = vlaneseq
        %v2348 = vshrl.u32 %v2347, 7
        %v2349 = vsub.s32 3, %v2348
        %v2350 = vrot.slane %v408, %v2349
        %2352 = vbcast.lane.b32.xlu0 %v2350, 256
        %v2353 = vpop.permute.xlu0 %2352
        %s2355 = sor.u32 256, 8
        %2356 = vbcast.lane.b32.xlu0 %v2350, %s2355
        %v2357 = vpop.permute.xlu0 %2356
        %v2358 = vlaneseq
        %v2359 = vshrl.u32 %v2358, 7
        %v2360 = vsub.s32 4, %v2359
        %v2361 = vrot.slane %v408, %v2360
        %2363 = vbcast.lane.b32.xlu0 %v2361, 256
        %v2364 = vpop.permute.xlu0 %2363
        %s2366 = sor.u32 256, 8
        %2367 = vbcast.lane.b32.xlu0 %v2361, %s2366
        %v2368 = vpop.permute.xlu0 %2367
        %v2369 = vlaneseq
        %v2370 = vshrl.u32 %v2369, 7
        %v2371 = vsub.s32 5, %v2370
        %v2372 = vrot.slane %v408, %v2371
        %2374 = vbcast.lane.b32.xlu0 %v2372, 256
        %v2375 = vpop.permute.xlu0 %2374
        %s2377 = sor.u32 256, 8
        %2378 = vbcast.lane.b32.xlu0 %v2372, %s2377
        %v2379 = vpop.permute.xlu0 %2378
        %v2380 = vlaneseq
        %v2381 = vshrl.u32 %v2380, 7
        %v2382 = vsub.s32 6, %v2381
        %v2383 = vrot.slane %v408, %v2382
        %2385 = vbcast.lane.b32.xlu0 %v2383, 256
        %v2386 = vpop.permute.xlu0 %2385
        %s2388 = sor.u32 256, 8
        %2389 = vbcast.lane.b32.xlu0 %v2383, %s2388
        %v2390 = vpop.permute.xlu0 %2389
        %v2391 = vlaneseq
        %v2392 = vshrl.u32 %v2391, 7
        %v2393 = vsub.s32 7, %v2392
        %v2394 = vrot.slane %v408, %v2393
        %2396 = vbcast.lane.b32.xlu0 %v2394, 256
        %v2397 = vpop.permute.xlu0 %2396
        %s2399 = sor.u32 256, 8
        %2400 = vbcast.lane.b32.xlu0 %v2394, %s2399
        %v2401 = vpop.permute.xlu0 %2400
        %v2402 = vlaneseq
        %v2403 = vshrl.u32 %v2402, 7
        %v2404 = vsub.s32 0, %v2403
        %v2405 = vrot.slane %v409, %v2404
        %2407 = vbcast.lane.b32.xlu0 %v2405, 256
        %v2408 = vpop.permute.xlu0 %2407
        %s2410 = sor.u32 256, 8
        %2411 = vbcast.lane.b32.xlu0 %v2405, %s2410
        %v2412 = vpop.permute.xlu0 %2411
        %v2413 = vlaneseq
        %v2414 = vshrl.u32 %v2413, 7
        %v2415 = vsub.s32 1, %v2414
        %v2416 = vrot.slane %v409, %v2415
        %2418 = vbcast.lane.b32.xlu0 %v2416, 256
        %v2419 = vpop.permute.xlu0 %2418
        %s2421 = sor.u32 256, 8
        %2422 = vbcast.lane.b32.xlu0 %v2416, %s2421
        %v2423 = vpop.permute.xlu0 %2422
        %v2424 = vlaneseq
        %v2425 = vshrl.u32 %v2424, 7
        %v2426 = vsub.s32 2, %v2425
        %v2427 = vrot.slane %v409, %v2426
        %2429 = vbcast.lane.b32.xlu0 %v2427, 256
        %v2430 = vpop.permute.xlu0 %2429
        %s2432 = sor.u32 256, 8
        %2433 = vbcast.lane.b32.xlu0 %v2427, %s2432
        %v2434 = vpop.permute.xlu0 %2433
        %v2435 = vlaneseq
        %v2436 = vshrl.u32 %v2435, 7
        %v2437 = vsub.s32 3, %v2436
        %v2438 = vrot.slane %v409, %v2437
        %2440 = vbcast.lane.b32.xlu0 %v2438, 256
        %v2441 = vpop.permute.xlu0 %2440
        %s2443 = sor.u32 256, 8
        %2444 = vbcast.lane.b32.xlu0 %v2438, %s2443
        %v2445 = vpop.permute.xlu0 %2444
        %v2446 = vlaneseq
        %v2447 = vshrl.u32 %v2446, 7
        %v2448 = vsub.s32 4, %v2447
        %v2449 = vrot.slane %v409, %v2448
        %2451 = vbcast.lane.b32.xlu0 %v2449, 256
        %v2452 = vpop.permute.xlu0 %2451
        %s2454 = sor.u32 256, 8
        %2455 = vbcast.lane.b32.xlu0 %v2449, %s2454
        %v2456 = vpop.permute.xlu0 %2455
        %v2457 = vlaneseq
        %v2458 = vshrl.u32 %v2457, 7
        %v2459 = vsub.s32 5, %v2458
        %v2460 = vrot.slane %v409, %v2459
        %2462 = vbcast.lane.b32.xlu0 %v2460, 256
        %v2463 = vpop.permute.xlu0 %2462
        %s2465 = sor.u32 256, 8
        %2466 = vbcast.lane.b32.xlu0 %v2460, %s2465
        %v2467 = vpop.permute.xlu0 %2466
        %v2468 = vlaneseq
        %v2469 = vshrl.u32 %v2468, 7
        %v2470 = vsub.s32 6, %v2469
        %v2471 = vrot.slane %v409, %v2470
        %2473 = vbcast.lane.b32.xlu0 %v2471, 256
        %v2474 = vpop.permute.xlu0 %2473
        %s2476 = sor.u32 256, 8
        %2477 = vbcast.lane.b32.xlu0 %v2471, %s2476
        %v2478 = vpop.permute.xlu0 %2477
        %v2479 = vlaneseq
        %v2480 = vshrl.u32 %v2479, 7
        %v2481 = vsub.s32 7, %v2480
        %v2482 = vrot.slane %v409, %v2481
        %2484 = vbcast.lane.b32.xlu0 %v2482, 256
        %v2485 = vpop.permute.xlu0 %2484
        %s2487 = sor.u32 256, 8
        %2488 = vbcast.lane.b32.xlu0 %v2482, %s2487
        %v2489 = vpop.permute.xlu0 %2488
        %s2491 = sor.u32 256, 1
        %2492 = vbcast.lane.b32.xlu0 %v2141, %s2491
        %v2493 = vpop.permute.xlu0 %2492
        %s2495 = sor.u32 256, 9
        %2496 = vbcast.lane.b32.xlu0 %v2141, %s2495
        %v2497 = vpop.permute.xlu0 %2496
        %s2499 = sor.u32 256, 1
        %2500 = vbcast.lane.b32.xlu0 %v2152, %s2499
        %v2501 = vpop.permute.xlu0 %2500
        %s2503 = sor.u32 256, 9
        %2504 = vbcast.lane.b32.xlu0 %v2152, %s2503
        %v2505 = vpop.permute.xlu0 %2504
        %s2507 = sor.u32 256, 1
        %2508 = vbcast.lane.b32.xlu0 %v2163, %s2507
        %v2509 = vpop.permute.xlu0 %2508
        %s2511 = sor.u32 256, 9
        %2512 = vbcast.lane.b32.xlu0 %v2163, %s2511
        %v2513 = vpop.permute.xlu0 %2512
        %s2515 = sor.u32 256, 1
        %2516 = vbcast.lane.b32.xlu0 %v2174, %s2515
        %v2517 = vpop.permute.xlu0 %2516
        %s2519 = sor.u32 256, 9
        %2520 = vbcast.lane.b32.xlu0 %v2174, %s2519
        %v2521 = vpop.permute.xlu0 %2520
        %s2523 = sor.u32 256, 1
        %2524 = vbcast.lane.b32.xlu0 %v2185, %s2523
        %v2525 = vpop.permute.xlu0 %2524
        %s2527 = sor.u32 256, 9
        %2528 = vbcast.lane.b32.xlu0 %v2185, %s2527
        %v2529 = vpop.permute.xlu0 %2528
        %s2531 = sor.u32 256, 1
        %2532 = vbcast.lane.b32.xlu0 %v2196, %s2531
        %v2533 = vpop.permute.xlu0 %2532
        %s2535 = sor.u32 256, 9
        %2536 = vbcast.lane.b32.xlu0 %v2196, %s2535
        %v2537 = vpop.permute.xlu0 %2536
        %s2539 = sor.u32 256, 1
        %2540 = vbcast.lane.b32.xlu0 %v2207, %s2539
        %v2541 = vpop.permute.xlu0 %2540
        %s2543 = sor.u32 256, 9
        %2544 = vbcast.lane.b32.xlu0 %v2207, %s2543
        %v2545 = vpop.permute.xlu0 %2544
        %s2547 = sor.u32 256, 1
        %2548 = vbcast.lane.b32.xlu0 %v2218, %s2547
        %v2549 = vpop.permute.xlu0 %2548
        %s2551 = sor.u32 256, 9
        %2552 = vbcast.lane.b32.xlu0 %v2218, %s2551
        %v2553 = vpop.permute.xlu0 %2552
        %s2555 = sor.u32 256, 1
        %2556 = vbcast.lane.b32.xlu0 %v2229, %s2555
        %v2557 = vpop.permute.xlu0 %2556
        %s2559 = sor.u32 256, 9
        %2560 = vbcast.lane.b32.xlu0 %v2229, %s2559
        %v2561 = vpop.permute.xlu0 %2560
        %s2563 = sor.u32 256, 1
        %2564 = vbcast.lane.b32.xlu0 %v2240, %s2563
        %v2565 = vpop.permute.xlu0 %2564
        %s2567 = sor.u32 256, 9
        %2568 = vbcast.lane.b32.xlu0 %v2240, %s2567
        %v2569 = vpop.permute.xlu0 %2568
        %s2571 = sor.u32 256, 1
        %2572 = vbcast.lane.b32.xlu0 %v2251, %s2571
        %v2573 = vpop.permute.xlu0 %2572
        %s2575 = sor.u32 256, 9
        %2576 = vbcast.lane.b32.xlu0 %v2251, %s2575
        %v2577 = vpop.permute.xlu0 %2576
        %s2579 = sor.u32 256, 1
        %2580 = vbcast.lane.b32.xlu0 %v2262, %s2579
        %v2581 = vpop.permute.xlu0 %2580
        %s2583 = sor.u32 256, 9
        %2584 = vbcast.lane.b32.xlu0 %v2262, %s2583
        %v2585 = vpop.permute.xlu0 %2584
        %s2587 = sor.u32 256, 1
        %2588 = vbcast.lane.b32.xlu0 %v2273, %s2587
        %v2589 = vpop.permute.xlu0 %2588
        %s2591 = sor.u32 256, 9
        %2592 = vbcast.lane.b32.xlu0 %v2273, %s2591
        %v2593 = vpop.permute.xlu0 %2592
        %s2595 = sor.u32 256, 1
        %2596 = vbcast.lane.b32.xlu0 %v2284, %s2595
        %v2597 = vpop.permute.xlu0 %2596
        %s2599 = sor.u32 256, 9
        %2600 = vbcast.lane.b32.xlu0 %v2284, %s2599
        %v2601 = vpop.permute.xlu0 %2600
        %s2603 = sor.u32 256, 1
        %2604 = vbcast.lane.b32.xlu0 %v2295, %s2603
        %v2605 = vpop.permute.xlu0 %2604
        %s2607 = sor.u32 256, 9
        %2608 = vbcast.lane.b32.xlu0 %v2295, %s2607
        %v2609 = vpop.permute.xlu0 %2608
        %s2611 = sor.u32 256, 1
        %2612 = vbcast.lane.b32.xlu0 %v2306, %s2611
        %v2613 = vpop.permute.xlu0 %2612
        %s2615 = sor.u32 256, 9
        %2616 = vbcast.lane.b32.xlu0 %v2306, %s2615
        %v2617 = vpop.permute.xlu0 %2616
        %s2619 = sor.u32 256, 1
        %2620 = vbcast.lane.b32.xlu0 %v2317, %s2619
        %v2621 = vpop.permute.xlu0 %2620
        %s2623 = sor.u32 256, 9
        %2624 = vbcast.lane.b32.xlu0 %v2317, %s2623
        %v2625 = vpop.permute.xlu0 %2624
        %s2627 = sor.u32 256, 1
        %2628 = vbcast.lane.b32.xlu0 %v2328, %s2627
        %v2629 = vpop.permute.xlu0 %2628
        %s2631 = sor.u32 256, 9
        %2632 = vbcast.lane.b32.xlu0 %v2328, %s2631
        %v2633 = vpop.permute.xlu0 %2632
        %s2635 = sor.u32 256, 1
        %2636 = vbcast.lane.b32.xlu0 %v2339, %s2635
        %v2637 = vpop.permute.xlu0 %2636
        %s2639 = sor.u32 256, 9
        %2640 = vbcast.lane.b32.xlu0 %v2339, %s2639
        %v2641 = vpop.permute.xlu0 %2640
        %s2643 = sor.u32 256, 1
        %2644 = vbcast.lane.b32.xlu0 %v2350, %s2643
        %v2645 = vpop.permute.xlu0 %2644
        %s2647 = sor.u32 256, 9
        %2648 = vbcast.lane.b32.xlu0 %v2350, %s2647
        %v2649 = vpop.permute.xlu0 %2648
        %s2651 = sor.u32 256, 1
        %2652 = vbcast.lane.b32.xlu0 %v2361, %s2651
        %v2653 = vpop.permute.xlu0 %2652
        %s2655 = sor.u32 256, 9
        %2656 = vbcast.lane.b32.xlu0 %v2361, %s2655
        %v2657 = vpop.permute.xlu0 %2656
        %s2659 = sor.u32 256, 1
        %2660 = vbcast.lane.b32.xlu0 %v2372, %s2659
        %v2661 = vpop.permute.xlu0 %2660
        %s2663 = sor.u32 256, 9
        %2664 = vbcast.lane.b32.xlu0 %v2372, %s2663
        %v2665 = vpop.permute.xlu0 %2664
        %s2667 = sor.u32 256, 1
        %2668 = vbcast.lane.b32.xlu0 %v2383, %s2667
        %v2669 = vpop.permute.xlu0 %2668
        %s2671 = sor.u32 256, 9
        %2672 = vbcast.lane.b32.xlu0 %v2383, %s2671
        %v2673 = vpop.permute.xlu0 %2672
        %s2675 = sor.u32 256, 1
        %2676 = vbcast.lane.b32.xlu0 %v2394, %s2675
        %v2677 = vpop.permute.xlu0 %2676
        %s2679 = sor.u32 256, 9
        %2680 = vbcast.lane.b32.xlu0 %v2394, %s2679
        %v2681 = vpop.permute.xlu0 %2680
        %s2683 = sor.u32 256, 1
        %2684 = vbcast.lane.b32.xlu0 %v2405, %s2683
        %v2685 = vpop.permute.xlu0 %2684
        %s2687 = sor.u32 256, 9
        %2688 = vbcast.lane.b32.xlu0 %v2405, %s2687
        %v2689 = vpop.permute.xlu0 %2688
        %s2691 = sor.u32 256, 1
        %2692 = vbcast.lane.b32.xlu0 %v2416, %s2691
        %v2693 = vpop.permute.xlu0 %2692
        %s2695 = sor.u32 256, 9
        %2696 = vbcast.lane.b32.xlu0 %v2416, %s2695
        %v2697 = vpop.permute.xlu0 %2696
        %s2699 = sor.u32 256, 1
        %2700 = vbcast.lane.b32.xlu0 %v2427, %s2699
        %v2701 = vpop.permute.xlu0 %2700
        %s2703 = sor.u32 256, 9
        %2704 = vbcast.lane.b32.xlu0 %v2427, %s2703
        %v2705 = vpop.permute.xlu0 %2704
        %s2707 = sor.u32 256, 1
        %2708 = vbcast.lane.b32.xlu0 %v2438, %s2707
        %v2709 = vpop.permute.xlu0 %2708
        %s2711 = sor.u32 256, 9
        %2712 = vbcast.lane.b32.xlu0 %v2438, %s2711
        %v2713 = vpop.permute.xlu0 %2712
        %s2715 = sor.u32 256, 1
        %2716 = vbcast.lane.b32.xlu0 %v2449, %s2715
        %v2717 = vpop.permute.xlu0 %2716
        %s2719 = sor.u32 256, 9
        %2720 = vbcast.lane.b32.xlu0 %v2449, %s2719
        %v2721 = vpop.permute.xlu0 %2720
        %s2723 = sor.u32 256, 1
        %2724 = vbcast.lane.b32.xlu0 %v2460, %s2723
        %v2725 = vpop.permute.xlu0 %2724
        %s2727 = sor.u32 256, 9
        %2728 = vbcast.lane.b32.xlu0 %v2460, %s2727
        %v2729 = vpop.permute.xlu0 %2728
        %s2731 = sor.u32 256, 1
        %2732 = vbcast.lane.b32.xlu0 %v2471, %s2731
        %v2733 = vpop.permute.xlu0 %2732
        %s2735 = sor.u32 256, 9
        %2736 = vbcast.lane.b32.xlu0 %v2471, %s2735
        %v2737 = vpop.permute.xlu0 %2736
        %s2739 = sor.u32 256, 1
        %2740 = vbcast.lane.b32.xlu0 %v2482, %s2739
        %v2741 = vpop.permute.xlu0 %2740
        %s2743 = sor.u32 256, 9
        %2744 = vbcast.lane.b32.xlu0 %v2482, %s2743
        %v2745 = vpop.permute.xlu0 %2744
        %s2747 = sor.u32 256, 2
        %2748 = vbcast.lane.b32.xlu0 %v2141, %s2747
        %v2749 = vpop.permute.xlu0 %2748
        %s2751 = sor.u32 256, 10
        %2752 = vbcast.lane.b32.xlu0 %v2141, %s2751
        %v2753 = vpop.permute.xlu0 %2752
        %s2755 = sor.u32 256, 2
        %2756 = vbcast.lane.b32.xlu0 %v2152, %s2755
        %v2757 = vpop.permute.xlu0 %2756
        %s2759 = sor.u32 256, 10
        %2760 = vbcast.lane.b32.xlu0 %v2152, %s2759
        %v2761 = vpop.permute.xlu0 %2760
        %s2763 = sor.u32 256, 2
        %2764 = vbcast.lane.b32.xlu0 %v2163, %s2763
        %v2765 = vpop.permute.xlu0 %2764
        %s2767 = sor.u32 256, 10
        %2768 = vbcast.lane.b32.xlu0 %v2163, %s2767
        %v2769 = vpop.permute.xlu0 %2768
        %s2771 = sor.u32 256, 2
        %2772 = vbcast.lane.b32.xlu0 %v2174, %s2771
        %v2773 = vpop.permute.xlu0 %2772
        %s2775 = sor.u32 256, 10
        %2776 = vbcast.lane.b32.xlu0 %v2174, %s2775
        %v2777 = vpop.permute.xlu0 %2776
        %s2779 = sor.u32 256, 2
        %2780 = vbcast.lane.b32.xlu0 %v2185, %s2779
        %v2781 = vpop.permute.xlu0 %2780
        %s2783 = sor.u32 256, 10
        %2784 = vbcast.lane.b32.xlu0 %v2185, %s2783
        %v2785 = vpop.permute.xlu0 %2784
        %s2787 = sor.u32 256, 2
        %2788 = vbcast.lane.b32.xlu0 %v2196, %s2787
        %v2789 = vpop.permute.xlu0 %2788
        %s2791 = sor.u32 256, 10
        %2792 = vbcast.lane.b32.xlu0 %v2196, %s2791
        %v2793 = vpop.permute.xlu0 %2792
        %s2795 = sor.u32 256, 2
        %2796 = vbcast.lane.b32.xlu0 %v2207, %s2795
        %v2797 = vpop.permute.xlu0 %2796
        %s2799 = sor.u32 256, 10
        %2800 = vbcast.lane.b32.xlu0 %v2207, %s2799
        %v2801 = vpop.permute.xlu0 %2800
        %s2803 = sor.u32 256, 2
        %2804 = vbcast.lane.b32.xlu0 %v2218, %s2803
        %v2805 = vpop.permute.xlu0 %2804
        %s2807 = sor.u32 256, 10
        %2808 = vbcast.lane.b32.xlu0 %v2218, %s2807
        %v2809 = vpop.permute.xlu0 %2808
        %s2811 = sor.u32 256, 2
        %2812 = vbcast.lane.b32.xlu0 %v2229, %s2811
        %v2813 = vpop.permute.xlu0 %2812
        %s2815 = sor.u32 256, 10
        %2816 = vbcast.lane.b32.xlu0 %v2229, %s2815
        %v2817 = vpop.permute.xlu0 %2816
        %s2819 = sor.u32 256, 2
        %2820 = vbcast.lane.b32.xlu0 %v2240, %s2819
        %v2821 = vpop.permute.xlu0 %2820
        %s2823 = sor.u32 256, 10
        %2824 = vbcast.lane.b32.xlu0 %v2240, %s2823
        %v2825 = vpop.permute.xlu0 %2824
        %s2827 = sor.u32 256, 2
        %2828 = vbcast.lane.b32.xlu0 %v2251, %s2827
        %v2829 = vpop.permute.xlu0 %2828
        %s2831 = sor.u32 256, 10
        %2832 = vbcast.lane.b32.xlu0 %v2251, %s2831
        %v2833 = vpop.permute.xlu0 %2832
        %s2835 = sor.u32 256, 2
        %2836 = vbcast.lane.b32.xlu0 %v2262, %s2835
        %v2837 = vpop.permute.xlu0 %2836
        %s2839 = sor.u32 256, 10
        %2840 = vbcast.lane.b32.xlu0 %v2262, %s2839
        %v2841 = vpop.permute.xlu0 %2840
        %s2843 = sor.u32 256, 2
        %2844 = vbcast.lane.b32.xlu0 %v2273, %s2843
        %v2845 = vpop.permute.xlu0 %2844
        %s2847 = sor.u32 256, 10
        %2848 = vbcast.lane.b32.xlu0 %v2273, %s2847
        %v2849 = vpop.permute.xlu0 %2848
        %s2851 = sor.u32 256, 2
        %2852 = vbcast.lane.b32.xlu0 %v2284, %s2851
        %v2853 = vpop.permute.xlu0 %2852
        %s2855 = sor.u32 256, 10
        %2856 = vbcast.lane.b32.xlu0 %v2284, %s2855
        %v2857 = vpop.permute.xlu0 %2856
        %s2859 = sor.u32 256, 2
        %2860 = vbcast.lane.b32.xlu0 %v2295, %s2859
        %v2861 = vpop.permute.xlu0 %2860
        %s2863 = sor.u32 256, 10
        %2864 = vbcast.lane.b32.xlu0 %v2295, %s2863
        %v2865 = vpop.permute.xlu0 %2864
        %s2867 = sor.u32 256, 2
        %2868 = vbcast.lane.b32.xlu0 %v2306, %s2867
        %v2869 = vpop.permute.xlu0 %2868
        %s2871 = sor.u32 256, 10
        %2872 = vbcast.lane.b32.xlu0 %v2306, %s2871
        %v2873 = vpop.permute.xlu0 %2872
        %s2875 = sor.u32 256, 2
        %2876 = vbcast.lane.b32.xlu0 %v2317, %s2875
        %v2877 = vpop.permute.xlu0 %2876
        %s2879 = sor.u32 256, 10
        %2880 = vbcast.lane.b32.xlu0 %v2317, %s2879
        %v2881 = vpop.permute.xlu0 %2880
        %s2883 = sor.u32 256, 2
        %2884 = vbcast.lane.b32.xlu0 %v2328, %s2883
        %v2885 = vpop.permute.xlu0 %2884
        %s2887 = sor.u32 256, 10
        %2888 = vbcast.lane.b32.xlu0 %v2328, %s2887
        %v2889 = vpop.permute.xlu0 %2888
        %s2891 = sor.u32 256, 2
        %2892 = vbcast.lane.b32.xlu0 %v2339, %s2891
        %v2893 = vpop.permute.xlu0 %2892
        %s2895 = sor.u32 256, 10
        %2896 = vbcast.lane.b32.xlu0 %v2339, %s2895
        %v2897 = vpop.permute.xlu0 %2896
        %s2899 = sor.u32 256, 2
        %2900 = vbcast.lane.b32.xlu0 %v2350, %s2899
        %v2901 = vpop.permute.xlu0 %2900
        %s2903 = sor.u32 256, 10
        %2904 = vbcast.lane.b32.xlu0 %v2350, %s2903
        %v2905 = vpop.permute.xlu0 %2904
        %s2907 = sor.u32 256, 2
        %2908 = vbcast.lane.b32.xlu0 %v2361, %s2907
        %v2909 = vpop.permute.xlu0 %2908
        %s2911 = sor.u32 256, 10
        %2912 = vbcast.lane.b32.xlu0 %v2361, %s2911
        %v2913 = vpop.permute.xlu0 %2912
        %s2915 = sor.u32 256, 2
        %2916 = vbcast.lane.b32.xlu0 %v2372, %s2915
        %v2917 = vpop.permute.xlu0 %2916
        %s2919 = sor.u32 256, 10
        %2920 = vbcast.lane.b32.xlu0 %v2372, %s2919
        %v2921 = vpop.permute.xlu0 %2920
        %s2923 = sor.u32 256, 2
        %2924 = vbcast.lane.b32.xlu0 %v2383, %s2923
        %v2925 = vpop.permute.xlu0 %2924
        %s2927 = sor.u32 256, 10
        %2928 = vbcast.lane.b32.xlu0 %v2383, %s2927
        %v2929 = vpop.permute.xlu0 %2928
        %s2931 = sor.u32 256, 2
        %2932 = vbcast.lane.b32.xlu0 %v2394, %s2931
        %v2933 = vpop.permute.xlu0 %2932
        %s2935 = sor.u32 256, 10
        %2936 = vbcast.lane.b32.xlu0 %v2394, %s2935
        %v2937 = vpop.permute.xlu0 %2936
        %s2939 = sor.u32 256, 2
        %2940 = vbcast.lane.b32.xlu0 %v2405, %s2939
        %v2941 = vpop.permute.xlu0 %2940
        %s2943 = sor.u32 256, 10
        %2944 = vbcast.lane.b32.xlu0 %v2405, %s2943
        %v2945 = vpop.permute.xlu0 %2944
        %s2947 = sor.u32 256, 2
        %2948 = vbcast.lane.b32.xlu0 %v2416, %s2947
        %v2949 = vpop.permute.xlu0 %2948
        %s2951 = sor.u32 256, 10
        %2952 = vbcast.lane.b32.xlu0 %v2416, %s2951
        %v2953 = vpop.permute.xlu0 %2952
        %s2955 = sor.u32 256, 2
        %2956 = vbcast.lane.b32.xlu0 %v2427, %s2955
        %v2957 = vpop.permute.xlu0 %2956
        %s2959 = sor.u32 256, 10
        %2960 = vbcast.lane.b32.xlu0 %v2427, %s2959
        %v2961 = vpop.permute.xlu0 %2960
        %s2963 = sor.u32 256, 2
        %2964 = vbcast.lane.b32.xlu0 %v2438, %s2963
        %v2965 = vpop.permute.xlu0 %2964
        %s2967 = sor.u32 256, 10
        %2968 = vbcast.lane.b32.xlu0 %v2438, %s2967
        %v2969 = vpop.permute.xlu0 %2968
        %s2971 = sor.u32 256, 2
        %2972 = vbcast.lane.b32.xlu0 %v2449, %s2971
        %v2973 = vpop.permute.xlu0 %2972
        %s2975 = sor.u32 256, 10
        %2976 = vbcast.lane.b32.xlu0 %v2449, %s2975
        %v2977 = vpop.permute.xlu0 %2976
        %s2979 = sor.u32 256, 2
        %2980 = vbcast.lane.b32.xlu0 %v2460, %s2979
        %v2981 = vpop.permute.xlu0 %2980
        %s2983 = sor.u32 256, 10
        %2984 = vbcast.lane.b32.xlu0 %v2460, %s2983
        %v2985 = vpop.permute.xlu0 %2984
        %s2987 = sor.u32 256, 2
        %2988 = vbcast.lane.b32.xlu0 %v2471, %s2987
        %v2989 = vpop.permute.xlu0 %2988
        %s2991 = sor.u32 256, 10
        %2992 = vbcast.lane.b32.xlu0 %v2471, %s2991
        %v2993 = vpop.permute.xlu0 %2992
        %s2995 = sor.u32 256, 2
        %2996 = vbcast.lane.b32.xlu0 %v2482, %s2995
        %v2997 = vpop.permute.xlu0 %2996
        %s2999 = sor.u32 256, 10
        %3000 = vbcast.lane.b32.xlu0 %v2482, %s2999
        %v3001 = vpop.permute.xlu0 %3000
        %v3002 = vsel %vm357, %v416, %v765
        %v3003 = vsel %vm357, %v420, %v769
        %v3004 = vsel %vm357, %v427, %v773
        %v3005 = vsel %vm357, %v431, %v777
        %v3006 = vsel %vm357, %v438, %v781
        %v3007 = vsel %vm357, %v442, %v785
        %v3008 = vsel %vm357, %v449, %v789
        %v3009 = vsel %vm357, %v453, %v793
        %v3010 = vsel %vm357, %v460, %v797
        %v3011 = vsel %vm357, %v464, %v801
        %v3012 = vsel %vm357, %v471, %v805
        %v3013 = vsel %vm357, %v475, %v809
        %v3014 = vsel %vm357, %v482, %v813
        %v3015 = vsel %vm357, %v486, %v817
        %v3016 = vsel %vm357, %v493, %v821
        %v3017 = vsel %vm357, %v497, %v825
        %v3018 = vsel %vm357, %v504, %v829
        %v3019 = vsel %vm357, %v508, %v833
        %v3020 = vsel %vm357, %v515, %v837
        %v3021 = vsel %vm357, %v519, %v841
        %v3022 = vsel %vm357, %v526, %v845
        %v3023 = vsel %vm357, %v530, %v849
        %v3024 = vsel %vm357, %v537, %v853
        %v3025 = vsel %vm357, %v541, %v857
        %v3026 = vsel %vm357, %v548, %v861
        %v3027 = vsel %vm357, %v552, %v865
        %v3028 = vsel %vm357, %v559, %v869
        %v3029 = vsel %vm357, %v563, %v873
        %v3030 = vsel %vm357, %v570, %v877
        %v3031 = vsel %vm357, %v574, %v881
        %v3032 = vsel %vm357, %v581, %v885
        %v3033 = vsel %vm357, %v585, %v889
        %v3034 = vsel %vm357, %v592, %v893
        %v3035 = vsel %vm357, %v596, %v897
        %v3036 = vsel %vm357, %v603, %v901
        %v3037 = vsel %vm357, %v607, %v905
        %v3038 = vsel %vm357, %v614, %v909
        %v3039 = vsel %vm357, %v618, %v913
        %v3040 = vsel %vm357, %v625, %v917
        %v3041 = vsel %vm357, %v629, %v921
        %v3042 = vsel %vm357, %v636, %v925
        %v3043 = vsel %vm357, %v640, %v929
        %v3044 = vsel %vm357, %v647, %v933
        %v3045 = vsel %vm357, %v651, %v937
        %v3046 = vsel %vm357, %v658, %v941
        %v3047 = vsel %vm357, %v662, %v945
        %v3048 = vsel %vm357, %v669, %v949
        %v3049 = vsel %vm357, %v673, %v953
        %v3050 = vsel %vm357, %v680, %v957
        %v3051 = vsel %vm357, %v684, %v961
        %v3052 = vsel %vm357, %v691, %v965
        %v3053 = vsel %vm357, %v695, %v969
        %v3054 = vsel %vm357, %v702, %v973
        %v3055 = vsel %vm357, %v706, %v977
        %v3056 = vsel %vm357, %v713, %v981
        %v3057 = vsel %vm357, %v717, %v985
        %v3058 = vsel %vm357, %v724, %v989
        %v3059 = vsel %vm357, %v728, %v993
        %v3060 = vsel %vm357, %v735, %v997
        %v3061 = vsel %vm357, %v739, %v1001
        %v3062 = vsel %vm357, %v746, %v1005
        %v3063 = vsel %vm357, %v750, %v1009
        %v3064 = vsel %vm357, %v757, %v1013
        %v3065 = vsel %vm357, %v761, %v1017
        %vm3066 = vcmask 15360
        %v3067 = vsel %vm3066, %v3002, %v1021
        %v3068 = vsel %vm3066, %v3003, %v1025
        %v3069 = vsel %vm3066, %v3004, %v1029
        %v3070 = vsel %vm3066, %v3005, %v1033
        %v3071 = vsel %vm3066, %v3006, %v1037
        %v3072 = vsel %vm3066, %v3007, %v1041
        %v3073 = vsel %vm3066, %v3008, %v1045
        %v3074 = vsel %vm3066, %v3009, %v1049
        %v3075 = vsel %vm3066, %v3010, %v1053
        %v3076 = vsel %vm3066, %v3011, %v1057
        %v3077 = vsel %vm3066, %v3012, %v1061
        %v3078 = vsel %vm3066, %v3013, %v1065
        %v3079 = vsel %vm3066, %v3014, %v1069
        %v3080 = vsel %vm3066, %v3015, %v1073
        %v3081 = vsel %vm3066, %v3016, %v1077
        %v3082 = vsel %vm3066, %v3017, %v1081
        %v3083 = vsel %vm3066, %v3018, %v1085
        %v3084 = vsel %vm3066, %v3019, %v1089
        %v3085 = vsel %vm3066, %v3020, %v1093
        %v3086 = vsel %vm3066, %v3021, %v1097
        %v3087 = vsel %vm3066, %v3022, %v1101
        %v3088 = vsel %vm3066, %v3023, %v1105
        %v3089 = vsel %vm3066, %v3024, %v1109
        %v3090 = vsel %vm3066, %v3025, %v1113
        %v3091 = vsel %vm3066, %v3026, %v1117
        %v3092 = vsel %vm3066, %v3027, %v1121
        %v3093 = vsel %vm3066, %v3028, %v1125
        %v3094 = vsel %vm3066, %v3029, %v1129
        %v3095 = vsel %vm3066, %v3030, %v1133
        %v3096 = vsel %vm3066, %v3031, %v1137
        %v3097 = vsel %vm3066, %v3032, %v1141
        %v3098 = vsel %vm3066, %v3033, %v1145
        %v3099 = vsel %vm3066, %v3034, %v1149
        %v3100 = vsel %vm3066, %v3035, %v1153
        %v3101 = vsel %vm3066, %v3036, %v1157
        %v3102 = vsel %vm3066, %v3037, %v1161
        %v3103 = vsel %vm3066, %v3038, %v1165
        %v3104 = vsel %vm3066, %v3039, %v1169
        %v3105 = vsel %vm3066, %v3040, %v1173
        %v3106 = vsel %vm3066, %v3041, %v1177
        %v3107 = vsel %vm3066, %v3042, %v1181
        %v3108 = vsel %vm3066, %v3043, %v1185
        %v3109 = vsel %vm3066, %v3044, %v1189
        %v3110 = vsel %vm3066, %v3045, %v1193
        %v3111 = vsel %vm3066, %v3046, %v1197
        %v3112 = vsel %vm3066, %v3047, %v1201
        %v3113 = vsel %vm3066, %v3048, %v1205
        %v3114 = vsel %vm3066, %v3049, %v1209
        %v3115 = vsel %vm3066, %v3050, %v1213
        %v3116 = vsel %vm3066, %v3051, %v1217
        %v3117 = vsel %vm3066, %v3052, %v1221
        %v3118 = vsel %vm3066, %v3053, %v1225
        %v3119 = vsel %vm3066, %v3054, %v1229
        %v3120 = vsel %vm3066, %v3055, %v1233
        %v3121 = vsel %vm3066, %v3056, %v1237
        %v3122 = vsel %vm3066, %v3057, %v1241
        %v3123 = vsel %vm3066, %v3058, %v1245
        %v3124 = vsel %vm3066, %v3059, %v1249
        %v3125 = vsel %vm3066, %v3060, %v1253
        %v3126 = vsel %vm3066, %v3061, %v1257
        %v3127 = vsel %vm3066, %v3062, %v1261
        %v3128 = vsel %vm3066, %v3063, %v1265
        %v3129 = vsel %vm3066, %v3064, %v1269
        %v3130 = vsel %vm3066, %v3065, %v1273
        %vm3131 = vcmask 23552
        %v3132 = vsel %vm3131, %v3067, %v1280
        %v3133 = vsel %vm3131, %v3068, %v1284
        %v3134 = vsel %vm3131, %v3069, %v1291
        %v3135 = vsel %vm3131, %v3070, %v1295
        %v3136 = vsel %vm3131, %v3071, %v1302
        %v3137 = vsel %vm3131, %v3072, %v1306
        %v3138 = vsel %vm3131, %v3073, %v1313
        %v3139 = vsel %vm3131, %v3074, %v1317
        %v3140 = vsel %vm3131, %v3075, %v1324
        %v3141 = vsel %vm3131, %v3076, %v1328
        %v3142 = vsel %vm3131, %v3077, %v1335
        %v3143 = vsel %vm3131, %v3078, %v1339
        %v3144 = vsel %vm3131, %v3079, %v1346
        %v3145 = vsel %vm3131, %v3080, %v1350
        %v3146 = vsel %vm3131, %v3081, %v1357
        %v3147 = vsel %vm3131, %v3082, %v1361
        %v3148 = vsel %vm3131, %v3083, %v1368
        %v3149 = vsel %vm3131, %v3084, %v1372
        %v3150 = vsel %vm3131, %v3085, %v1379
        %v3151 = vsel %vm3131, %v3086, %v1383
        %v3152 = vsel %vm3131, %v3087, %v1390
        %v3153 = vsel %vm3131, %v3088, %v1394
        %v3154 = vsel %vm3131, %v3089, %v1401
        %v3155 = vsel %vm3131, %v3090, %v1405
        %v3156 = vsel %vm3131, %v3091, %v1412
        %v3157 = vsel %vm3131, %v3092, %v1416
        %v3158 = vsel %vm3131, %v3093, %v1423
        %v3159 = vsel %vm3131, %v3094, %v1427
        %v3160 = vsel %vm3131, %v3095, %v1434
        %v3161 = vsel %vm3131, %v3096, %v1438
        %v3162 = vsel %vm3131, %v3097, %v1445
        %v3163 = vsel %vm3131, %v3098, %v1449
        %v3164 = vsel %vm3131, %v3099, %v1456
        %v3165 = vsel %vm3131, %v3100, %v1460
        %v3166 = vsel %vm3131, %v3101, %v1467
        %v3167 = vsel %vm3131, %v3102, %v1471
        %v3168 = vsel %vm3131, %v3103, %v1478
        %v3169 = vsel %vm3131, %v3104, %v1482
        %v3170 = vsel %vm3131, %v3105, %v1489
        %v3171 = vsel %vm3131, %v3106, %v1493
        %v3172 = vsel %vm3131, %v3107, %v1500
        %v3173 = vsel %vm3131, %v3108, %v1504
        %v3174 = vsel %vm3131, %v3109, %v1511
        %v3175 = vsel %vm3131, %v3110, %v1515
        %v3176 = vsel %vm3131, %v3111, %v1522
        %v3177 = vsel %vm3131, %v3112, %v1526
        %v3178 = vsel %vm3131, %v3113, %v1533
        %v3179 = vsel %vm3131, %v3114, %v1537
        %v3180 = vsel %vm3131, %v3115, %v1544
        %v3181 = vsel %vm3131, %v3116, %v1548
        %v3182 = vsel %vm3131, %v3117, %v1555
        %v3183 = vsel %vm3131, %v3118, %v1559
        %v3184 = vsel %vm3131, %v3119, %v1566
        %v3185 = vsel %vm3131, %v3120, %v1570
        %v3186 = vsel %vm3131, %v3121, %v1577
        %v3187 = vsel %vm3131, %v3122, %v1581
        %v3188 = vsel %vm3131, %v3123, %v1588
        %v3189 = vsel %vm3131, %v3124, %v1592
        %v3190 = vsel %vm3131, %v3125, %v1599
        %v3191 = vsel %vm3131, %v3126, %v1603
        %v3192 = vsel %vm3131, %v3127, %v1610
        %v3193 = vsel %vm3131, %v3128, %v1614
        %v3194 = vsel %vm3131, %v3129, %v1621
        %v3195 = vsel %vm3131, %v3130, %v1625
        %vm3196 = vcmask 31744
        %v3197 = vsel %vm3196, %v3132, %v1629
        %v3198 = vsel %vm3196, %v3133, %v1633
        %v3199 = vsel %vm3196, %v3134, %v1637
        %v3200 = vsel %vm3196, %v3135, %v1641
        %v3201 = vsel %vm3196, %v3136, %v1645
        %v3202 = vsel %vm3196, %v3137, %v1649
        %v3203 = vsel %vm3196, %v3138, %v1653
        %v3204 = vsel %vm3196, %v3139, %v1657
        %v3205 = vsel %vm3196, %v3140, %v1661
        %v3206 = vsel %vm3196, %v3141, %v1665
        %v3207 = vsel %vm3196, %v3142, %v1669
        %v3208 = vsel %vm3196, %v3143, %v1673
        %v3209 = vsel %vm3196, %v3144, %v1677
        %v3210 = vsel %vm3196, %v3145, %v1681
        %v3211 = vsel %vm3196, %v3146, %v1685
        %v3212 = vsel %vm3196, %v3147, %v1689
        %v3213 = vsel %vm3196, %v3148, %v1693
        %v3214 = vsel %vm3196, %v3149, %v1697
        %v3215 = vsel %vm3196, %v3150, %v1701
        %v3216 = vsel %vm3196, %v3151, %v1705
        %v3217 = vsel %vm3196, %v3152, %v1709
        %v3218 = vsel %vm3196, %v3153, %v1713
        %v3219 = vsel %vm3196, %v3154, %v1717
        %v3220 = vsel %vm3196, %v3155, %v1721
        %v3221 = vsel %vm3196, %v3156, %v1725
        %v3222 = vsel %vm3196, %v3157, %v1729
        %v3223 = vsel %vm3196, %v3158, %v1733
        %v3224 = vsel %vm3196, %v3159, %v1737
        %v3225 = vsel %vm3196, %v3160, %v1741
        %v3226 = vsel %vm3196, %v3161, %v1745
        %v3227 = vsel %vm3196, %v3162, %v1749
        %v3228 = vsel %vm3196, %v3163, %v1753
        %v3229 = vsel %vm3196, %v3164, %v1757
        %v3230 = vsel %vm3196, %v3165, %v1761
        %v3231 = vsel %vm3196, %v3166, %v1765
        %v3232 = vsel %vm3196, %v3167, %v1769
        %v3233 = vsel %vm3196, %v3168, %v1773
        %v3234 = vsel %vm3196, %v3169, %v1777
        %v3235 = vsel %vm3196, %v3170, %v1781
        %v3236 = vsel %vm3196, %v3171, %v1785
        %v3237 = vsel %vm3196, %v3172, %v1789
        %v3238 = vsel %vm3196, %v3173, %v1793
        %v3239 = vsel %vm3196, %v3174, %v1797
        %v3240 = vsel %vm3196, %v3175, %v1801
        %v3241 = vsel %vm3196, %v3176, %v1805
        %v3242 = vsel %vm3196, %v3177, %v1809
        %v3243 = vsel %vm3196, %v3178, %v1813
        %v3244 = vsel %vm3196, %v3179, %v1817
        %v3245 = vsel %vm3196, %v3180, %v1821
        %v3246 = vsel %vm3196, %v3181, %v1825
        %v3247 = vsel %vm3196, %v3182, %v1829
        %v3248 = vsel %vm3196, %v3183, %v1833
        %v3249 = vsel %vm3196, %v3184, %v1837
        %v3250 = vsel %vm3196, %v3185, %v1841
        %v3251 = vsel %vm3196, %v3186, %v1845
        %v3252 = vsel %vm3196, %v3187, %v1849
        %v3253 = vsel %vm3196, %v3188, %v1853
        %v3254 = vsel %vm3196, %v3189, %v1857
        %v3255 = vsel %vm3196, %v3190, %v1861
        %v3256 = vsel %vm3196, %v3191, %v1865
        %v3257 = vsel %vm3196, %v3192, %v1869
        %v3258 = vsel %vm3196, %v3193, %v1873
        %v3259 = vsel %vm3196, %v3194, %v1877
        %v3260 = vsel %vm3196, %v3195, %v1881
        %vm3261 = vcmask 39936
        %v3262 = vsel %vm3261, %v3197, %v1885
        %v3263 = vsel %vm3261, %v3198, %v1889
        %v3264 = vsel %vm3261, %v3199, %v1893
        %v3265 = vsel %vm3261, %v3200, %v1897
        %v3266 = vsel %vm3261, %v3201, %v1901
        %v3267 = vsel %vm3261, %v3202, %v1905
        %v3268 = vsel %vm3261, %v3203, %v1909
        %v3269 = vsel %vm3261, %v3204, %v1913
        %v3270 = vsel %vm3261, %v3205, %v1917
        %v3271 = vsel %vm3261, %v3206, %v1921
        %v3272 = vsel %vm3261, %v3207, %v1925
        %v3273 = vsel %vm3261, %v3208, %v1929
        %v3274 = vsel %vm3261, %v3209, %v1933
        %v3275 = vsel %vm3261, %v3210, %v1937
        %v3276 = vsel %vm3261, %v3211, %v1941
        %v3277 = vsel %vm3261, %v3212, %v1945
        %v3278 = vsel %vm3261, %v3213, %v1949
        %v3279 = vsel %vm3261, %v3214, %v1953
        %v3280 = vsel %vm3261, %v3215, %v1957
        %v3281 = vsel %vm3261, %v3216, %v1961
        %v3282 = vsel %vm3261, %v3217, %v1965
        %v3283 = vsel %vm3261, %v3218, %v1969
        %v3284 = vsel %vm3261, %v3219, %v1973
        %v3285 = vsel %vm3261, %v3220, %v1977
        %v3286 = vsel %vm3261, %v3221, %v1981
        %v3287 = vsel %vm3261, %v3222, %v1985
        %v3288 = vsel %vm3261, %v3223, %v1989
        %v3289 = vsel %vm3261, %v3224, %v1993
        %v3290 = vsel %vm3261, %v3225, %v1997
        %v3291 = vsel %vm3261, %v3226, %v2001
        %v3292 = vsel %vm3261, %v3227, %v2005
        %v3293 = vsel %vm3261, %v3228, %v2009
        %v3294 = vsel %vm3261, %v3229, %v2013
        %v3295 = vsel %vm3261, %v3230, %v2017
        %v3296 = vsel %vm3261, %v3231, %v2021
        %v3297 = vsel %vm3261, %v3232, %v2025
        %v3298 = vsel %vm3261, %v3233, %v2029
        %v3299 = vsel %vm3261, %v3234, %v2033
        %v3300 = vsel %vm3261, %v3235, %v2037
        %v3301 = vsel %vm3261, %v3236, %v2041
        %v3302 = vsel %vm3261, %v3237, %v2045
        %v3303 = vsel %vm3261, %v3238, %v2049
        %v3304 = vsel %vm3261, %v3239, %v2053
        %v3305 = vsel %vm3261, %v3240, %v2057
        %v3306 = vsel %vm3261, %v3241, %v2061
        %v3307 = vsel %vm3261, %v3242, %v2065
        %v3308 = vsel %vm3261, %v3243, %v2069
        %v3309 = vsel %vm3261, %v3244, %v2073
        %v3310 = vsel %vm3261, %v3245, %v2077
        %v3311 = vsel %vm3261, %v3246, %v2081
        %v3312 = vsel %vm3261, %v3247, %v2085
        %v3313 = vsel %vm3261, %v3248, %v2089
        %v3314 = vsel %vm3261, %v3249, %v2093
        %v3315 = vsel %vm3261, %v3250, %v2097
        %v3316 = vsel %vm3261, %v3251, %v2101
        %v3317 = vsel %vm3261, %v3252, %v2105
        %v3318 = vsel %vm3261, %v3253, %v2109
        %v3319 = vsel %vm3261, %v3254, %v2113
        %v3320 = vsel %vm3261, %v3255, %v2117
        %v3321 = vsel %vm3261, %v3256, %v2121
        %v3322 = vsel %vm3261, %v3257, %v2125
        %v3323 = vsel %vm3261, %v3258, %v2129
        %v3324 = vsel %vm3261, %v3259, %v2133
        %v3325 = vsel %vm3261, %v3260, %v2137
        %vm3326 = vcmask 48128
        %v3327 = vsel %vm3326, %v3262, %v2144
        %v3328 = vsel %vm3326, %v3263, %v2148
        %v3329 = vsel %vm3326, %v3264, %v2155
        %v3330 = vsel %vm3326, %v3265, %v2159
        %v3331 = vsel %vm3326, %v3266, %v2166
        %v3332 = vsel %vm3326, %v3267, %v2170
        %v3333 = vsel %vm3326, %v3268, %v2177
        %v3334 = vsel %vm3326, %v3269, %v2181
        %v3335 = vsel %vm3326, %v3270, %v2188
        %v3336 = vsel %vm3326, %v3271, %v2192
        %v3337 = vsel %vm3326, %v3272, %v2199
        %v3338 = vsel %vm3326, %v3273, %v2203
        %v3339 = vsel %vm3326, %v3274, %v2210
        %v3340 = vsel %vm3326, %v3275, %v2214
        %v3341 = vsel %vm3326, %v3276, %v2221
        %v3342 = vsel %vm3326, %v3277, %v2225
        %v3343 = vsel %vm3326, %v3278, %v2232
        %v3344 = vsel %vm3326, %v3279, %v2236
        %v3345 = vsel %vm3326, %v3280, %v2243
        %v3346 = vsel %vm3326, %v3281, %v2247
        %v3347 = vsel %vm3326, %v3282, %v2254
        %v3348 = vsel %vm3326, %v3283, %v2258
        %v3349 = vsel %vm3326, %v3284, %v2265
        %v3350 = vsel %vm3326, %v3285, %v2269
        %v3351 = vsel %vm3326, %v3286, %v2276
        %v3352 = vsel %vm3326, %v3287, %v2280
        %v3353 = vsel %vm3326, %v3288, %v2287
        %v3354 = vsel %vm3326, %v3289, %v2291
        %v3355 = vsel %vm3326, %v3290, %v2298
        %v3356 = vsel %vm3326, %v3291, %v2302
        %v3357 = vsel %vm3326, %v3292, %v2309
        %v3358 = vsel %vm3326, %v3293, %v2313
        %v3359 = vsel %vm3326, %v3294, %v2320
        %v3360 = vsel %vm3326, %v3295, %v2324
        %v3361 = vsel %vm3326, %v3296, %v2331
        %v3362 = vsel %vm3326, %v3297, %v2335
        %v3363 = vsel %vm3326, %v3298, %v2342
        %v3364 = vsel %vm3326, %v3299, %v2346
        %v3365 = vsel %vm3326, %v3300, %v2353
        %v3366 = vsel %vm3326, %v3301, %v2357
        %v3367 = vsel %vm3326, %v3302, %v2364
        %v3368 = vsel %vm3326, %v3303, %v2368
        %v3369 = vsel %vm3326, %v3304, %v2375
        %v3370 = vsel %vm3326, %v3305, %v2379
        %v3371 = vsel %vm3326, %v3306, %v2386
        %v3372 = vsel %vm3326, %v3307, %v2390
        %v3373 = vsel %vm3326, %v3308, %v2397
        %v3374 = vsel %vm3326, %v3309, %v2401
        %v3375 = vsel %vm3326, %v3310, %v2408
        %v3376 = vsel %vm3326, %v3311, %v2412
        %v3377 = vsel %vm3326, %v3312, %v2419
        %v3378 = vsel %vm3326, %v3313, %v2423
        %v3379 = vsel %vm3326, %v3314, %v2430
        %v3380 = vsel %vm3326, %v3315, %v2434
        %v3381 = vsel %vm3326, %v3316, %v2441
        %v3382 = vsel %vm3326, %v3317, %v2445
        %v3383 = vsel %vm3326, %v3318, %v2452
        %v3384 = vsel %vm3326, %v3319, %v2456
        %v3385 = vsel %vm3326, %v3320, %v2463
        %v3386 = vsel %vm3326, %v3321, %v2467
        %v3387 = vsel %vm3326, %v3322, %v2474
        %v3388 = vsel %vm3326, %v3323, %v2478
        %v3389 = vsel %vm3326, %v3324, %v2485
        %v3390 = vsel %vm3326, %v3325, %v2489
        %vm3391 = vcmask 56320
        %v3392 = vsel %vm3391, %v3327, %v2493
        %v3393 = vsel %vm3391, %v3328, %v2497
        %v3394 = vsel %vm3391, %v3329, %v2501
        %v3395 = vsel %vm3391, %v3330, %v2505
        %v3396 = vsel %vm3391, %v3331, %v2509
        %v3397 = vsel %vm3391, %v3332, %v2513
        %v3398 = vsel %vm3391, %v3333, %v2517
        %v3399 = vsel %vm3391, %v3334, %v2521
        %v3400 = vsel %vm3391, %v3335, %v2525
        %v3401 = vsel %vm3391, %v3336, %v2529
        %v3402 = vsel %vm3391, %v3337, %v2533
        %v3403 = vsel %vm3391, %v3338, %v2537
        %v3404 = vsel %vm3391, %v3339, %v2541
        %v3405 = vsel %vm3391, %v3340, %v2545
        %v3406 = vsel %vm3391, %v3341, %v2549
        %v3407 = vsel %vm3391, %v3342, %v2553
        %v3408 = vsel %vm3391, %v3343, %v2557
        %v3409 = vsel %vm3391, %v3344, %v2561
        %v3410 = vsel %vm3391, %v3345, %v2565
        %v3411 = vsel %vm3391, %v3346, %v2569
        %v3412 = vsel %vm3391, %v3347, %v2573
        %v3413 = vsel %vm3391, %v3348, %v2577
        %v3414 = vsel %vm3391, %v3349, %v2581
        %v3415 = vsel %vm3391, %v3350, %v2585
        %v3416 = vsel %vm3391, %v3351, %v2589
        %v3417 = vsel %vm3391, %v3352, %v2593
        %v3418 = vsel %vm3391, %v3353, %v2597
        %v3419 = vsel %vm3391, %v3354, %v2601
        %v3420 = vsel %vm3391, %v3355, %v2605
        %v3421 = vsel %vm3391, %v3356, %v2609
        %v3422 = vsel %vm3391, %v3357, %v2613
        %v3423 = vsel %vm3391, %v3358, %v2617
        %v3424 = vsel %vm3391, %v3359, %v2621
        %v3425 = vsel %vm3391, %v3360, %v2625
        %v3426 = vsel %vm3391, %v3361, %v2629
        %v3427 = vsel %vm3391, %v3362, %v2633
        %v3428 = vsel %vm3391, %v3363, %v2637
        %v3429 = vsel %vm3391, %v3364, %v2641
        %v3430 = vsel %vm3391, %v3365, %v2645
        %v3431 = vsel %vm3391, %v3366, %v2649
        %v3432 = vsel %vm3391, %v3367, %v2653
        %v3433 = vsel %vm3391, %v3368, %v2657
        %v3434 = vsel %vm3391, %v3369, %v2661
        %v3435 = vsel %vm3391, %v3370, %v2665
        %v3436 = vsel %vm3391, %v3371, %v2669
        %v3437 = vsel %vm3391, %v3372, %v2673
        %v3438 = vsel %vm3391, %v3373, %v2677
        %v3439 = vsel %vm3391, %v3374, %v2681
        %v3440 = vsel %vm3391, %v3375, %v2685
        %v3441 = vsel %vm3391, %v3376, %v2689
        %v3442 = vsel %vm3391, %v3377, %v2693
        %v3443 = vsel %vm3391, %v3378, %v2697
        %v3444 = vsel %vm3391, %v3379, %v2701
        %v3445 = vsel %vm3391, %v3380, %v2705
        %v3446 = vsel %vm3391, %v3381, %v2709
        %v3447 = vsel %vm3391, %v3382, %v2713
        %v3448 = vsel %vm3391, %v3383, %v2717
        %v3449 = vsel %vm3391, %v3384, %v2721
        %v3450 = vsel %vm3391, %v3385, %v2725
        %v3451 = vsel %vm3391, %v3386, %v2729
        %v3452 = vsel %vm3391, %v3387, %v2733
        %v3453 = vsel %vm3391, %v3388, %v2737
        %v3454 = vsel %vm3391, %v3389, %v2741
        %v3455 = vsel %vm3391, %v3390, %v2745
        %vm3456 = vcmask 64512
        %v3457 = vsel %vm3456, %v3392, %v2749
        %v3458 = vsel %vm3456, %v3393, %v2753
        %v3459 = vsel %vm3456, %v3394, %v2757
        %v3460 = vsel %vm3456, %v3395, %v2761
        %v3461 = vsel %vm3456, %v3396, %v2765
        %v3462 = vsel %vm3456, %v3397, %v2769
        %v3463 = vsel %vm3456, %v3398, %v2773
        %v3464 = vsel %vm3456, %v3399, %v2777
        %v3465 = vsel %vm3456, %v3400, %v2781
        %v3466 = vsel %vm3456, %v3401, %v2785
        %v3467 = vsel %vm3456, %v3402, %v2789
        %v3468 = vsel %vm3456, %v3403, %v2793
        %v3469 = vsel %vm3456, %v3404, %v2797
        %v3470 = vsel %vm3456, %v3405, %v2801
        %v3471 = vsel %vm3456, %v3406, %v2805
        %v3472 = vsel %vm3456, %v3407, %v2809
        %v3473 = vsel %vm3456, %v3408, %v2813
        %v3474 = vsel %vm3456, %v3409, %v2817
        %v3475 = vsel %vm3456, %v3410, %v2821
        %v3476 = vsel %vm3456, %v3411, %v2825
        %v3477 = vsel %vm3456, %v3412, %v2829
        %v3478 = vsel %vm3456, %v3413, %v2833
        %v3479 = vsel %vm3456, %v3414, %v2837
        %v3480 = vsel %vm3456, %v3415, %v2841
        %v3481 = vsel %vm3456, %v3416, %v2845
        %v3482 = vsel %vm3456, %v3417, %v2849
        %v3483 = vsel %vm3456, %v3418, %v2853
        %v3484 = vsel %vm3456, %v3419, %v2857
        %v3485 = vsel %vm3456, %v3420, %v2861
        %v3486 = vsel %vm3456, %v3421, %v2865
        %v3487 = vsel %vm3456, %v3422, %v2869
        %v3488 = vsel %vm3456, %v3423, %v2873
        %v3489 = vsel %vm3456, %v3424, %v2877
        %v3490 = vsel %vm3456, %v3425, %v2881
        %v3491 = vsel %vm3456, %v3426, %v2885
        %v3492 = vsel %vm3456, %v3427, %v2889
        %v3493 = vsel %vm3456, %v3428, %v2893
        %v3494 = vsel %vm3456, %v3429, %v2897
        %v3495 = vsel %vm3456, %v3430, %v2901
        %v3496 = vsel %vm3456, %v3431, %v2905
        %v3497 = vsel %vm3456, %v3432, %v2909
        %v3498 = vsel %vm3456, %v3433, %v2913
        %v3499 = vsel %vm3456, %v3434, %v2917
        %v3500 = vsel %vm3456, %v3435, %v2921
        %v3501 = vsel %vm3456, %v3436, %v2925
        %v3502 = vsel %vm3456, %v3437, %v2929
        %v3503 = vsel %vm3456, %v3438, %v2933
        %v3504 = vsel %vm3456, %v3439, %v2937
        %v3505 = vsel %vm3456, %v3440, %v2941
        %v3506 = vsel %vm3456, %v3441, %v2945
        %v3507 = vsel %vm3456, %v3442, %v2949
        %v3508 = vsel %vm3456, %v3443, %v2953
        %v3509 = vsel %vm3456, %v3444, %v2957
        %v3510 = vsel %vm3456, %v3445, %v2961
        %v3511 = vsel %vm3456, %v3446, %v2965
        %v3512 = vsel %vm3456, %v3447, %v2969
        %v3513 = vsel %vm3456, %v3448, %v2973
        %v3514 = vsel %vm3456, %v3449, %v2977
        %v3515 = vsel %vm3456, %v3450, %v2981
        %v3516 = vsel %vm3456, %v3451, %v2985
        %v3517 = vsel %vm3456, %v3452, %v2989
        %v3518 = vsel %vm3456, %v3453, %v2993
        %v3519 = vsel %vm3456, %v3454, %v2997
        %v3520 = vsel %vm3456, %v3455, %v3001
        %v3521 = vpack.c.bf16 %v3458, %v3457
        %v3522 = vpack.c.bf16 %v3460, %v3459
        %v3523 = vpack.c.bf16 %v3462, %v3461
        %v3524 = vpack.c.bf16 %v3464, %v3463
        %v3525 = vpack.c.bf16 %v3466, %v3465
        %v3526 = vpack.c.bf16 %v3468, %v3467
        %v3527 = vpack.c.bf16 %v3470, %v3469
        %v3528 = vpack.c.bf16 %v3472, %v3471
        %v3529 = vpack.c.bf16 %v3474, %v3473
        %v3530 = vpack.c.bf16 %v3476, %v3475
        %v3531 = vpack.c.bf16 %v3478, %v3477
        %v3532 = vpack.c.bf16 %v3480, %v3479
        %v3533 = vpack.c.bf16 %v3482, %v3481
        %v3534 = vpack.c.bf16 %v3484, %v3483
        %v3535 = vpack.c.bf16 %v3486, %v3485
        %v3536 = vpack.c.bf16 %v3488, %v3487
        %v3537 = vpack.c.bf16 %v3490, %v3489
        %v3538 = vpack.c.bf16 %v3492, %v3491
        %v3539 = vpack.c.bf16 %v3494, %v3493
        %v3540 = vpack.c.bf16 %v3496, %v3495
        %v3541 = vpack.c.bf16 %v3498, %v3497
        %v3542 = vpack.c.bf16 %v3500, %v3499
        %v3543 = vpack.c.bf16 %v3502, %v3501
        %v3544 = vpack.c.bf16 %v3504, %v3503
        %v3545 = vpack.c.bf16 %v3506, %v3505
        %v3546 = vpack.c.bf16 %v3508, %v3507
        %v3547 = vpack.c.bf16 %v3510, %v3509
        %v3548 = vpack.c.bf16 %v3512, %v3511
        %v3549 = vpack.c.bf16 %v3514, %v3513
        %v3550 = vpack.c.bf16 %v3516, %v3515
        %v3551 = vpack.c.bf16 %v3518, %v3517
        %v3552 = vpack.c.bf16 %v3520, %v3519
        %v3553 = vld [vmem:[%s1] sm:$0xf]
        %v3554 = vld [vmem:[%s1 + $0x4] sm:$0x1]
        %v3557 = vunpack.c.l.b16 %v3553
        %v3558 = vunpack.c.l.b16 %v3554
        %v3559 = vpack.c.b16 %v3558, %v3557
        %vm3560 = vcmask 72704
        %v3562 = vsel %vm3560, %v3521, 0
        %v3565 = vsel %vm3560, %v3522, 0
        %v3568 = vsel %vm3560, %v3523, 0
        %v3571 = vsel %vm3560, %v3524, 0
        %v3574 = vsel %vm3560, %v3525, 0
        %v3577 = vsel %vm3560, %v3526, 0
        %v3580 = vsel %vm3560, %v3527, 0
        %v3583 = vsel %vm3560, %v3528, 0
        %v3586 = vsel %vm3560, %v3529, 0
        %v3589 = vsel %vm3560, %v3530, 0
        %v3592 = vsel %vm3560, %v3531, 0
        %v3595 = vsel %vm3560, %v3532, 0
        %v3598 = vsel %vm3560, %v3533, 0
        %v3601 = vsel %vm3560, %v3534, 0
        %v3604 = vsel %vm3560, %v3535, 0
        %v3607 = vsel %vm3560, %v3536, 0
        %v3610 = vsel %vm3560, %v3537, 0
        %v3613 = vsel %vm3560, %v3538, 0
        %v3616 = vsel %vm3560, %v3539, 0
        %v3619 = vsel %vm3560, %v3540, 0
        %v3622 = vsel %vm3560, %v3541, 0
        %v3625 = vsel %vm3560, %v3542, 0
        %v3628 = vsel %vm3560, %v3543, 0
        %v3631 = vsel %vm3560, %v3544, 0
        %v3634 = vsel %vm3560, %v3545, 0
        %v3637 = vsel %vm3560, %v3546, 0
        %v3640 = vsel %vm3560, %v3547, 0
        %v3643 = vsel %vm3560, %v3548, 0
        %v3646 = vsel %vm3560, %v3549, 0
        %v3649 = vsel %vm3560, %v3550, 0
        %v3652 = vsel %vm3560, %v3551, 0
        %v3655 = vsel %vm3560, %v3552, 0
        %vm3657 = vcmask 1043456
        %vm3658 = vcmask 1044480
        %v3659 = vsel %vm3657, 4294967295, 65535
        %v3660 = vsel %vm3658, %v3659, 0
        %v3662 = vand.u32 %v3559, %v3660
        %3664 = vmatprep.subr.bf16.mxu0 0
        %3665 = vmatpush1.bf16.msra.mxu0 %v3662
        %3666 = vmatprep.subr.bf16.mxu0 0
        %3667 = vmatpush1.bf16.msra.mxu0 0
        %3668 = vmatprep.subr.bf16.mxu0 0
        %3669 = vmatpush1.bf16.msra.mxu0 0
        %3670 = vmatprep.subr.bf16.mxu0 0
        %3671 = vmatpush1.bf16.msra.mxu0 0
        %3672 = vmatprep.subr.bf16.mxu0 0
        %3673 = vmatpush1.bf16.msra.mxu0 0
        %3674 = vmatprep.subr.bf16.mxu0 0
        %3675 = vmatpush1.bf16.msra.mxu0 0
        %3676 = vmatprep.subr.bf16.mxu0 0
        %3677 = vmatpush1.bf16.msra.mxu0 0
        %3678 = vmatprep.subr.bf16.mxu0 0
        %3679 = vmatpush1.bf16.msra.mxu0 0
        %3680 = vmatprep.subr.bf16.mxu0 0
        %3681 = vmatpush1.bf16.msra.mxu0 0
        %3682 = vmatprep.subr.bf16.mxu0 0
        %3683 = vmatpush1.bf16.msra.mxu0 0
        %3684 = vmatprep.subr.bf16.mxu0 0
        %3685 = vmatpush1.bf16.msra.mxu0 0
        %3686 = vmatprep.subr.bf16.mxu0 0
        %3687 = vmatpush1.bf16.msra.mxu0 0
        %3688 = vmatprep.subr.bf16.mxu0 0
        %3689 = vmatpush1.bf16.msra.mxu0 0
        %3690 = vmatprep.subr.bf16.mxu0 0
        %3691 = vmatpush1.bf16.msra.mxu0 0
        %3692 = vmatprep.subr.bf16.mxu0 0
        %3693 = vmatpush1.bf16.msra.mxu0 0
        %3694 = vmatprep.subr.bf16.mxu0 0
        %3695 = vmatpush1.bf16.msra.mxu0 0
        %3696 = vmatprep.mubr.bf16.mxu0 0
        %3697 = vmatmul.mubr.bf16.gmra.mrb[0].mxu0 %v3562
        %v3698 = vpop.f32.mrb[0].mxu0
        %v3699 = vadd.f32 0.0, %v3698
        %v3700 = vpop.f32.mrb[0].mxu0
        %v3701 = vpop.f32.mrb[0].mxu0
        %v3702 = vadd.f32 0.0, %v3701
        %v3703 = vpop.f32.mrb[0].mxu0
        %3704 = vmatprep.mubr.bf16.mxu0 0
        %3705 = vmatmul.mubr.bf16.gmra.mrb[0].mxu0 %v3565
        %v3706 = vpop.f32.mrb[0].mxu0
        %v3707 = vadd.f32 0.0, %v3706
        %v3708 = vpop.f32.mrb[0].mxu0
        %v3709 = vpop.f32.mrb[0].mxu0
        %v3710 = vadd.f32 0.0, %v3709
        %v3711 = vpop.f32.mrb[0].mxu0
        %3712 = vmatprep.mubr.bf16.mxu0 0
        %3713 = vmatmul.mubr.bf16.gmra.mrb[0].mxu0 %v3568
        %v3714 = vpop.f32.mrb[0].mxu0
        %v3715 = vadd.f32 0.0, %v3714
        %v3716 = vpop.f32.mrb[0].mxu0
        %v3717 = vpop.f32.mrb[0].mxu0
        %v3718 = vadd.f32 0.0, %v3717
        %v3719 = vpop.f32.mrb[0].mxu0
        %3720 = vmatprep.mubr.bf16.mxu0 0
        %3721 = vmatmul.mubr.bf16.gmra.mrb[0].mxu0 %v3571
        %v3722 = vpop.f32.mrb[0].mxu0
        %v3723 = vadd.f32 0.0, %v3722
        %v3724 = vpop.f32.mrb[0].mxu0
        %v3725 = vpop.f32.mrb[0].mxu0
        %v3726 = vadd.f32 0.0, %v3725
        %v3727 = vpop.f32.mrb[0].mxu0
        %3728 = vmatprep.mubr.bf16.mxu0 0
        %3729 = vmatmul.mubr.bf16.gmra.mrb[0].mxu0 %v3574
        %v3730 = vpop.f32.mrb[0].mxu0
        %v3731 = vadd.f32 0.0, %v3730
        %v3732 = vpop.f32.mrb[0].mxu0
        %v3733 = vpop.f32.mrb[0].mxu0
        %v3734 = vadd.f32 0.0, %v3733
        %v3735 = vpop.f32.mrb[0].mxu0
        %3736 = vmatprep.mubr.bf16.mxu0 0
        %3737 = vmatmul.mubr.bf16.gmra.mrb[0].mxu0 %v3577
        %v3738 = vpop.f32.mrb[0].mxu0
        %v3739 = vadd.f32 0.0, %v3738
        %v3740 = vpop.f32.mrb[0].mxu0
        %v3741 = vpop.f32.mrb[0].mxu0
        %v3742 = vadd.f32 0.0, %v3741
        %v3743 = vpop.f32.mrb[0].mxu0
        %3744 = vmatprep.mubr.bf16.mxu0 0
        %3745 = vmatmul.mubr.bf16.gmra.mrb[0].mxu0 %v3580
        %v3746 = vpop.f32.mrb[0].mxu0
        %v3747 = vadd.f32 0.0, %v3746
        %v3748 = vpop.f32.mrb[0].mxu0
        %v3749 = vpop.f32.mrb[0].mxu0
        %v3750 = vadd.f32 0.0, %v3749
        %v3751 = vpop.f32.mrb[0].mxu0
        %3752 = vmatprep.mubr.bf16.mxu0 0
        %3753 = vmatmul.mubr.bf16.gmra.mrb[0].mxu0 %v3583
        %v3754 = vpop.f32.mrb[0].mxu0
        %v3755 = vadd.f32 0.0, %v3754
        %v3756 = vpop.f32.mrb[0].mxu0
        %v3757 = vpop.f32.mrb[0].mxu0
        %v3758 = vadd.f32 0.0, %v3757
        %v3759 = vpop.f32.mrb[0].mxu0
        %3760 = vmatprep.mubr.bf16.mxu0 0
        %3761 = vmatmul.mubr.bf16.gmra.mrb[0].mxu0 %v3586
        %v3762 = vpop.f32.mrb[0].mxu0
        %v3763 = vadd.f32 0.0, %v3762
        %v3764 = vpop.f32.mrb[0].mxu0
        %v3765 = vpop.f32.mrb[0].mxu0
        %v3766 = vadd.f32 0.0, %v3765
        %v3767 = vpop.f32.mrb[0].mxu0
        %3768 = vmatprep.mubr.bf16.mxu0 0
        %3769 = vmatmul.mubr.bf16.gmra.mrb[0].mxu0 %v3589
        %v3770 = vpop.f32.mrb[0].mxu0
        %v3771 = vadd.f32 0.0, %v3770
        %v3772 = vpop.f32.mrb[0].mxu0
        %v3773 = vpop.f32.mrb[0].mxu0
        %v3774 = vadd.f32 0.0, %v3773
        %v3775 = vpop.f32.mrb[0].mxu0
        %3776 = vmatprep.mubr.bf16.mxu0 0
        %3777 = vmatmul.mubr.bf16.gmra.mrb[0].mxu0 %v3592
        %v3778 = vpop.f32.mrb[0].mxu0
        %v3779 = vadd.f32 0.0, %v3778
        %v3780 = vpop.f32.mrb[0].mxu0
        %v3781 = vpop.f32.mrb[0].mxu0
        %v3782 = vadd.f32 0.0, %v3781
        %v3783 = vpop.f32.mrb[0].mxu0
        %3784 = vmatprep.mubr.bf16.mxu0 0
        %3785 = vmatmul.mubr.bf16.gmra.mrb[0].mxu0 %v3595
        %v3786 = vpop.f32.mrb[0].mxu0
        %v3787 = vadd.f32 0.0, %v3786
        %v3788 = vpop.f32.mrb[0].mxu0
        %v3789 = vpop.f32.mrb[0].mxu0
        %v3790 = vadd.f32 0.0, %v3789
        %v3791 = vpop.f32.mrb[0].mxu0
        %3792 = vmatprep.mubr.bf16.mxu0 0
        %3793 = vmatmul.mubr.bf16.gmra.mrb[0].mxu0 %v3598
        %v3794 = vpop.f32.mrb[0].mxu0
        %v3795 = vadd.f32 0.0, %v3794
        %v3796 = vpop.f32.mrb[0].mxu0
        %v3797 = vpop.f32.mrb[0].mxu0
        %v3798 = vadd.f32 0.0, %v3797
        %v3799 = vpop.f32.mrb[0].mxu0
        %3800 = vmatprep.mubr.bf16.mxu0 0
        %3801 = vmatmul.mubr.bf16.gmra.mrb[0].mxu0 %v3601
        %v3802 = vpop.f32.mrb[0].mxu0
        %v3803 = vadd.f32 0.0, %v3802
        %v3804 = vpop.f32.mrb[0].mxu0
        %v3805 = vpop.f32.mrb[0].mxu0
        %v3806 = vadd.f32 0.0, %v3805
        %v3807 = vpop.f32.mrb[0].mxu0
        %3808 = vmatprep.mubr.bf16.mxu0 0
        %3809 = vmatmul.mubr.bf16.gmra.mrb[0].mxu0 %v3604
        %v3810 = vpop.f32.mrb[0].mxu0
        %v3811 = vadd.f32 0.0, %v3810
        %v3812 = vpop.f32.mrb[0].mxu0
        %v3813 = vpop.f32.mrb[0].mxu0
        %v3814 = vadd.f32 0.0, %v3813
        %v3815 = vpop.f32.mrb[0].mxu0
        %3816 = vmatprep.mubr.bf16.mxu0 0
        %3817 = vmatmul.mubr.bf16.gmra.mrb[0].mxu0 %v3607
        %v3818 = vpop.f32.mrb[0].mxu0
        %v3819 = vadd.f32 0.0, %v3818
        %v3820 = vpop.f32.mrb[0].mxu0
        %v3821 = vpop.f32.mrb[0].mxu0
        %v3822 = vadd.f32 0.0, %v3821
        %v3823 = vpop.f32.mrb[0].mxu0
        %3824 = vmatprep.mubr.bf16.mxu0 0
        %3825 = vmatmul.mubr.bf16.gmra.mrb[0].mxu0 %v3610
        %v3826 = vpop.f32.mrb[0].mxu0
        %v3827 = vadd.f32 0.0, %v3826
        %v3828 = vpop.f32.mrb[0].mxu0
        %v3829 = vpop.f32.mrb[0].mxu0
        %v3830 = vadd.f32 0.0, %v3829
        %v3831 = vpop.f32.mrb[0].mxu0
        %3832 = vmatprep.mubr.bf16.mxu0 0
        %3833 = vmatmul.mubr.bf16.gmra.mrb[0].mxu0 %v3613
        %v3834 = vpop.f32.mrb[0].mxu0
        %v3835 = vadd.f32 0.0, %v3834
        %v3836 = vpop.f32.mrb[0].mxu0
        %v3837 = vpop.f32.mrb[0].mxu0
        %v3838 = vadd.f32 0.0, %v3837
        %v3839 = vpop.f32.mrb[0].mxu0
        %3840 = vmatprep.mubr.bf16.mxu0 0
        %3841 = vmatmul.mubr.bf16.gmra.mrb[0].mxu0 %v3616
        %v3842 = vpop.f32.mrb[0].mxu0
        %v3843 = vadd.f32 0.0, %v3842
        %v3844 = vpop.f32.mrb[0].mxu0
        %v3845 = vpop.f32.mrb[0].mxu0
        %v3846 = vadd.f32 0.0, %v3845
        %v3847 = vpop.f32.mrb[0].mxu0
        %3848 = vmatprep.mubr.bf16.mxu0 0
        %3849 = vmatmul.mubr.bf16.gmra.mrb[0].mxu0 %v3619
        %v3850 = vpop.f32.mrb[0].mxu0
        %v3851 = vadd.f32 0.0, %v3850
        %v3852 = vpop.f32.mrb[0].mxu0
        %v3853 = vpop.f32.mrb[0].mxu0
        %v3854 = vadd.f32 0.0, %v3853
        %v3855 = vpop.f32.mrb[0].mxu0
        %3856 = vmatprep.mubr.bf16.mxu0 0
        %3857 = vmatmul.mubr.bf16.gmra.mrb[0].mxu0 %v3622
        %v3858 = vpop.f32.mrb[0].mxu0
        %v3859 = vadd.f32 0.0, %v3858
        %v3860 = vpop.f32.mrb[0].mxu0
        %v3861 = vpop.f32.mrb[0].mxu0
        %v3862 = vadd.f32 0.0, %v3861
        %v3863 = vpop.f32.mrb[0].mxu0
        %3864 = vmatprep.mubr.bf16.mxu0 0
        %3865 = vmatmul.mubr.bf16.gmra.mrb[0].mxu0 %v3625
        %v3866 = vpop.f32.mrb[0].mxu0
        %v3867 = vadd.f32 0.0, %v3866
        %v3868 = vpop.f32.mrb[0].mxu0
        %v3869 = vpop.f32.mrb[0].mxu0
        %v3870 = vadd.f32 0.0, %v3869
        %v3871 = vpop.f32.mrb[0].mxu0
        %3872 = vmatprep.mubr.bf16.mxu0 0
        %3873 = vmatmul.mubr.bf16.gmra.mrb[0].mxu0 %v3628
        %v3874 = vpop.f32.mrb[0].mxu0
        %v3875 = vadd.f32 0.0, %v3874
        %v3876 = vpop.f32.mrb[0].mxu0
        %v3877 = vpop.f32.mrb[0].mxu0
        %v3878 = vadd.f32 0.0, %v3877
        %v3879 = vpop.f32.mrb[0].mxu0
        %3880 = vmatprep.mubr.bf16.mxu0 0
        %3881 = vmatmul.mubr.bf16.gmra.mrb[0].mxu0 %v3631
        %v3882 = vpop.f32.mrb[0].mxu0
        %v3883 = vadd.f32 0.0, %v3882
        %v3884 = vpop.f32.mrb[0].mxu0
        %v3885 = vpop.f32.mrb[0].mxu0
        %v3886 = vadd.f32 0.0, %v3885
        %v3887 = vpop.f32.mrb[0].mxu0
        %3888 = vmatprep.mubr.bf16.mxu0 0
        %3889 = vmatmul.mubr.bf16.gmra.mrb[0].mxu0 %v3634
        %v3890 = vpop.f32.mrb[0].mxu0
        %v3891 = vadd.f32 0.0, %v3890
        %v3892 = vpop.f32.mrb[0].mxu0
        %v3893 = vpop.f32.mrb[0].mxu0
        %v3894 = vadd.f32 0.0, %v3893
        %v3895 = vpop.f32.mrb[0].mxu0
        %3896 = vmatprep.mubr.bf16.mxu0 0
        %3897 = vmatmul.mubr.bf16.gmra.mrb[0].mxu0 %v3637
        %v3898 = vpop.f32.mrb[0].mxu0
        %v3899 = vadd.f32 0.0, %v3898
        %v3900 = vpop.f32.mrb[0].mxu0
        %v3901 = vpop.f32.mrb[0].mxu0
        %v3902 = vadd.f32 0.0, %v3901
        %v3903 = vpop.f32.mrb[0].mxu0
        %3904 = vmatprep.mubr.bf16.mxu0 0
        %3905 = vmatmul.mubr.bf16.gmra.mrb[0].mxu0 %v3640
        %v3906 = vpop.f32.mrb[0].mxu0
        %v3907 = vadd.f32 0.0, %v3906
        %v3908 = vpop.f32.mrb[0].mxu0
        %v3909 = vpop.f32.mrb[0].mxu0
        %v3910 = vadd.f32 0.0, %v3909
        %v3911 = vpop.f32.mrb[0].mxu0
        %3912 = vmatprep.mubr.bf16.mxu0 0
        %3913 = vmatmul.mubr.bf16.gmra.mrb[0].mxu0 %v3643
        %v3914 = vpop.f32.mrb[0].mxu0
        %v3915 = vadd.f32 0.0, %v3914
        %v3916 = vpop.f32.mrb[0].mxu0
        %v3917 = vpop.f32.mrb[0].mxu0
        %v3918 = vadd.f32 0.0, %v3917
        %v3919 = vpop.f32.mrb[0].mxu0
        %3920 = vmatprep.mubr.bf16.mxu0 0
        %3921 = vmatmul.mubr.bf16.gmra.mrb[0].mxu0 %v3646
        %v3922 = vpop.f32.mrb[0].mxu0
        %v3923 = vadd.f32 0.0, %v3922
        %v3924 = vpop.f32.mrb[0].mxu0
        %v3925 = vpop.f32.mrb[0].mxu0
        %v3926 = vadd.f32 0.0, %v3925
        %v3927 = vpop.f32.mrb[0].mxu0
        %3928 = vmatprep.mubr.bf16.mxu0 0
        %3929 = vmatmul.mubr.bf16.gmra.mrb[0].mxu0 %v3649
        %v3930 = vpop.f32.mrb[0].mxu0
        %v3931 = vadd.f32 0.0, %v3930
        %v3932 = vpop.f32.mrb[0].mxu0
        %v3933 = vpop.f32.mrb[0].mxu0
        %v3934 = vadd.f32 0.0, %v3933
        %v3935 = vpop.f32.mrb[0].mxu0
        %3936 = vmatprep.mubr.bf16.mxu0 0
        %3937 = vmatmul.mubr.bf16.gmra.mrb[0].mxu0 %v3652
        %v3938 = vpop.f32.mrb[0].mxu0
        %v3939 = vadd.f32 0.0, %v3938
        %v3940 = vpop.f32.mrb[0].mxu0
        %v3941 = vpop.f32.mrb[0].mxu0
        %v3942 = vadd.f32 0.0, %v3941
        %v3943 = vpop.f32.mrb[0].mxu0
        %3944 = vmatprep.mubr.bf16.mxu0 0
        %3945 = vmatmul.mubr.bf16.gmra.mrb[0].mxu0 %v3655
        %v3946 = vpop.f32.mrb[0].mxu0
        %v3947 = vadd.f32 0.0, %v3946
        %v3948 = vpop.f32.mrb[0].mxu0
        %v3949 = vpop.f32.mrb[0].mxu0
        %v3950 = vadd.f32 0.0, %v3949
        %v3951 = vpop.f32.mrb[0].mxu0
        %3952 = vdwg.mxu0
        %v3953 = vld [vmem:[%s2] sm:$0x1]
        %v3955 = vlaneseq
        %v3956 = vshrl.u32 %v3955, 7
        %v3957 = vsub.s32 0, %v3956
        %v3958 = vrot.slane %v3953, %v3957
        %v3960 = vmul.f32 %v3699, %v3958
        %v3961 = vmul.f32 %v3702, %v3958
        %v3962 = vmul.f32 %v3707, %v3958
        %v3963 = vmul.f32 %v3710, %v3958
        %v3964 = vmul.f32 %v3715, %v3958
        %v3965 = vmul.f32 %v3718, %v3958
        %v3966 = vmul.f32 %v3723, %v3958
        %v3967 = vmul.f32 %v3726, %v3958
        %v3968 = vmul.f32 %v3731, %v3958
        %v3969 = vmul.f32 %v3734, %v3958
        %v3970 = vmul.f32 %v3739, %v3958
        %v3971 = vmul.f32 %v3742, %v3958
        %v3972 = vmul.f32 %v3747, %v3958
        %v3973 = vmul.f32 %v3750, %v3958
        %v3974 = vmul.f32 %v3755, %v3958
        %v3975 = vmul.f32 %v3758, %v3958
        %v3976 = vmul.f32 %v3763, %v3958
        %v3977 = vmul.f32 %v3766, %v3958
        %v3978 = vmul.f32 %v3771, %v3958
        %v3979 = vmul.f32 %v3774, %v3958
        %v3980 = vmul.f32 %v3779, %v3958
        %v3981 = vmul.f32 %v3782, %v3958
        %v3982 = vmul.f32 %v3787, %v3958
        %v3983 = vmul.f32 %v3790, %v3958
        %v3984 = vmul.f32 %v3795, %v3958
        %v3985 = vmul.f32 %v3798, %v3958
        %v3986 = vmul.f32 %v3803, %v3958
        %v3987 = vmul.f32 %v3806, %v3958
        %v3988 = vmul.f32 %v3811, %v3958
        %v3989 = vmul.f32 %v3814, %v3958
        %v3990 = vmul.f32 %v3819, %v3958
        %v3991 = vmul.f32 %v3822, %v3958
        %v3992 = vmul.f32 %v3827, %v3958
        %v3993 = vmul.f32 %v3830, %v3958
        %v3994 = vmul.f32 %v3835, %v3958
        %v3995 = vmul.f32 %v3838, %v3958
        %v3996 = vmul.f32 %v3843, %v3958
        %v3997 = vmul.f32 %v3846, %v3958
        %v3998 = vmul.f32 %v3851, %v3958
        %v3999 = vmul.f32 %v3854, %v3958
        %v4000 = vmul.f32 %v3859, %v3958
        %v4001 = vmul.f32 %v3862, %v3958
        %v4002 = vmul.f32 %v3867, %v3958
        %v4003 = vmul.f32 %v3870, %v3958
        %v4004 = vmul.f32 %v3875, %v3958
        %v4005 = vmul.f32 %v3878, %v3958
        %v4006 = vmul.f32 %v3883, %v3958
        %v4007 = vmul.f32 %v3886, %v3958
        %v4008 = vmul.f32 %v3891, %v3958
        %v4009 = vmul.f32 %v3894, %v3958
        %v4010 = vmul.f32 %v3899, %v3958
        %v4011 = vmul.f32 %v3902, %v3958
        %v4012 = vmul.f32 %v3907, %v3958
        %v4013 = vmul.f32 %v3910, %v3958
        %v4014 = vmul.f32 %v3915, %v3958
        %v4015 = vmul.f32 %v3918, %v3958
        %v4016 = vmul.f32 %v3923, %v3958
        %v4017 = vmul.f32 %v3926, %v3958
        %v4018 = vmul.f32 %v3931, %v3958
        %v4019 = vmul.f32 %v3934, %v3958
        %v4020 = vmul.f32 %v3939, %v3958
        %v4021 = vmul.f32 %v3942, %v3958
        %v4022 = vmul.f32 %v3947, %v3958
        %v4023 = vmul.f32 %v3950, %v3958
        %v4024 = vld [vmem:[%s3] sm:$0x1]
        %v4026 = vlaneseq
        %v4027 = vshrl.u32 %v4026, 7
        %v4028 = vsub.s32 0, %v4027
        %v4029 = vrot.slane %v4024, %v4028
        %v4031 = vadd.f32 %v3960, %v4029
        %v4032 = vadd.f32 %v3961, %v4029
        %v4033 = vadd.f32 %v3962, %v4029
        %v4034 = vadd.f32 %v3963, %v4029
        %v4035 = vadd.f32 %v3964, %v4029
        %v4036 = vadd.f32 %v3965, %v4029
        %v4037 = vadd.f32 %v3966, %v4029
        %v4038 = vadd.f32 %v3967, %v4029
        %v4039 = vadd.f32 %v3968, %v4029
        %v4040 = vadd.f32 %v3969, %v4029
        %v4041 = vadd.f32 %v3970, %v4029
        %v4042 = vadd.f32 %v3971, %v4029
        %v4043 = vadd.f32 %v3972, %v4029
        %v4044 = vadd.f32 %v3973, %v4029
        %v4045 = vadd.f32 %v3974, %v4029
        %v4046 = vadd.f32 %v3975, %v4029
        %v4047 = vadd.f32 %v3976, %v4029
        %v4048 = vadd.f32 %v3977, %v4029
        %v4049 = vadd.f32 %v3978, %v4029
        %v4050 = vadd.f32 %v3979, %v4029
        %v4051 = vadd.f32 %v3980, %v4029
        %v4052 = vadd.f32 %v3981, %v4029
        %v4053 = vadd.f32 %v3982, %v4029
        %v4054 = vadd.f32 %v3983, %v4029
        %v4055 = vadd.f32 %v3984, %v4029
        %v4056 = vadd.f32 %v3985, %v4029
        %v4057 = vadd.f32 %v3986, %v4029
        %v4058 = vadd.f32 %v3987, %v4029
        %v4059 = vadd.f32 %v3988, %v4029
        %v4060 = vadd.f32 %v3989, %v4029
        %v4061 = vadd.f32 %v3990, %v4029
        %v4062 = vadd.f32 %v3991, %v4029
        %v4063 = vadd.f32 %v3992, %v4029
        %v4064 = vadd.f32 %v3993, %v4029
        %v4065 = vadd.f32 %v3994, %v4029
        %v4066 = vadd.f32 %v3995, %v4029
        %v4067 = vadd.f32 %v3996, %v4029
        %v4068 = vadd.f32 %v3997, %v4029
        %v4069 = vadd.f32 %v3998, %v4029
        %v4070 = vadd.f32 %v3999, %v4029
        %v4071 = vadd.f32 %v4000, %v4029
        %v4072 = vadd.f32 %v4001, %v4029
        %v4073 = vadd.f32 %v4002, %v4029
        %v4074 = vadd.f32 %v4003, %v4029
        %v4075 = vadd.f32 %v4004, %v4029
        %v4076 = vadd.f32 %v4005, %v4029
        %v4077 = vadd.f32 %v4006, %v4029
        %v4078 = vadd.f32 %v4007, %v4029
        %v4079 = vadd.f32 %v4008, %v4029
        %v4080 = vadd.f32 %v4009, %v4029
        %v4081 = vadd.f32 %v4010, %v4029
        %v4082 = vadd.f32 %v4011, %v4029
        %v4083 = vadd.f32 %v4012, %v4029
        %v4084 = vadd.f32 %v4013, %v4029
        %v4085 = vadd.f32 %v4014, %v4029
        %v4086 = vadd.f32 %v4015, %v4029
        %v4087 = vadd.f32 %v4016, %v4029
        %v4088 = vadd.f32 %v4017, %v4029
        %v4089 = vadd.f32 %v4018, %v4029
        %v4090 = vadd.f32 %v4019, %v4029
        %v4091 = vadd.f32 %v4020, %v4029
        %v4092 = vadd.f32 %v4021, %v4029
        %v4093 = vadd.f32 %v4022, %v4029
        %v4094 = vadd.f32 %v4023, %v4029
        %v4095 = vmax.f32 %v4031, 0.0
        %v4096 = vmax.f32 %v4032, 0.0
        %v4097 = vmax.f32 %v4033, 0.0
        %v4098 = vmax.f32 %v4034, 0.0
        %v4099 = vmax.f32 %v4035, 0.0
        %v4100 = vmax.f32 %v4036, 0.0
        %v4101 = vmax.f32 %v4037, 0.0
        %v4102 = vmax.f32 %v4038, 0.0
        %v4103 = vmax.f32 %v4039, 0.0
        %v4104 = vmax.f32 %v4040, 0.0
        %v4105 = vmax.f32 %v4041, 0.0
        %v4106 = vmax.f32 %v4042, 0.0
        %v4107 = vmax.f32 %v4043, 0.0
        %v4108 = vmax.f32 %v4044, 0.0
        %v4109 = vmax.f32 %v4045, 0.0
        %v4110 = vmax.f32 %v4046, 0.0
        %v4111 = vmax.f32 %v4047, 0.0
        %v4112 = vmax.f32 %v4048, 0.0
        %v4113 = vmax.f32 %v4049, 0.0
        %v4114 = vmax.f32 %v4050, 0.0
        %v4115 = vmax.f32 %v4051, 0.0
        %v4116 = vmax.f32 %v4052, 0.0
        %v4117 = vmax.f32 %v4053, 0.0
        %v4118 = vmax.f32 %v4054, 0.0
        %v4119 = vmax.f32 %v4055, 0.0
        %v4120 = vmax.f32 %v4056, 0.0
        %v4121 = vmax.f32 %v4057, 0.0
        %v4122 = vmax.f32 %v4058, 0.0
        %v4123 = vmax.f32 %v4059, 0.0
        %v4124 = vmax.f32 %v4060, 0.0
        %v4125 = vmax.f32 %v4061, 0.0
        %v4126 = vmax.f32 %v4062, 0.0
        %v4127 = vmax.f32 %v4063, 0.0
        %v4128 = vmax.f32 %v4064, 0.0
        %v4129 = vmax.f32 %v4065, 0.0
        %v4130 = vmax.f32 %v4066, 0.0
        %v4131 = vmax.f32 %v4067, 0.0
        %v4132 = vmax.f32 %v4068, 0.0
        %v4133 = vmax.f32 %v4069, 0.0
        %v4134 = vmax.f32 %v4070, 0.0
        %v4135 = vmax.f32 %v4071, 0.0
        %v4136 = vmax.f32 %v4072, 0.0
        %v4137 = vmax.f32 %v4073, 0.0
        %v4138 = vmax.f32 %v4074, 0.0
        %v4139 = vmax.f32 %v4075, 0.0
        %v4140 = vmax.f32 %v4076, 0.0
        %v4141 = vmax.f32 %v4077, 0.0
        %v4142 = vmax.f32 %v4078, 0.0
        %v4143 = vmax.f32 %v4079, 0.0
        %v4144 = vmax.f32 %v4080, 0.0
        %v4145 = vmax.f32 %v4081, 0.0
        %v4146 = vmax.f32 %v4082, 0.0
        %v4147 = vmax.f32 %v4083, 0.0
        %v4148 = vmax.f32 %v4084, 0.0
        %v4149 = vmax.f32 %v4085, 0.0
        %v4150 = vmax.f32 %v4086, 0.0
        %v4151 = vmax.f32 %v4087, 0.0
        %v4152 = vmax.f32 %v4088, 0.0
        %v4153 = vmax.f32 %v4089, 0.0
        %v4154 = vmax.f32 %v4090, 0.0
        %v4155 = vmax.f32 %v4091, 0.0
        %v4156 = vmax.f32 %v4092, 0.0
        %v4157 = vmax.f32 %v4093, 0.0
        %v4158 = vmax.f32 %v4094, 0.0
        %vm4159 = vcmask 523264
        %v4160 = vsel %vm4159, %v4095, -inf
        %v4161 = vsel %vm4159, %v4097, -inf
        %v4162 = vmax.f32 %v4160, %v4161
        %v4163 = vsel %vm4159, %v4096, -inf
        %v4164 = vsel %vm4159, %v4098, -inf
        %v4165 = vmax.f32 %v4163, %v4164
        %v4166 = vsel %vm4159, %v4099, -inf
        %v4167 = vsel %vm4159, %v4101, -inf
        %v4168 = vmax.f32 %v4166, %v4167
        %v4169 = vsel %vm4159, %v4100, -inf
        %v4170 = vsel %vm4159, %v4102, -inf
        %v4171 = vmax.f32 %v4169, %v4170
        %v4172 = vsel %vm4159, %v4103, -inf
        %v4173 = vsel %vm4159, %v4105, -inf
        %v4174 = vmax.f32 %v4172, %v4173
        %v4175 = vsel %vm4159, %v4104, -inf
        %v4176 = vsel %vm4159, %v4106, -inf
        %v4177 = vmax.f32 %v4175, %v4176
        %v4178 = vsel %vm4159, %v4107, -inf
        %v4179 = vsel %vm4159, %v4109, -inf
        %v4180 = vmax.f32 %v4178, %v4179
        %v4181 = vsel %vm4159, %v4108, -inf
        %v4182 = vsel %vm4159, %v4110, -inf
        %v4183 = vmax.f32 %v4181, %v4182
        %v4184 = vsel %vm4159, %v4111, -inf
        %v4185 = vsel %vm4159, %v4113, -inf
        %v4186 = vmax.f32 %v4184, %v4185
        %v4187 = vsel %vm4159, %v4112, -inf
        %v4188 = vsel %vm4159, %v4114, -inf
        %v4189 = vmax.f32 %v4187, %v4188
        %v4190 = vsel %vm4159, %v4115, -inf
        %v4191 = vsel %vm4159, %v4117, -inf
        %v4192 = vmax.f32 %v4190, %v4191
        %v4193 = vsel %vm4159, %v4116, -inf
        %v4194 = vsel %vm4159, %v4118, -inf
        %v4195 = vmax.f32 %v4193, %v4194
        %v4196 = vsel %vm4159, %v4119, -inf
        %v4197 = vsel %vm4159, %v4121, -inf
        %v4198 = vmax.f32 %v4196, %v4197
        %v4199 = vsel %vm4159, %v4120, -inf
        %v4200 = vsel %vm4159, %v4122, -inf
        %v4201 = vmax.f32 %v4199, %v4200
        %v4202 = vsel %vm4159, %v4123, -inf
        %v4203 = vsel %vm4159, %v4125, -inf
        %v4204 = vmax.f32 %v4202, %v4203
        %v4205 = vsel %vm4159, %v4124, -inf
        %v4206 = vsel %vm4159, %v4126, -inf
        %v4207 = vmax.f32 %v4205, %v4206
        %v4208 = vsel %vm4159, %v4127, -inf
        %v4209 = vsel %vm4159, %v4129, -inf
        %v4210 = vmax.f32 %v4208, %v4209
        %v4211 = vsel %vm4159, %v4128, -inf
        %v4212 = vsel %vm4159, %v4130, -inf
        %v4213 = vmax.f32 %v4211, %v4212
        %v4214 = vsel %vm4159, %v4131, -inf
        %v4215 = vsel %vm4159, %v4133, -inf
        %v4216 = vmax.f32 %v4214, %v4215
        %v4217 = vsel %vm4159, %v4132, -inf
        %v4218 = vsel %vm4159, %v4134, -inf
        %v4219 = vmax.f32 %v4217, %v4218
        %v4220 = vsel %vm4159, %v4135, -inf
        %v4221 = vsel %vm4159, %v4137, -inf
        %v4222 = vmax.f32 %v4220, %v4221
        %v4223 = vsel %vm4159, %v4136, -inf
        %v4224 = vsel %vm4159, %v4138, -inf
        %v4225 = vmax.f32 %v4223, %v4224
        %v4226 = vsel %vm4159, %v4139, -inf
        %v4227 = vsel %vm4159, %v4141, -inf
        %v4228 = vmax.f32 %v4226, %v4227
        %v4229 = vsel %vm4159, %v4140, -inf
        %v4230 = vsel %vm4159, %v4142, -inf
        %v4231 = vmax.f32 %v4229, %v4230
        %v4232 = vsel %vm4159, %v4143, -inf
        %v4233 = vsel %vm4159, %v4145, -inf
        %v4234 = vmax.f32 %v4232, %v4233
        %v4235 = vsel %vm4159, %v4144, -inf
        %v4236 = vsel %vm4159, %v4146, -inf
        %v4237 = vmax.f32 %v4235, %v4236
        %v4238 = vsel %vm4159, %v4147, -inf
        %v4239 = vsel %vm4159, %v4149, -inf
        %v4240 = vmax.f32 %v4238, %v4239
        %v4241 = vsel %vm4159, %v4148, -inf
        %v4242 = vsel %vm4159, %v4150, -inf
        %v4243 = vmax.f32 %v4241, %v4242
        %v4244 = vsel %vm4159, %v4151, -inf
        %v4245 = vsel %vm4159, %v4153, -inf
        %v4246 = vmax.f32 %v4244, %v4245
        %v4247 = vsel %vm4159, %v4152, -inf
        %v4248 = vsel %vm4159, %v4154, -inf
        %v4249 = vmax.f32 %v4247, %v4248
        %v4250 = vsel %vm4159, %v4155, -inf
        %v4251 = vsel %vm4159, %v4157, -inf
        %v4252 = vmax.f32 %v4250, %v4251
        %v4253 = vsel %vm4159, %v4156, -inf
        %v4254 = vsel %vm4159, %v4158, -inf
        %v4255 = vmax.f32 %v4253, %v4254
        %4256 = vst.msk [vmem:[#allocation4] sm:$0xff] %vm4159, %v4162
        %4257 = vst.msk [vmem:[#allocation4 + $0x8] sm:$0xff] %vm4159, %v4165
        %4258 = vst.msk [vmem:[#allocation4 + $0x10] sm:$0xff] %vm4159, %v4168
        %4259 = vst.msk [vmem:[#allocation4 + $0x18] sm:$0xff] %vm4159, %v4171
        %4260 = vst.msk [vmem:[#allocation4 + $0x20] sm:$0xff] %vm4159, %v4174
        %4261 = vst.msk [vmem:[#allocation4 + $0x28] sm:$0xff] %vm4159, %v4177
        %4262 = vst.msk [vmem:[#allocation4 + $0x30] sm:$0xff] %vm4159, %v4180
        %4263 = vst.msk [vmem:[#allocation4 + $0x38] sm:$0xff] %vm4159, %v4183
        %4264 = vst.msk [vmem:[#allocation4 + $0x40] sm:$0xff] %vm4159, %v4186
        %4265 = vst.msk [vmem:[#allocation4 + $0x48] sm:$0xff] %vm4159, %v4189
        %4266 = vst.msk [vmem:[#allocation4 + $0x50] sm:$0xff] %vm4159, %v4192
        %4267 = vst.msk [vmem:[#allocation4 + $0x58] sm:$0xff] %vm4159, %v4195
        %4268 = vst.msk [vmem:[#allocation4 + $0x60] sm:$0xff] %vm4159, %v4198
        %4269 = vst.msk [vmem:[#allocation4 + $0x68] sm:$0xff] %vm4159, %v4201
        %4270 = vst.msk [vmem:[#allocation4 + $0x70] sm:$0xff] %vm4159, %v4204
        %4271 = vst.msk [vmem:[#allocation4 + $0x78] sm:$0xff] %vm4159, %v4207
        %4272 = vst.msk [vmem:[#allocation4 + $0x80] sm:$0xff] %vm4159, %v4210
        %4273 = vst.msk [vmem:[#allocation4 + $0x88] sm:$0xff] %vm4159, %v4213
        %4274 = vst.msk [vmem:[#allocation4 + $0x90] sm:$0xff] %vm4159, %v4216
        %4275 = vst.msk [vmem:[#allocation4 + $0x98] sm:$0xff] %vm4159, %v4219
        %4276 = vst.msk [vmem:[#allocation4 + $0xa0] sm:$0xff] %vm4159, %v4222
        %4277 = vst.msk [vmem:[#allocation4 + $0xa8] sm:$0xff] %vm4159, %v4225
        %4278 = vst.msk [vmem:[#allocation4 + $0xb0] sm:$0xff] %vm4159, %v4228
        %4279 = vst.msk [vmem:[#allocation4 + $0xb8] sm:$0xff] %vm4159, %v4231
        %4280 = vst.msk [vmem:[#allocation4 + $0xc0] sm:$0xff] %vm4159, %v4234
        %4281 = vst.msk [vmem:[#allocation4 + $0xc8] sm:$0xff] %vm4159, %v4237
        %4282 = vst.msk [vmem:[#allocation4 + $0xd0] sm:$0xff] %vm4159, %v4240
        %4283 = vst.msk [vmem:[#allocation4 + $0xd8] sm:$0xff] %vm4159, %v4243
        %4284 = vst.msk [vmem:[#allocation4 + $0xe0] sm:$0xff] %vm4159, %v4246
        %4285 = vst.msk [vmem:[#allocation4 + $0xe8] sm:$0xff] %vm4159, %v4249
        %4286 = vst.msk [vmem:[#allocation4 + $0xf0] sm:$0xff] %vm4159, %v4252
        %4287 = vst.msk [vmem:[#allocation4 + $0xf8] sm:$0xff] %vm4159, %v4255
        %v4288 = vld [vmem:[#allocation4] ss:$2 sm:$0xff]
        %s4289 = scalar_lea.vmem [#allocation4], 16
        %v4290 = vld [vmem:[%s4289] ss:$2 sm:$0xff]
        %s4291 = scalar_lea.vmem [#allocation4], 32
        %v4292 = vld [vmem:[%s4291] ss:$2 sm:$0xff]
        %s4293 = scalar_lea.vmem [#allocation4], 48
        %v4294 = vld [vmem:[%s4293] ss:$2 sm:$0xff]
        %s4295 = scalar_lea.vmem [#allocation4], 64
        %v4296 = vld [vmem:[%s4295] ss:$2 sm:$0xff]
        %s4297 = scalar_lea.vmem [#allocation4], 80
        %v4298 = vld [vmem:[%s4297] ss:$2 sm:$0xff]
        %s4299 = scalar_lea.vmem [#allocation4], 96
        %v4300 = vld [vmem:[%s4299] ss:$2 sm:$0xff]
        %s4301 = scalar_lea.vmem [#allocation4], 112
        %v4302 = vld [vmem:[%s4301] ss:$2 sm:$0xff]
        %s4303 = scalar_lea.vmem [#allocation4], 128
        %v4304 = vld [vmem:[%s4303] ss:$2 sm:$0xff]
        %s4305 = scalar_lea.vmem [#allocation4], 144
        %v4306 = vld [vmem:[%s4305] ss:$2 sm:$0xff]
        %s4307 = scalar_lea.vmem [#allocation4], 160
        %v4308 = vld [vmem:[%s4307] ss:$2 sm:$0xff]
        %s4309 = scalar_lea.vmem [#allocation4], 176
        %v4310 = vld [vmem:[%s4309] ss:$2 sm:$0xff]
        %s4311 = scalar_lea.vmem [#allocation4], 192
        %v4312 = vld [vmem:[%s4311] ss:$2 sm:$0xff]
        %s4313 = scalar_lea.vmem [#allocation4], 208
        %v4314 = vld [vmem:[%s4313] ss:$2 sm:$0xff]
        %s4315 = scalar_lea.vmem [#allocation4], 224
        %v4316 = vld [vmem:[%s4315] ss:$2 sm:$0xff]
        %s4317 = scalar_lea.vmem [#allocation4], 240
        %v4318 = vld [vmem:[%s4317] ss:$2 sm:$0xff]
        %s4319 = scalar_lea.vmem [#allocation4], 1
        %v4320 = vld [vmem:[%s4319] ss:$2 sm:$0xff]
        %s4321 = scalar_lea.vmem [#allocation4], 17
        %v4322 = vld [vmem:[%s4321] ss:$2 sm:$0xff]
        %s4323 = scalar_lea.vmem [#allocation4], 33
        %v4324 = vld [vmem:[%s4323] ss:$2 sm:$0xff]
        %s4325 = scalar_lea.vmem [#allocation4], 49
        %v4326 = vld [vmem:[%s4325] ss:$2 sm:$0xff]
        %s4327 = scalar_lea.vmem [#allocation4], 65
        %v4328 = vld [vmem:[%s4327] ss:$2 sm:$0xff]
        %s4329 = scalar_lea.vmem [#allocation4], 81
        %v4330 = vld [vmem:[%s4329] ss:$2 sm:$0xff]
        %s4331 = scalar_lea.vmem [#allocation4], 97
        %v4332 = vld [vmem:[%s4331] ss:$2 sm:$0xff]
        %s4333 = scalar_lea.vmem [#allocation4], 113
        %v4334 = vld [vmem:[%s4333] ss:$2 sm:$0xff]
        %s4335 = scalar_lea.vmem [#allocation4], 129
        %v4336 = vld [vmem:[%s4335] ss:$2 sm:$0xff]
        %s4337 = scalar_lea.vmem [#allocation4], 145
        %v4338 = vld [vmem:[%s4337] ss:$2 sm:$0xff]
        %s4339 = scalar_lea.vmem [#allocation4], 161
        %v4340 = vld [vmem:[%s4339] ss:$2 sm:$0xff]
        %s4341 = scalar_lea.vmem [#allocation4], 177
        %v4342 = vld [vmem:[%s4341] ss:$2 sm:$0xff]
        %s4343 = scalar_lea.vmem [#allocation4], 193
        %v4344 = vld [vmem:[%s4343] ss:$2 sm:$0xff]
        %s4345 = scalar_lea.vmem [#allocation4], 209
        %v4346 = vld [vmem:[%s4345] ss:$2 sm:$0xff]
        %s4347 = scalar_lea.vmem [#allocation4], 225
        %v4348 = vld [vmem:[%s4347] ss:$2 sm:$0xff]
        %s4349 = scalar_lea.vmem [#allocation4], 241
        %v4350 = vld [vmem:[%s4349] ss:$2 sm:$0xff]
        %v4351 = vmax.f32 %v4288, %v4320
        %v4352 = vmax.f32 %v4290, %v4322
        %v4353 = vmax.f32 %v4292, %v4324
        %v4354 = vmax.f32 %v4294, %v4326
        %v4355 = vmax.f32 %v4296, %v4328
        %v4356 = vmax.f32 %v4298, %v4330
        %v4357 = vmax.f32 %v4300, %v4332
        %v4358 = vmax.f32 %v4302, %v4334
        %v4359 = vmax.f32 %v4304, %v4336
        %v4360 = vmax.f32 %v4306, %v4338
        %v4361 = vmax.f32 %v4308, %v4340
        %v4362 = vmax.f32 %v4310, %v4342
        %v4363 = vmax.f32 %v4312, %v4344
        %v4364 = vmax.f32 %v4314, %v4346
        %v4365 = vmax.f32 %v4316, %v4348
        %v4366 = vmax.f32 %v4318, %v4350
        %4367 = vst.msk [vmem:[#allocation3] sm:$0xff] %vm4159, 0.0
        %vm4368 = vcmask 517120
        %4369 = vst.msk [vmem:[#allocation3 + $0x8] sm:$0x3] %vm4368, 0.0
        %4370 = vst.msk [vmem:[#allocation3 + $0xa0] sm:$0xff] %vm4159, 0.0
        %4371 = vst.msk [vmem:[#allocation3 + $0xa8] sm:$0x3] %vm4368, 0.0
        %s4372 = scalar_lea.vmem [#allocation3], 144
        %4373 = vst.msk [vmem:[%s4372] sm:$0xff] %vm4159, 0.0
        %4374 = vst.msk [vmem:[%s4372 + $0x8] sm:$0x3] %vm4368, 0.0
        %4375 = vst.msk [vmem:[%s4372 + $0xa0] sm:$0xff] %vm4159, 0.0
        %4376 = vst.msk [vmem:[%s4372 + $0xa8] sm:$0x3] %vm4368, 0.0
        %vm4377 = vcmask 516096
        %4378 = vst.msk [vmem:[#allocation3] sm:$0x1] %vm4377, 0.0
        %4379 = vst.msk [vmem:[#allocation3 + $0x10] sm:$0x1] %vm4377, 0.0
        %4380 = vst.msk [vmem:[#allocation3 + $0x20] sm:$0x1] %vm4377, 0.0
        %4381 = vst.msk [vmem:[#allocation3 + $0x30] sm:$0x1] %vm4377, 0.0
        %4382 = vst.msk [vmem:[#allocation3 + $0x40] sm:$0x1] %vm4377, 0.0
        %4383 = vst.msk [vmem:[#allocation3 + $0x50] sm:$0x1] %vm4377, 0.0
        %4384 = vst.msk [vmem:[#allocation3 + $0x60] sm:$0x1] %vm4377, 0.0
        %4385 = vst.msk [vmem:[#allocation3 + $0x70] sm:$0x1] %vm4377, 0.0
        %4386 = vst.msk [vmem:[#allocation3 + $0x80] sm:$0x1] %vm4377, 0.0
        %4387 = vst.msk [vmem:[#allocation3 + $0x90] sm:$0x1] %vm4377, 0.0
        %4388 = vst.msk [vmem:[#allocation3 + $0xa0] sm:$0x1] %vm4377, 0.0
        %4389 = vst.msk [vmem:[#allocation3 + $0xb0] sm:$0x1] %vm4377, 0.0
        %4390 = vst.msk [vmem:[#allocation3 + $0xc0] sm:$0x1] %vm4377, 0.0
        %4391 = vst.msk [vmem:[#allocation3 + $0xd0] sm:$0x1] %vm4377, 0.0
        %4392 = vst.msk [vmem:[#allocation3 + $0xe0] sm:$0x1] %vm4377, 0.0
        %4393 = vst.msk [vmem:[#allocation3 + $0xf0] sm:$0x1] %vm4377, 0.0
        %4394 = vst.msk [vmem:[#allocation3 + $0x100] sm:$0x1] %vm4377, 0.0
        %4395 = vst.msk [vmem:[#allocation3 + $0x110] sm:$0x1] %vm4377, 0.0
        %4396 = vst.msk [vmem:[#allocation3 + $0x120] sm:$0x1] %vm4377, 0.0
        %4397 = vst.msk [vmem:[#allocation3 + $0x130] sm:$0x1] %vm4377, 0.0
        %4398 = vst.msk [vmem:[#allocation3 + $0x9] sm:$0x1] %vm4377, 0.0
        %4399 = vst.msk [vmem:[#allocation3 + $0x19] sm:$0x1] %vm4377, 0.0
        %4400 = vst.msk [vmem:[#allocation3 + $0x29] sm:$0x1] %vm4377, 0.0
        %4401 = vst.msk [vmem:[#allocation3 + $0x39] sm:$0x1] %vm4377, 0.0
        %4402 = vst.msk [vmem:[#allocation3 + $0x49] sm:$0x1] %vm4377, 0.0
        %4403 = vst.msk [vmem:[#allocation3 + $0x59] sm:$0x1] %vm4377, 0.0
        %4404 = vst.msk [vmem:[#allocation3 + $0x69] sm:$0x1] %vm4377, 0.0
        %4405 = vst.msk [vmem:[#allocation3 + $0x79] sm:$0x1] %vm4377, 0.0
        %4406 = vst.msk [vmem:[#allocation3 + $0x89] sm:$0x1] %vm4377, 0.0
        %4407 = vst.msk [vmem:[#allocation3 + $0x99] sm:$0x1] %vm4377, 0.0
        %4408 = vst.msk [vmem:[#allocation3 + $0xa9] sm:$0x1] %vm4377, 0.0
        %4409 = vst.msk [vmem:[#allocation3 + $0xb9] sm:$0x1] %vm4377, 0.0
        %4410 = vst.msk [vmem:[#allocation3 + $0xc9] sm:$0x1] %vm4377, 0.0
        %4411 = vst.msk [vmem:[#allocation3 + $0xd9] sm:$0x1] %vm4377, 0.0
        %4412 = vst.msk [vmem:[#allocation3 + $0xe9] sm:$0x1] %vm4377, 0.0
        %4413 = vst.msk [vmem:[#allocation3 + $0xf9] sm:$0x1] %vm4377, 0.0
        %4414 = vst.msk [vmem:[#allocation3 + $0x109] sm:$0x1] %vm4377, 0.0
        %4415 = vst.msk [vmem:[#allocation3 + $0x119] sm:$0x1] %vm4377, 0.0
        %4416 = vst.msk [vmem:[#allocation3 + $0x129] sm:$0x1] %vm4377, 0.0
        %4417 = vst.msk [vmem:[#allocation3 + $0x139] sm:$0x1] %vm4377, 0.0
        %s4418 = scalar_lea.vmem [#allocation3], 16
        %4419 = vst.msk [vmem:[%s4418 + $0x1] sm:$0xff] %vm4159, %v4351
        %4420 = vst.msk [vmem:[%s4418 + $0x11] sm:$0xff] %vm4159, %v4352
        %4421 = vst.msk [vmem:[%s4418 + $0x21] sm:$0xff] %vm4159, %v4353
        %4422 = vst.msk [vmem:[%s4418 + $0x31] sm:$0xff] %vm4159, %v4354
        %4423 = vst.msk [vmem:[%s4418 + $0x41] sm:$0xff] %vm4159, %v4355
        %4424 = vst.msk [vmem:[%s4418 + $0x51] sm:$0xff] %vm4159, %v4356
        %4425 = vst.msk [vmem:[%s4418 + $0x61] sm:$0xff] %vm4159, %v4357
        %4426 = vst.msk [vmem:[%s4418 + $0x71] sm:$0xff] %vm4159, %v4358
        %4427 = vst.msk [vmem:[%s4418 + $0xa1] sm:$0xff] %vm4159, %v4359
        %4428 = vst.msk [vmem:[%s4418 + $0xb1] sm:$0xff] %vm4159, %v4360
        %4429 = vst.msk [vmem:[%s4418 + $0xc1] sm:$0xff] %vm4159, %v4361
        %4430 = vst.msk [vmem:[%s4418 + $0xd1] sm:$0xff] %vm4159, %v4362
        %4431 = vst.msk [vmem:[%s4418 + $0xe1] sm:$0xff] %vm4159, %v4363
        %4432 = vst.msk [vmem:[%s4418 + $0xf1] sm:$0xff] %vm4159, %v4364
        %4433 = vst.msk [vmem:[%s4418 + $0x101] sm:$0xff] %vm4159, %v4365
        %4434 = vst.msk [vmem:[%s4418 + $0x111] sm:$0xff] %vm4159, %v4366
        %v4435 = vld [vmem:[#allocation3] sm:$0xff]
        %v4436 = vld [vmem:[#allocation3 + $0x10] sm:$0xff]
        %v4437 = vld [vmem:[#allocation3 + $0x20] sm:$0xff]
        %v4438 = vld [vmem:[#allocation3 + $0x30] sm:$0xff]
        %v4439 = vld [vmem:[#allocation3 + $0x40] sm:$0xff]
        %v4440 = vld [vmem:[#allocation3 + $0x50] sm:$0xff]
        %v4441 = vld [vmem:[#allocation3 + $0x60] sm:$0xff]
        %v4442 = vld [vmem:[#allocation3 + $0x70] sm:$0xff]
        %v4443 = vld [vmem:[#allocation3 + $0xa0] sm:$0xff]
        %v4444 = vld [vmem:[#allocation3 + $0xb0] sm:$0xff]
        %v4445 = vld [vmem:[#allocation3 + $0xc0] sm:$0xff]
        %v4446 = vld [vmem:[#allocation3 + $0xd0] sm:$0xff]
        %v4447 = vld [vmem:[#allocation3 + $0xe0] sm:$0xff]
        %v4448 = vld [vmem:[#allocation3 + $0xf0] sm:$0xff]
        %v4449 = vld [vmem:[#allocation3 + $0x100] sm:$0xff]
        %v4450 = vld [vmem:[#allocation3 + $0x110] sm:$0xff]
        %v4451 = vld [vmem:[#allocation3 + $0x1] sm:$0xff]
        %v4452 = vld [vmem:[#allocation3 + $0x11] sm:$0xff]
        %v4453 = vld [vmem:[#allocation3 + $0x21] sm:$0xff]
        %v4454 = vld [vmem:[#allocation3 + $0x31] sm:$0xff]
        %v4455 = vld [vmem:[#allocation3 + $0x41] sm:$0xff]
        %v4456 = vld [vmem:[#allocation3 + $0x51] sm:$0xff]
        %v4457 = vld [vmem:[#allocation3 + $0x61] sm:$0xff]
        %v4458 = vld [vmem:[#allocation3 + $0x71] sm:$0xff]
        %v4459 = vld [vmem:[#allocation3 + $0xa1] sm:$0xff]
        %v4460 = vld [vmem:[#allocation3 + $0xb1] sm:$0xff]
        %v4461 = vld [vmem:[#allocation3 + $0xc1] sm:$0xff]
        %v4462 = vld [vmem:[#allocation3 + $0xd1] sm:$0xff]
        %v4463 = vld [vmem:[#allocation3 + $0xe1] sm:$0xff]
        %v4464 = vld [vmem:[#allocation3 + $0xf1] sm:$0xff]
        %v4465 = vld [vmem:[#allocation3 + $0x101] sm:$0xff]
        %v4466 = vld [vmem:[#allocation3 + $0x111] sm:$0xff]
        %v4467 = vld [vmem:[#allocation3 + $0x2] sm:$0xff]
        %v4468 = vld [vmem:[#allocation3 + $0x12] sm:$0xff]
        %v4469 = vld [vmem:[#allocation3 + $0x22] sm:$0xff]
        %v4470 = vld [vmem:[#allocation3 + $0x32] sm:$0xff]
        %v4471 = vld [vmem:[#allocation3 + $0x42] sm:$0xff]
        %v4472 = vld [vmem:[#allocation3 + $0x52] sm:$0xff]
        %v4473 = vld [vmem:[#allocation3 + $0x62] sm:$0xff]
        %v4474 = vld [vmem:[#allocation3 + $0x72] sm:$0xff]
        %v4475 = vld [vmem:[#allocation3 + $0xa2] sm:$0xff]
        %v4476 = vld [vmem:[#allocation3 + $0xb2] sm:$0xff]
        %v4477 = vld [vmem:[#allocation3 + $0xc2] sm:$0xff]
        %v4478 = vld [vmem:[#allocation3 + $0xd2] sm:$0xff]
        %v4479 = vld [vmem:[#allocation3 + $0xe2] sm:$0xff]
        %v4480 = vld [vmem:[#allocation3 + $0xf2] sm:$0xff]
        %v4481 = vld [vmem:[#allocation3 + $0x102] sm:$0xff]
        %v4482 = vld [vmem:[#allocation3 + $0x112] sm:$0xff]
        %v4483 = vld [vmem:[%s4418] sm:$0xff]
        %v4484 = vld [vmem:[%s4418 + $0x10] sm:$0xff]
        %v4485 = vld [vmem:[%s4418 + $0x20] sm:$0xff]
        %v4486 = vld [vmem:[%s4418 + $0x30] sm:$0xff]
        %v4487 = vld [vmem:[%s4418 + $0x40] sm:$0xff]
        %v4488 = vld [vmem:[%s4418 + $0x50] sm:$0xff]
        %v4489 = vld [vmem:[%s4418 + $0x60] sm:$0xff]
        %v4490 = vld [vmem:[%s4418 + $0x70] sm:$0xff]
        %v4491 = vld [vmem:[%s4418 + $0xa0] sm:$0xff]
        %v4492 = vld [vmem:[%s4418 + $0xb0] sm:$0xff]
        %v4493 = vld [vmem:[%s4418 + $0xc0] sm:$0xff]
        %v4494 = vld [vmem:[%s4418 + $0xd0] sm:$0xff]
        %v4495 = vld [vmem:[%s4418 + $0xe0] sm:$0xff]
        %v4496 = vld [vmem:[%s4418 + $0xf0] sm:$0xff]
        %v4497 = vld [vmem:[%s4418 + $0x100] sm:$0xff]
        %v4498 = vld [vmem:[%s4418 + $0x110] sm:$0xff]
        %v4499 = vld [vmem:[%s4418 + $0x1] sm:$0xff]
        %v4500 = vld [vmem:[%s4418 + $0x11] sm:$0xff]
        %v4501 = vld [vmem:[%s4418 + $0x21] sm:$0xff]
        %v4502 = vld [vmem:[%s4418 + $0x31] sm:$0xff]
        %v4503 = vld [vmem:[%s4418 + $0x41] sm:$0xff]
        %v4504 = vld [vmem:[%s4418 + $0x51] sm:$0xff]
        %v4505 = vld [vmem:[%s4418 + $0x61] sm:$0xff]
        %v4506 = vld [vmem:[%s4418 + $0x71] sm:$0xff]
        %v4507 = vld [vmem:[%s4418 + $0xa1] sm:$0xff]
        %v4508 = vld [vmem:[%s4418 + $0xb1] sm:$0xff]
        %v4509 = vld [vmem:[%s4418 + $0xc1] sm:$0xff]
        %v4510 = vld [vmem:[%s4418 + $0xd1] sm:$0xff]
        %v4511 = vld [vmem:[%s4418 + $0xe1] sm:$0xff]
        %v4512 = vld [vmem:[%s4418 + $0xf1] sm:$0xff]
        %v4513 = vld [vmem:[%s4418 + $0x101] sm:$0xff]
        %v4514 = vld [vmem:[%s4418 + $0x111] sm:$0xff]
        %v4515 = vld [vmem:[%s4418 + $0x2] sm:$0xff]
        %v4516 = vld [vmem:[%s4418 + $0x12] sm:$0xff]
        %v4517 = vld [vmem:[%s4418 + $0x22] sm:$0xff]
        %v4518 = vld [vmem:[%s4418 + $0x32] sm:$0xff]
        %v4519 = vld [vmem:[%s4418 + $0x42] sm:$0xff]
        %v4520 = vld [vmem:[%s4418 + $0x52] sm:$0xff]
        %v4521 = vld [vmem:[%s4418 + $0x62] sm:$0xff]
        %v4522 = vld [vmem:[%s4418 + $0x72] sm:$0xff]
        %v4523 = vld [vmem:[%s4418 + $0xa2] sm:$0xff]
        %v4524 = vld [vmem:[%s4418 + $0xb2] sm:$0xff]
        %v4525 = vld [vmem:[%s4418 + $0xc2] sm:$0xff]
        %v4526 = vld [vmem:[%s4418 + $0xd2] sm:$0xff]
        %v4527 = vld [vmem:[%s4418 + $0xe2] sm:$0xff]
        %v4528 = vld [vmem:[%s4418 + $0xf2] sm:$0xff]
        %v4529 = vld [vmem:[%s4418 + $0x102] sm:$0xff]
        %v4530 = vld [vmem:[%s4418 + $0x112] sm:$0xff]
        %s4531 = scalar_lea.vmem [#allocation3], 32
        %v4532 = vld [vmem:[%s4531] sm:$0xff]
        %v4533 = vld [vmem:[%s4531 + $0x10] sm:$0xff]
        %v4534 = vld [vmem:[%s4531 + $0x20] sm:$0xff]
        %v4535 = vld [vmem:[%s4531 + $0x30] sm:$0xff]
        %v4536 = vld [vmem:[%s4531 + $0x40] sm:$0xff]
        %v4537 = vld [vmem:[%s4531 + $0x50] sm:$0xff]
        %v4538 = vld [vmem:[%s4531 + $0x60] sm:$0xff]
        %v4539 = vld [vmem:[%s4531 + $0x70] sm:$0xff]
        %v4540 = vld [vmem:[%s4531 + $0xa0] sm:$0xff]
        %v4541 = vld [vmem:[%s4531 + $0xb0] sm:$0xff]
        %v4542 = vld [vmem:[%s4531 + $0xc0] sm:$0xff]
        %v4543 = vld [vmem:[%s4531 + $0xd0] sm:$0xff]
        %v4544 = vld [vmem:[%s4531 + $0xe0] sm:$0xff]
        %v4545 = vld [vmem:[%s4531 + $0xf0] sm:$0xff]
        %v4546 = vld [vmem:[%s4531 + $0x100] sm:$0xff]
        %v4547 = vld [vmem:[%s4531 + $0x110] sm:$0xff]
        %v4548 = vld [vmem:[%s4531 + $0x1] sm:$0xff]
        %v4549 = vld [vmem:[%s4531 + $0x11] sm:$0xff]
        %v4550 = vld [vmem:[%s4531 + $0x21] sm:$0xff]
        %v4551 = vld [vmem:[%s4531 + $0x31] sm:$0xff]
        %v4552 = vld [vmem:[%s4531 + $0x41] sm:$0xff]
        %v4553 = vld [vmem:[%s4531 + $0x51] sm:$0xff]
        %v4554 = vld [vmem:[%s4531 + $0x61] sm:$0xff]
        %v4555 = vld [vmem:[%s4531 + $0x71] sm:$0xff]
        %v4556 = vld [vmem:[%s4531 + $0xa1] sm:$0xff]
        %v4557 = vld [vmem:[%s4531 + $0xb1] sm:$0xff]
        %v4558 = vld [vmem:[%s4531 + $0xc1] sm:$0xff]
        %v4559 = vld [vmem:[%s4531 + $0xd1] sm:$0xff]
        %v4560 = vld [vmem:[%s4531 + $0xe1] sm:$0xff]
        %v4561 = vld [vmem:[%s4531 + $0xf1] sm:$0xff]
        %v4562 = vld [vmem:[%s4531 + $0x101] sm:$0xff]
        %v4563 = vld [vmem:[%s4531 + $0x111] sm:$0xff]
        %v4564 = vld [vmem:[%s4531 + $0x2] sm:$0xff]
        %v4565 = vld [vmem:[%s4531 + $0x12] sm:$0xff]
        %v4566 = vld [vmem:[%s4531 + $0x22] sm:$0xff]
        %v4567 = vld [vmem:[%s4531 + $0x32] sm:$0xff]
        %v4568 = vld [vmem:[%s4531 + $0x42] sm:$0xff]
        %v4569 = vld [vmem:[%s4531 + $0x52] sm:$0xff]
        %v4570 = vld [vmem:[%s4531 + $0x62] sm:$0xff]
        %v4571 = vld [vmem:[%s4531 + $0x72] sm:$0xff]
        %v4572 = vld [vmem:[%s4531 + $0xa2] sm:$0xff]
        %v4573 = vld [vmem:[%s4531 + $0xb2] sm:$0xff]
        %v4574 = vld [vmem:[%s4531 + $0xc2] sm:$0xff]
        %v4575 = vld [vmem:[%s4531 + $0xd2] sm:$0xff]
        %v4576 = vld [vmem:[%s4531 + $0xe2] sm:$0xff]
        %v4577 = vld [vmem:[%s4531 + $0xf2] sm:$0xff]
        %v4578 = vld [vmem:[%s4531 + $0x102] sm:$0xff]
        %v4579 = vld [vmem:[%s4531 + $0x112] sm:$0xff]
        %4596 = vrot.lane.b32.xlu0 %v4451, 64
        %v4597 = vpop.permute.xlu0 %4596
        %4598 = vrot.lane.b32.xlu0 %v4452, 64
        %v4599 = vpop.permute.xlu0 %4598
        %4600 = vrot.lane.b32.xlu0 %v4453, 64
        %v4601 = vpop.permute.xlu0 %4600
        %4602 = vrot.lane.b32.xlu0 %v4454, 64
        %v4603 = vpop.permute.xlu0 %4602
        %4604 = vrot.lane.b32.xlu0 %v4455, 64
        %v4605 = vpop.permute.xlu0 %4604
        %4606 = vrot.lane.b32.xlu0 %v4456, 64
        %v4607 = vpop.permute.xlu0 %4606
        %4608 = vrot.lane.b32.xlu0 %v4457, 64
        %v4609 = vpop.permute.xlu0 %4608
        %4610 = vrot.lane.b32.xlu0 %v4458, 64
        %v4611 = vpop.permute.xlu0 %4610
        %4612 = vrot.lane.b32.xlu0 %v4459, 64
        %v4613 = vpop.permute.xlu0 %4612
        %4614 = vrot.lane.b32.xlu0 %v4460, 64
        %v4615 = vpop.permute.xlu0 %4614
        %4616 = vrot.lane.b32.xlu0 %v4461, 64
        %v4617 = vpop.permute.xlu0 %4616
        %4618 = vrot.lane.b32.xlu0 %v4462, 64
        %v4619 = vpop.permute.xlu0 %4618
        %4620 = vrot.lane.b32.xlu0 %v4463, 64
        %v4621 = vpop.permute.xlu0 %4620
        %4622 = vrot.lane.b32.xlu0 %v4464, 64
        %v4623 = vpop.permute.xlu0 %4622
        %4624 = vrot.lane.b32.xlu0 %v4465, 64
        %v4625 = vpop.permute.xlu0 %4624
        %4626 = vrot.lane.b32.xlu0 %v4466, 64
        %v4627 = vpop.permute.xlu0 %4626
        %4660 = vrot.lane.b32.xlu0 %v4483, 64
        %v4661 = vpop.permute.xlu0 %4660
        %4662 = vrot.lane.b32.xlu0 %v4484, 64
        %v4663 = vpop.permute.xlu0 %4662
        %4664 = vrot.lane.b32.xlu0 %v4485, 64
        %v4665 = vpop.permute.xlu0 %4664
        %4666 = vrot.lane.b32.xlu0 %v4486, 64
        %v4667 = vpop.permute.xlu0 %4666
        %4668 = vrot.lane.b32.xlu0 %v4487, 64
        %v4669 = vpop.permute.xlu0 %4668
        %4670 = vrot.lane.b32.xlu0 %v4488, 64
        %v4671 = vpop.permute.xlu0 %4670
        %4672 = vrot.lane.b32.xlu0 %v4489, 64
        %v4673 = vpop.permute.xlu0 %4672
        %4674 = vrot.lane.b32.xlu0 %v4490, 64
        %v4675 = vpop.permute.xlu0 %4674
        %4676 = vrot.lane.b32.xlu0 %v4491, 64
        %v4677 = vpop.permute.xlu0 %4676
        %4678 = vrot.lane.b32.xlu0 %v4492, 64
        %v4679 = vpop.permute.xlu0 %4678
        %4680 = vrot.lane.b32.xlu0 %v4493, 64
        %v4681 = vpop.permute.xlu0 %4680
        %4682 = vrot.lane.b32.xlu0 %v4494, 64
        %v4683 = vpop.permute.xlu0 %4682
        %4684 = vrot.lane.b32.xlu0 %v4495, 64
        %v4685 = vpop.permute.xlu0 %4684
        %4686 = vrot.lane.b32.xlu0 %v4496, 64
        %v4687 = vpop.permute.xlu0 %4686
        %4688 = vrot.lane.b32.xlu0 %v4497, 64
        %v4689 = vpop.permute.xlu0 %4688
        %4690 = vrot.lane.b32.xlu0 %v4498, 64
        %v4691 = vpop.permute.xlu0 %4690
        %4724 = vrot.lane.b32.xlu0 %v4515, 64
        %v4725 = vpop.permute.xlu0 %4724
        %4726 = vrot.lane.b32.xlu0 %v4516, 64
        %v4727 = vpop.permute.xlu0 %4726
        %4728 = vrot.lane.b32.xlu0 %v4517, 64
        %v4729 = vpop.permute.xlu0 %4728
        %4730 = vrot.lane.b32.xlu0 %v4518, 64
        %v4731 = vpop.permute.xlu0 %4730
        %4732 = vrot.lane.b32.xlu0 %v4519, 64
        %v4733 = vpop.permute.xlu0 %4732
        %4734 = vrot.lane.b32.xlu0 %v4520, 64
        %v4735 = vpop.permute.xlu0 %4734
        %4736 = vrot.lane.b32.xlu0 %v4521, 64
        %v4737 = vpop.permute.xlu0 %4736
        %4738 = vrot.lane.b32.xlu0 %v4522, 64
        %v4739 = vpop.permute.xlu0 %4738
        %4740 = vrot.lane.b32.xlu0 %v4523, 64
        %v4741 = vpop.permute.xlu0 %4740
        %4742 = vrot.lane.b32.xlu0 %v4524, 64
        %v4743 = vpop.permute.xlu0 %4742
        %4744 = vrot.lane.b32.xlu0 %v4525, 64
        %v4745 = vpop.permute.xlu0 %4744
        %4746 = vrot.lane.b32.xlu0 %v4526, 64
        %v4747 = vpop.permute.xlu0 %4746
        %4748 = vrot.lane.b32.xlu0 %v4527, 64
        %v4749 = vpop.permute.xlu0 %4748
        %4750 = vrot.lane.b32.xlu0 %v4528, 64
        %v4751 = vpop.permute.xlu0 %4750
        %4752 = vrot.lane.b32.xlu0 %v4529, 64
        %v4753 = vpop.permute.xlu0 %4752
        %4754 = vrot.lane.b32.xlu0 %v4530, 64
        %v4755 = vpop.permute.xlu0 %4754
        %4788 = vrot.lane.b32.xlu0 %v4548, 64
        %v4789 = vpop.permute.xlu0 %4788
        %4790 = vrot.lane.b32.xlu0 %v4549, 64
        %v4791 = vpop.permute.xlu0 %4790
        %4792 = vrot.lane.b32.xlu0 %v4550, 64
        %v4793 = vpop.permute.xlu0 %4792
        %4794 = vrot.lane.b32.xlu0 %v4551, 64
        %v4795 = vpop.permute.xlu0 %4794
        %4796 = vrot.lane.b32.xlu0 %v4552, 64
        %v4797 = vpop.permute.xlu0 %4796
        %4798 = vrot.lane.b32.xlu0 %v4553, 64
        %v4799 = vpop.permute.xlu0 %4798
        %4800 = vrot.lane.b32.xlu0 %v4554, 64
        %v4801 = vpop.permute.xlu0 %4800
        %4802 = vrot.lane.b32.xlu0 %v4555, 64
        %v4803 = vpop.permute.xlu0 %4802
        %4804 = vrot.lane.b32.xlu0 %v4556, 64
        %v4805 = vpop.permute.xlu0 %4804
        %4806 = vrot.lane.b32.xlu0 %v4557, 64
        %v4807 = vpop.permute.xlu0 %4806
        %4808 = vrot.lane.b32.xlu0 %v4558, 64
        %v4809 = vpop.permute.xlu0 %4808
        %4810 = vrot.lane.b32.xlu0 %v4559, 64
        %v4811 = vpop.permute.xlu0 %4810
        %4812 = vrot.lane.b32.xlu0 %v4560, 64
        %v4813 = vpop.permute.xlu0 %4812
        %4814 = vrot.lane.b32.xlu0 %v4561, 64
        %v4815 = vpop.permute.xlu0 %4814
        %4816 = vrot.lane.b32.xlu0 %v4562, 64
        %v4817 = vpop.permute.xlu0 %4816
        %4818 = vrot.lane.b32.xlu0 %v4563, 64
        %v4819 = vpop.permute.xlu0 %4818
        %v4836 = vsel %vm4159, %v4435, %v4597
        %v4837 = vsel %vm4159, %v4436, %v4599
        %v4838 = vsel %vm4159, %v4437, %v4601
        %v4839 = vsel %vm4159, %v4438, %v4603
        %v4840 = vsel %vm4159, %v4439, %v4605
        %v4841 = vsel %vm4159, %v4440, %v4607
        %v4842 = vsel %vm4159, %v4441, %v4609
        %v4843 = vsel %vm4159, %v4442, %v4611
        %v4844 = vsel %vm4159, %v4443, %v4613
        %v4845 = vsel %vm4159, %v4444, %v4615
        %v4846 = vsel %vm4159, %v4445, %v4617
        %v4847 = vsel %vm4159, %v4446, %v4619
        %v4848 = vsel %vm4159, %v4447, %v4621
        %v4849 = vsel %vm4159, %v4448, %v4623
        %v4850 = vsel %vm4159, %v4449, %v4625
        %v4851 = vsel %vm4159, %v4450, %v4627
        %v4852 = vsel %vm4159, %v4467, %v4661
        %v4853 = vsel %vm4159, %v4468, %v4663
        %v4854 = vsel %vm4159, %v4469, %v4665
        %v4855 = vsel %vm4159, %v4470, %v4667
        %v4856 = vsel %vm4159, %v4471, %v4669
        %v4857 = vsel %vm4159, %v4472, %v4671
        %v4858 = vsel %vm4159, %v4473, %v4673
        %v4859 = vsel %vm4159, %v4474, %v4675
        %v4860 = vsel %vm4159, %v4475, %v4677
        %v4861 = vsel %vm4159, %v4476, %v4679
        %v4862 = vsel %vm4159, %v4477, %v4681
        %v4863 = vsel %vm4159, %v4478, %v4683
        %v4864 = vsel %vm4159, %v4479, %v4685
        %v4865 = vsel %vm4159, %v4480, %v4687
        %v4866 = vsel %vm4159, %v4481, %v4689
        %v4867 = vsel %vm4159, %v4482, %v4691
        %v4868 = vsel %vm4159, %v4499, %v4725
        %v4869 = vsel %vm4159, %v4500, %v4727
        %v4870 = vsel %vm4159, %v4501, %v4729
        %v4871 = vsel %vm4159, %v4502, %v4731
        %v4872 = vsel %vm4159, %v4503, %v4733
        %v4873 = vsel %vm4159, %v4504, %v4735
        %v4874 = vsel %vm4159, %v4505, %v4737
        %v4875 = vsel %vm4159, %v4506, %v4739
        %v4876 = vsel %vm4159, %v4507, %v4741
        %v4877 = vsel %vm4159, %v4508, %v4743
        %v4878 = vsel %vm4159, %v4509, %v4745
        %v4879 = vsel %vm4159, %v4510, %v4747
        %v4880 = vsel %vm4159, %v4511, %v4749
        %v4881 = vsel %vm4159, %v4512, %v4751
        %v4882 = vsel %vm4159, %v4513, %v4753
        %v4883 = vsel %vm4159, %v4514, %v4755
        %v4884 = vsel %vm4159, %v4532, %v4789
        %v4885 = vsel %vm4159, %v4533, %v4791
        %v4886 = vsel %vm4159, %v4534, %v4793
        %v4887 = vsel %vm4159, %v4535, %v4795
        %v4888 = vsel %vm4159, %v4536, %v4797
        %v4889 = vsel %vm4159, %v4537, %v4799
        %v4890 = vsel %vm4159, %v4538, %v4801
        %v4891 = vsel %vm4159, %v4539, %v4803
        %v4892 = vsel %vm4159, %v4540, %v4805
        %v4893 = vsel %vm4159, %v4541, %v4807
        %v4894 = vsel %vm4159, %v4542, %v4809
        %v4895 = vsel %vm4159, %v4543, %v4811
        %v4896 = vsel %vm4159, %v4544, %v4813
        %v4897 = vsel %vm4159, %v4545, %v4815
        %v4898 = vsel %vm4159, %v4546, %v4817
        %v4899 = vsel %vm4159, %v4547, %v4819
        %v4900 = vpack.c.bf16 %v4837, %v4836
        %v4901 = vpack.c.bf16 %v4853, %v4852
        %v4902 = vpack.c.bf16 %v4869, %v4868
        %v4903 = vpack.c.bf16 %v4885, %v4884
        %v4904 = vpack.c.bf16 %v4565, %v4564
        %v4905 = vpack.c.bf16 %v4839, %v4838
        %v4906 = vpack.c.bf16 %v4855, %v4854
        %v4907 = vpack.c.bf16 %v4871, %v4870
        %v4908 = vpack.c.bf16 %v4887, %v4886
        %v4909 = vpack.c.bf16 %v4567, %v4566
        %v4910 = vpack.c.bf16 %v4841, %v4840
        %v4911 = vpack.c.bf16 %v4857, %v4856
        %v4912 = vpack.c.bf16 %v4873, %v4872
        %v4913 = vpack.c.bf16 %v4889, %v4888
        %v4914 = vpack.c.bf16 %v4569, %v4568
        %v4915 = vpack.c.bf16 %v4843, %v4842
        %v4916 = vpack.c.bf16 %v4859, %v4858
        %v4917 = vpack.c.bf16 %v4875, %v4874
        %v4918 = vpack.c.bf16 %v4891, %v4890
        %v4919 = vpack.c.bf16 %v4571, %v4570
        %v4920 = vpack.c.bf16 %v4845, %v4844
        %v4921 = vpack.c.bf16 %v4861, %v4860
        %v4922 = vpack.c.bf16 %v4877, %v4876
        %v4923 = vpack.c.bf16 %v4893, %v4892
        %v4924 = vpack.c.bf16 %v4573, %v4572
        %v4925 = vpack.c.bf16 %v4847, %v4846
        %v4926 = vpack.c.bf16 %v4863, %v4862
        %v4927 = vpack.c.bf16 %v4879, %v4878
        %v4928 = vpack.c.bf16 %v4895, %v4894
        %v4929 = vpack.c.bf16 %v4575, %v4574
        %v4930 = vpack.c.bf16 %v4849, %v4848
        %v4931 = vpack.c.bf16 %v4865, %v4864
        %v4932 = vpack.c.bf16 %v4881, %v4880
        %v4933 = vpack.c.bf16 %v4897, %v4896
        %v4934 = vpack.c.bf16 %v4577, %v4576
        %v4935 = vpack.c.bf16 %v4851, %v4850
        %v4936 = vpack.c.bf16 %v4867, %v4866
        %v4937 = vpack.c.bf16 %v4883, %v4882
        %v4938 = vpack.c.bf16 %v4899, %v4898
        %v4939 = vpack.c.bf16 %v4579, %v4578
        %v4940 = vld [vmem:[#allocation6] sm:$0xf]
        %v4941 = vld [vmem:[#allocation6 + $0x4] sm:$0xf]
        %v4942 = vld [vmem:[#allocation6 + $0x8] sm:$0xf]
        %v4943 = vld [vmem:[#allocation6 + $0xc] sm:$0xf]
        %v4944 = vld [vmem:[#allocation6 + $0x10] sm:$0xf]
        %v4945 = vld [vmem:[#allocation6 + $0x14] sm:$0xf]
        %v4946 = vld [vmem:[#allocation6 + $0x18] sm:$0xf]
        %v4947 = vld [vmem:[#allocation6 + $0x1c] sm:$0xf]
        %v4948 = vld [vmem:[#allocation6 + $0x20] sm:$0xf]
        %v4949 = vld [vmem:[#allocation6 + $0x24] sm:$0xf]
        %v4950 = vld [vmem:[#allocation6 + $0x28] sm:$0xf]
        %v4951 = vld [vmem:[#allocation6 + $0x2c] sm:$0xf]
        %v4952 = vld [vmem:[#allocation6 + $0x30] sm:$0xf]
        %v4953 = vld [vmem:[#allocation6 + $0x34] sm:$0xf]
        %v4954 = vld [vmem:[#allocation6 + $0x38] sm:$0xf]
        %v4955 = vld [vmem:[#allocation6 + $0x3c] sm:$0xf]
        %v4956 = vld [vmem:[#allocation6 + $0x40] sm:$0xf]
        %v4957 = vld [vmem:[#allocation6 + $0x44] sm:$0xf]
        %v4958 = vld [vmem:[#allocation6 + $0x48] sm:$0xf]
        %v4959 = vld [vmem:[#allocation6 + $0x4c] sm:$0xf]
        %v4960 = vld [vmem:[#allocation6 + $0x50] sm:$0xf]
        %v4961 = vld [vmem:[#allocation6 + $0x54] sm:$0xf]
        %v4962 = vld [vmem:[#allocation6 + $0x58] sm:$0xf]
        %v4963 = vld [vmem:[#allocation6 + $0x5c] sm:$0xf]
        %v4964 = vld [vmem:[#allocation6 + $0x60] sm:$0xf]
        %v4965 = vld [vmem:[#allocation6 + $0x64] sm:$0xf]
        %v4966 = vld [vmem:[#allocation6 + $0x68] sm:$0xf]
        %v4967 = vld [vmem:[#allocation6 + $0x6c] sm:$0xf]
        %v4968 = vld [vmem:[#allocation6 + $0x70] sm:$0xf]
        %v4969 = vld [vmem:[#allocation6 + $0x74] sm:$0xf]
        %v4970 = vld [vmem:[#allocation6 + $0x78] sm:$0xf]
        %v4971 = vld [vmem:[#allocation6 + $0x7c] sm:$0xf]
        %v4972 = vld [vmem:[#allocation6 + $0x80] sm:$0xf]
        %v4973 = vld [vmem:[#allocation6 + $0x84] sm:$0xf]
        %v4974 = vld [vmem:[#allocation6 + $0x88] sm:$0xf]
        %v4975 = vld [vmem:[#allocation6 + $0x8c] sm:$0xf]
        %v4976 = vld [vmem:[#allocation6 + $0x90] sm:$0xf]
        %v4977 = vld [vmem:[#allocation6 + $0x94] sm:$0xf]
        %v4978 = vld [vmem:[#allocation6 + $0x98] sm:$0xf]
        %v4979 = vld [vmem:[#allocation6 + $0x9c] sm:$0xf]
        %v4980 = vld [vmem:[#allocation6 + $0xa0] sm:$0xf]
        %v4981 = vld [vmem:[#allocation6 + $0xa4] sm:$0xf]
        %v4982 = vld [vmem:[#allocation6 + $0xa8] sm:$0xf]
        %v4983 = vld [vmem:[#allocation6 + $0xac] sm:$0xf]
        %v4984 = vld [vmem:[#allocation6 + $0xb0] sm:$0xf]
        %v4985 = vld [vmem:[#allocation6 + $0xb4] sm:$0xf]
        %v4986 = vld [vmem:[#allocation6 + $0xb8] sm:$0xf]
        %v4987 = vld [vmem:[#allocation6 + $0xbc] sm:$0xf]
        %v4988 = vld [vmem:[#allocation6 + $0xc0] sm:$0xf]
        %v4989 = vld [vmem:[#allocation6 + $0xc4] sm:$0xf]
        %v4990 = vld [vmem:[#allocation6 + $0xc8] sm:$0xf]
        %v4991 = vld [vmem:[#allocation6 + $0xcc] sm:$0xf]
        %v4992 = vld [vmem:[#allocation6 + $0xd0] sm:$0xf]
        %v4993 = vld [vmem:[#allocation6 + $0xd4] sm:$0xf]
        %v4994 = vld [vmem:[#allocation6 + $0xd8] sm:$0xf]
        %v4995 = vld [vmem:[#allocation6 + $0xdc] sm:$0xf]
        %v4996 = vld [vmem:[#allocation6 + $0xe0] sm:$0xf]
        %v4997 = vld [vmem:[#allocation6 + $0xe4] sm:$0xf]
        %v4998 = vld [vmem:[#allocation6 + $0xe8] sm:$0xf]
        %v4999 = vld [vmem:[#allocation6 + $0xec] sm:$0xf]
        %v5000 = vld [vmem:[#allocation6 + $0xf0] sm:$0xf]
        %v5001 = vld [vmem:[#allocation6 + $0xf4] sm:$0xf]
        %v5002 = vld [vmem:[#allocation6 + $0xf8] sm:$0xf]
        %v5003 = vld [vmem:[#allocation6 + $0xfc] sm:$0xf]
        %v5004 = vld [vmem:[#allocation6 + $0x100] sm:$0xf]
        %v5005 = vld [vmem:[#allocation6 + $0x104] sm:$0xf]
        %v5006 = vld [vmem:[#allocation6 + $0x108] sm:$0xf]
        %v5007 = vld [vmem:[#allocation6 + $0x10c] sm:$0xf]
        %v5008 = vld [vmem:[#allocation6 + $0x110] sm:$0xf]
        %v5009 = vld [vmem:[#allocation6 + $0x114] sm:$0xf]
        %v5010 = vld [vmem:[#allocation6 + $0x118] sm:$0xf]
        %v5011 = vld [vmem:[#allocation6 + $0x11c] sm:$0xf]
        %v5084 = vunpack.c.l.b16 %v4940
        %v5085 = vunpack.c.l.b16 %v4941
        %v5086 = vunpack.c.l.b16 %v4942
        %v5087 = vunpack.c.l.b16 %v4943
        %v5088 = vunpack.c.l.b16 %v4944
        %v5089 = vunpack.c.l.b16 %v4945
        %v5090 = vunpack.c.l.b16 %v4946
        %v5091 = vunpack.c.l.b16 %v4947
        %v5092 = vunpack.c.l.b16 %v4948
        %v5093 = vunpack.c.l.b16 %v4949
        %v5094 = vunpack.c.l.b16 %v4950
        %v5095 = vunpack.c.l.b16 %v4951
        %v5096 = vunpack.c.l.b16 %v4952
        %v5097 = vunpack.c.l.b16 %v4953
        %v5098 = vunpack.c.l.b16 %v4954
        %v5099 = vunpack.c.l.b16 %v4955
        %v5100 = vunpack.c.l.b16 %v4956
        %v5101 = vunpack.c.l.b16 %v4957
        %v5102 = vunpack.c.l.b16 %v4958
        %v5103 = vunpack.c.l.b16 %v4959
        %v5104 = vunpack.c.l.b16 %v4960
        %v5105 = vunpack.c.l.b16 %v4961
        %v5106 = vunpack.c.l.b16 %v4962
        %v5107 = vunpack.c.l.b16 %v4963
        %v5108 = vunpack.c.l.b16 %v4964
        %v5109 = vunpack.c.l.b16 %v4965
        %v5110 = vunpack.c.l.b16 %v4966
        %v5111 = vunpack.c.l.b16 %v4967
        %v5112 = vunpack.c.l.b16 %v4968
        %v5113 = vunpack.c.l.b16 %v4969
        %v5114 = vunpack.c.l.b16 %v4970
        %v5115 = vunpack.c.l.b16 %v4971
        %v5116 = vunpack.c.l.b16 %v4972
        %v5117 = vunpack.c.l.b16 %v4973
        %v5118 = vunpack.c.l.b16 %v4974
        %v5119 = vunpack.c.l.b16 %v4975
        %v5120 = vunpack.c.l.b16 %v4976
        %v5121 = vunpack.c.l.b16 %v4977
        %v5122 = vunpack.c.l.b16 %v4978
        %v5123 = vunpack.c.l.b16 %v4979
        %v5124 = vunpack.c.l.b16 %v4980
        %v5125 = vunpack.c.l.b16 %v4981
        %v5126 = vunpack.c.l.b16 %v4982
        %v5127 = vunpack.c.l.b16 %v4983
        %v5128 = vunpack.c.l.b16 %v4984
        %v5129 = vunpack.c.l.b16 %v4985
        %v5130 = vunpack.c.l.b16 %v4986
        %v5131 = vunpack.c.l.b16 %v4987
        %v5132 = vunpack.c.l.b16 %v4988
        %v5133 = vunpack.c.l.b16 %v4989
        %v5134 = vunpack.c.l.b16 %v4990
        %v5135 = vunpack.c.l.b16 %v4991
        %v5136 = vunpack.c.l.b16 %v4992
        %v5137 = vunpack.c.l.b16 %v4993
        %v5138 = vunpack.c.l.b16 %v4994
        %v5139 = vunpack.c.l.b16 %v4995
        %v5140 = vunpack.c.l.b16 %v4996
        %v5141 = vunpack.c.l.b16 %v4997
        %v5142 = vunpack.c.l.b16 %v4998
        %v5143 = vunpack.c.l.b16 %v4999
        %v5144 = vunpack.c.l.b16 %v5000
        %v5145 = vunpack.c.l.b16 %v5001
        %v5146 = vunpack.c.l.b16 %v5002
        %v5147 = vunpack.c.l.b16 %v5003
        %v5148 = vunpack.c.l.b16 %v5004
        %v5149 = vunpack.c.l.b16 %v5005
        %v5150 = vunpack.c.l.b16 %v5006
        %v5151 = vunpack.c.l.b16 %v5007
        %v5152 = vunpack.c.l.b16 %v5008
        %v5153 = vunpack.c.l.b16 %v5009
        %v5154 = vunpack.c.l.b16 %v5010
        %v5155 = vunpack.c.l.b16 %v5011
        %v5156 = vpack.c.b16 %v5085, %v5084
        %v5157 = vpack.c.b16 %v5087, %v5086
        %v5158 = vpack.c.b16 %v5089, %v5088
        %v5159 = vpack.c.b16 %v5091, %v5090
        %v5160 = vpack.c.b16 %v5093, %v5092
        %v5161 = vpack.c.b16 %v5095, %v5094
        %v5162 = vpack.c.b16 %v5097, %v5096
        %v5163 = vpack.c.b16 %v5099, %v5098
        %v5164 = vpack.c.b16 %v5101, %v5100
        %v5165 = vpack.c.b16 %v5103, %v5102
        %v5166 = vpack.c.b16 %v5105, %v5104
        %v5167 = vpack.c.b16 %v5107, %v5106
        %v5168 = vpack.c.b16 %v5109, %v5108
        %v5169 = vpack.c.b16 %v5111, %v5110
        %v5170 = vpack.c.b16 %v5113, %v5112
        %v5171 = vpack.c.b16 %v5115, %v5114
        %v5172 = vpack.c.b16 %v5117, %v5116
        %v5173 = vpack.c.b16 %v5119, %v5118
        %v5174 = vpack.c.b16 %v5121, %v5120
        %v5175 = vpack.c.b16 %v5123, %v5122
        %v5176 = vpack.c.b16 %v5125, %v5124
        %v5177 = vpack.c.b16 %v5127, %v5126
        %v5178 = vpack.c.b16 %v5129, %v5128
        %v5179 = vpack.c.b16 %v5131, %v5130
        %v5180 = vpack.c.b16 %v5133, %v5132
        %v5181 = vpack.c.b16 %v5135, %v5134
        %v5182 = vpack.c.b16 %v5137, %v5136
        %v5183 = vpack.c.b16 %v5139, %v5138
        %v5184 = vpack.c.b16 %v5141, %v5140
        %v5185 = vpack.c.b16 %v5143, %v5142
        %v5186 = vpack.c.b16 %v5145, %v5144
        %v5187 = vpack.c.b16 %v5147, %v5146
        %v5188 = vpack.c.b16 %v5149, %v5148
        %v5189 = vpack.c.b16 %v5151, %v5150
        %v5190 = vpack.c.b16 %v5153, %v5152
        %v5191 = vpack.c.b16 %v5155, %v5154
        %v5229 = vsel %vm4159, %v4904, 0
        %v5232 = vsel %vm4159, %v4909, 0
        %v5235 = vsel %vm4159, %v4914, 0
        %v5238 = vsel %vm4159, %v4919, 0
        %v5241 = vsel %vm4159, %v4924, 0
        %v5244 = vsel %vm4159, %v4929, 0
        %v5247 = vsel %vm4159, %v4934, 0
        %v5250 = vsel %vm4159, %v4939, 0
        %5252 = vmatprep.subr.bf16.mxu0 0
        %5253 = vmatpush1.bf16.msra.mxu0 %v5156
        %5254 = vmatprep.subr.bf16.mxu0 0
        %5255 = vmatpush1.bf16.msra.mxu0 %v5157
        %5256 = vmatprep.subr.bf16.mxu0 0
        %5257 = vmatpush1.bf16.msra.mxu0 %v5158
        %5258 = vmatprep.subr.bf16.mxu0 0
        %5259 = vmatpush1.bf16.msra.mxu0 %v5159
        %5260 = vmatprep.subr.bf16.mxu0 0
        %5261 = vmatpush1.bf16.msra.mxu0 %v5160
        %5262 = vmatprep.subr.bf16.mxu0 0
        %5263 = vmatpush1.bf16.msra.mxu0 %v5161
        %5264 = vmatprep.subr.bf16.mxu0 0
        %5265 = vmatpush1.bf16.msra.mxu0 %v5162
        %5266 = vmatprep.subr.bf16.mxu0 0
        %5267 = vmatpush1.bf16.msra.mxu0 %v5163
        %5268 = vmatprep.subr.bf16.mxu0 0
        %5269 = vmatpush1.bf16.msra.mxu0 %v5164
        %5270 = vmatprep.subr.bf16.mxu0 0
        %5271 = vmatpush1.bf16.msra.mxu0 %v5165
        %5272 = vmatprep.subr.bf16.mxu0 0
        %5273 = vmatpush1.bf16.msra.mxu0 %v5166
        %5274 = vmatprep.subr.bf16.mxu0 0
        %5275 = vmatpush1.bf16.msra.mxu0 %v5167
        %5276 = vmatprep.subr.bf16.mxu0 0
        %5277 = vmatpush1.bf16.msra.mxu0 %v5168
        %5278 = vmatprep.subr.bf16.mxu0 0
        %5279 = vmatpush1.bf16.msra.mxu0 %v5169
        %5280 = vmatprep.subr.bf16.mxu0 0
        %5281 = vmatpush1.bf16.msra.mxu0 %v5170
        %5282 = vmatprep.subr.bf16.mxu0 0
        %5283 = vmatpush1.bf16.msra.mxu0 %v5171
        %5284 = vmatprep.mubr.bf16.mxu0 %v4901
        %5285 = vmatmul.mubr.bf16.gmra.mrb[0].mxu0 %v4900
        %v5286 = vpop.f32.mrb[0].mxu0
        %v5287 = vadd.f32 0.0, %v5286
        %v5288 = vpop.f32.mrb[0].mxu0
        %v5289 = vpop.f32.mrb[0].mxu0
        %v5290 = vadd.f32 0.0, %v5289
        %v5291 = vpop.f32.mrb[0].mxu0
        %5292 = vmatprep.mubr.bf16.mxu0 %v4906
        %5293 = vmatmul.mubr.bf16.gmra.mrb[0].mxu0 %v4905
        %v5294 = vpop.f32.mrb[0].mxu0
        %v5295 = vadd.f32 0.0, %v5294
        %v5296 = vpop.f32.mrb[0].mxu0
        %v5297 = vpop.f32.mrb[0].mxu0
        %v5298 = vadd.f32 0.0, %v5297
        %v5299 = vpop.f32.mrb[0].mxu0
        %5300 = vmatprep.mubr.bf16.mxu0 %v4911
        %5301 = vmatmul.mubr.bf16.gmra.mrb[0].mxu0 %v4910
        %v5302 = vpop.f32.mrb[0].mxu0
        %v5303 = vadd.f32 0.0, %v5302
        %v5304 = vpop.f32.mrb[0].mxu0
        %v5305 = vpop.f32.mrb[0].mxu0
        %v5306 = vadd.f32 0.0, %v5305
        %v5307 = vpop.f32.mrb[0].mxu0
        %5308 = vmatprep.mubr.bf16.mxu0 %v4916
        %5309 = vmatmul.mubr.bf16.gmra.mrb[0].mxu0 %v4915
        %v5310 = vpop.f32.mrb[0].mxu0
        %v5311 = vadd.f32 0.0, %v5310
        %v5312 = vpop.f32.mrb[0].mxu0
        %v5313 = vpop.f32.mrb[0].mxu0
        %v5314 = vadd.f32 0.0, %v5313
        %v5315 = vpop.f32.mrb[0].mxu0
        %5316 = vmatprep.mubr.bf16.mxu0 %v4921
        %5317 = vmatmul.mubr.bf16.gmra.mrb[0].mxu0 %v4920
        %v5318 = vpop.f32.mrb[0].mxu0
        %v5319 = vadd.f32 0.0, %v5318
        %v5320 = vpop.f32.mrb[0].mxu0
        %v5321 = vpop.f32.mrb[0].mxu0
        %v5322 = vadd.f32 0.0, %v5321
        %v5323 = vpop.f32.mrb[0].mxu0
        %5324 = vmatprep.mubr.bf16.mxu0 %v4926
        %5325 = vmatmul.mubr.bf16.gmra.mrb[0].mxu0 %v4925
        %v5326 = vpop.f32.mrb[0].mxu0
        %v5327 = vadd.f32 0.0, %v5326
        %v5328 = vpop.f32.mrb[0].mxu0
        %v5329 = vpop.f32.mrb[0].mxu0
        %v5330 = vadd.f32 0.0, %v5329
        %v5331 = vpop.f32.mrb[0].mxu0
        %5332 = vmatprep.mubr.bf16.mxu0 %v4931
        %5333 = vmatmul.mubr.bf16.gmra.mrb[0].mxu0 %v4930
        %v5334 = vpop.f32.mrb[0].mxu0
        %v5335 = vadd.f32 0.0, %v5334
        %v5336 = vpop.f32.mrb[0].mxu0
        %v5337 = vpop.f32.mrb[0].mxu0
        %v5338 = vadd.f32 0.0, %v5337
        %v5339 = vpop.f32.mrb[0].mxu0
        %5340 = vmatprep.mubr.bf16.mxu0 %v4936
        %5341 = vmatmul.mubr.bf16.gmra.mrb[0].mxu0 %v4935
        %v5342 = vpop.f32.mrb[0].mxu0
        %v5343 = vadd.f32 0.0, %v5342
        %v5344 = vpop.f32.mrb[0].mxu0
        %v5345 = vpop.f32.mrb[0].mxu0
        %v5346 = vadd.f32 0.0, %v5345
        %v5347 = vpop.f32.mrb[0].mxu0
        %5348 = vdwg.mxu0
        %5349 = vmatprep.subr.bf16.mxu0 0
        %5350 = vmatpush1.bf16.msra.mxu0 %v5172
        %5351 = vmatprep.subr.bf16.mxu0 0
        %5352 = vmatpush1.bf16.msra.mxu0 %v5173
        %5353 = vmatprep.subr.bf16.mxu0 0
        %5354 = vmatpush1.bf16.msra.mxu0 %v5174
        %5355 = vmatprep.subr.bf16.mxu0 0
        %5356 = vmatpush1.bf16.msra.mxu0 %v5175
        %5357 = vmatprep.subr.bf16.mxu0 0
        %5358 = vmatpush1.bf16.msra.mxu0 %v5176
        %5359 = vmatprep.subr.bf16.mxu0 0
        %5360 = vmatpush1.bf16.msra.mxu0 %v5177
        %5361 = vmatprep.subr.bf16.mxu0 0
        %5362 = vmatpush1.bf16.msra.mxu0 %v5178
        %5363 = vmatprep.subr.bf16.mxu0 0
        %5364 = vmatpush1.bf16.msra.mxu0 %v5179
        %5365 = vmatprep.subr.bf16.mxu0 0
        %5366 = vmatpush1.bf16.msra.mxu0 %v5180
        %5367 = vmatprep.subr.bf16.mxu0 0
        %5368 = vmatpush1.bf16.msra.mxu0 %v5181
        %5369 = vmatprep.subr.bf16.mxu0 0
        %5370 = vmatpush1.bf16.msra.mxu0 %v5182
        %5371 = vmatprep.subr.bf16.mxu0 0
        %5372 = vmatpush1.bf16.msra.mxu0 %v5183
        %5373 = vmatprep.subr.bf16.mxu0 0
        %5374 = vmatpush1.bf16.msra.mxu0 %v5184
        %5375 = vmatprep.subr.bf16.mxu0 0
        %5376 = vmatpush1.bf16.msra.mxu0 %v5185
        %5377 = vmatprep.subr.bf16.mxu0 0
        %5378 = vmatpush1.bf16.msra.mxu0 %v5186
        %5379 = vmatprep.subr.bf16.mxu0 0
        %5380 = vmatpush1.bf16.msra.mxu0 %v5187
        %5381 = vmatprep.mubr.bf16.mxu0 %v4903
        %5382 = vmatmul.mubr.bf16.gmra.mrb[0].mxu0 %v4902
        %v5383 = vpop.f32.mrb[0].mxu0
        %v5384 = vadd.f32 %v5287, %v5383
        %v5385 = vpop.f32.mrb[0].mxu0
        %v5386 = vpop.f32.mrb[0].mxu0
        %v5387 = vadd.f32 %v5290, %v5386
        %v5388 = vpop.f32.mrb[0].mxu0
        %5389 = vmatprep.mubr.bf16.mxu0 %v4908
        %5390 = vmatmul.mubr.bf16.gmra.mrb[0].mxu0 %v4907
        %v5391 = vpop.f32.mrb[0].mxu0
        %v5392 = vadd.f32 %v5295, %v5391
        %v5393 = vpop.f32.mrb[0].mxu0
        %v5394 = vpop.f32.mrb[0].mxu0
        %v5395 = vadd.f32 %v5298, %v5394
        %v5396 = vpop.f32.mrb[0].mxu0
        %5397 = vmatprep.mubr.bf16.mxu0 %v4913
        %5398 = vmatmul.mubr.bf16.gmra.mrb[0].mxu0 %v4912
        %v5399 = vpop.f32.mrb[0].mxu0
        %v5400 = vadd.f32 %v5303, %v5399
        %v5401 = vpop.f32.mrb[0].mxu0
        %v5402 = vpop.f32.mrb[0].mxu0
        %v5403 = vadd.f32 %v5306, %v5402
        %v5404 = vpop.f32.mrb[0].mxu0
        %5405 = vmatprep.mubr.bf16.mxu0 %v4918
        %5406 = vmatmul.mubr.bf16.gmra.mrb[0].mxu0 %v4917
        %v5407 = vpop.f32.mrb[0].mxu0
        %v5408 = vadd.f32 %v5311, %v5407
        %v5409 = vpop.f32.mrb[0].mxu0
        %v5410 = vpop.f32.mrb[0].mxu0
        %v5411 = vadd.f32 %v5314, %v5410
        %v5412 = vpop.f32.mrb[0].mxu0
        %5413 = vmatprep.mubr.bf16.mxu0 %v4923
        %5414 = vmatmul.mubr.bf16.gmra.mrb[0].mxu0 %v4922
        %v5415 = vpop.f32.mrb[0].mxu0
        %v5416 = vadd.f32 %v5319, %v5415
        %v5417 = vpop.f32.mrb[0].mxu0
        %v5418 = vpop.f32.mrb[0].mxu0
        %v5419 = vadd.f32 %v5322, %v5418
        %v5420 = vpop.f32.mrb[0].mxu0
        %5421 = vmatprep.mubr.bf16.mxu0 %v4928
        %5422 = vmatmul.mubr.bf16.gmra.mrb[0].mxu0 %v4927
        %v5423 = vpop.f32.mrb[0].mxu0
        %v5424 = vadd.f32 %v5327, %v5423
        %v5425 = vpop.f32.mrb[0].mxu0
        %v5426 = vpop.f32.mrb[0].mxu0
        %v5427 = vadd.f32 %v5330, %v5426
        %v5428 = vpop.f32.mrb[0].mxu0
        %5429 = vmatprep.mubr.bf16.mxu0 %v4933
        %5430 = vmatmul.mubr.bf16.gmra.mrb[0].mxu0 %v4932
        %v5431 = vpop.f32.mrb[0].mxu0
        %v5432 = vadd.f32 %v5335, %v5431
        %v5433 = vpop.f32.mrb[0].mxu0
        %v5434 = vpop.f32.mrb[0].mxu0
        %v5435 = vadd.f32 %v5338, %v5434
        %v5436 = vpop.f32.mrb[0].mxu0
        %5437 = vmatprep.mubr.bf16.mxu0 %v4938
        %5438 = vmatmul.mubr.bf16.gmra.mrb[0].mxu0 %v4937
        %v5439 = vpop.f32.mrb[0].mxu0
        %v5440 = vadd.f32 %v5343, %v5439
        %v5441 = vpop.f32.mrb[0].mxu0
        %v5442 = vpop.f32.mrb[0].mxu0
        %v5443 = vadd.f32 %v5346, %v5442
        %v5444 = vpop.f32.mrb[0].mxu0
        %5445 = vdwg.mxu0
        %5446 = vmatprep.subr.bf16.mxu0 0
        %5447 = vmatpush1.bf16.msra.mxu0 %v5188
        %5448 = vmatprep.subr.bf16.mxu0 0
        %5449 = vmatpush1.bf16.msra.mxu0 %v5189
        %5450 = vmatprep.subr.bf16.mxu0 0
        %5451 = vmatpush1.bf16.msra.mxu0 %v5190
        %5452 = vmatprep.subr.bf16.mxu0 0
        %5453 = vmatpush1.bf16.msra.mxu0 %v5191
        %5454 = vmatprep.subr.bf16.mxu0 0
        %5455 = vmatpush1.bf16.msra.mxu0 0
        %5456 = vmatprep.subr.bf16.mxu0 0
        %5457 = vmatpush1.bf16.msra.mxu0 0
        %5458 = vmatprep.subr.bf16.mxu0 0
        %5459 = vmatpush1.bf16.msra.mxu0 0
        %5460 = vmatprep.subr.bf16.mxu0 0
        %5461 = vmatpush1.bf16.msra.mxu0 0
        %5462 = vmatprep.subr.bf16.mxu0 0
        %5463 = vmatpush1.bf16.msra.mxu0 0
        %5464 = vmatprep.subr.bf16.mxu0 0
        %5465 = vmatpush1.bf16.msra.mxu0 0
        %5466 = vmatprep.subr.bf16.mxu0 0
        %5467 = vmatpush1.bf16.msra.mxu0 0
        %5468 = vmatprep.subr.bf16.mxu0 0
        %5469 = vmatpush1.bf16.msra.mxu0 0
        %5470 = vmatprep.subr.bf16.mxu0 0
        %5471 = vmatpush1.bf16.msra.mxu0 0
        %5472 = vmatprep.subr.bf16.mxu0 0
        %5473 = vmatpush1.bf16.msra.mxu0 0
        %5474 = vmatprep.subr.bf16.mxu0 0
        %5475 = vmatpush1.bf16.msra.mxu0 0
        %5476 = vmatprep.subr.bf16.mxu0 0
        %5477 = vmatpush1.bf16.msra.mxu0 0
        %5478 = vmatprep.mubr.bf16.mxu0 0
        %5479 = vmatmul.mubr.bf16.gmra.mrb[0].mxu0 %v5229
        %v5480 = vpop.f32.mrb[0].mxu0
        %v5481 = vadd.f32 %v5384, %v5480
        %v5482 = vpop.f32.mrb[0].mxu0
        %v5483 = vpop.f32.mrb[0].mxu0
        %v5484 = vadd.f32 %v5387, %v5483
        %v5485 = vpop.f32.mrb[0].mxu0
        %5486 = vmatprep.mubr.bf16.mxu0 0
        %5487 = vmatmul.mubr.bf16.gmra.mrb[0].mxu0 %v5232
        %v5488 = vpop.f32.mrb[0].mxu0
        %v5489 = vadd.f32 %v5392, %v5488
        %v5490 = vpop.f32.mrb[0].mxu0
        %v5491 = vpop.f32.mrb[0].mxu0
        %v5492 = vadd.f32 %v5395, %v5491
        %v5493 = vpop.f32.mrb[0].mxu0
        %5494 = vmatprep.mubr.bf16.mxu0 0
        %5495 = vmatmul.mubr.bf16.gmra.mrb[0].mxu0 %v5235
        %v5496 = vpop.f32.mrb[0].mxu0
        %v5497 = vadd.f32 %v5400, %v5496
        %v5498 = vpop.f32.mrb[0].mxu0
        %v5499 = vpop.f32.mrb[0].mxu0
        %v5500 = vadd.f32 %v5403, %v5499
        %v5501 = vpop.f32.mrb[0].mxu0
        %5502 = vmatprep.mubr.bf16.mxu0 0
        %5503 = vmatmul.mubr.bf16.gmra.mrb[0].mxu0 %v5238
        %v5504 = vpop.f32.mrb[0].mxu0
        %v5505 = vadd.f32 %v5408, %v5504
        %v5506 = vpop.f32.mrb[0].mxu0
        %v5507 = vpop.f32.mrb[0].mxu0
        %v5508 = vadd.f32 %v5411, %v5507
        %v5509 = vpop.f32.mrb[0].mxu0
        %5510 = vmatprep.mubr.bf16.mxu0 0
        %5511 = vmatmul.mubr.bf16.gmra.mrb[0].mxu0 %v5241
        %v5512 = vpop.f32.mrb[0].mxu0
        %v5513 = vadd.f32 %v5416, %v5512
        %v5514 = vpop.f32.mrb[0].mxu0
        %v5515 = vpop.f32.mrb[0].mxu0
        %v5516 = vadd.f32 %v5419, %v5515
        %v5517 = vpop.f32.mrb[0].mxu0
        %5518 = vmatprep.mubr.bf16.mxu0 0
        %5519 = vmatmul.mubr.bf16.gmra.mrb[0].mxu0 %v5244
        %v5520 = vpop.f32.mrb[0].mxu0
        %v5521 = vadd.f32 %v5424, %v5520
        %v5522 = vpop.f32.mrb[0].mxu0
        %v5523 = vpop.f32.mrb[0].mxu0
        %v5524 = vadd.f32 %v5427, %v5523
        %v5525 = vpop.f32.mrb[0].mxu0
        %5526 = vmatprep.mubr.bf16.mxu0 0
        %5527 = vmatmul.mubr.bf16.gmra.mrb[0].mxu0 %v5247
        %v5528 = vpop.f32.mrb[0].mxu0
        %v5529 = vadd.f32 %v5432, %v5528
        %v5530 = vpop.f32.mrb[0].mxu0
        %v5531 = vpop.f32.mrb[0].mxu0
        %v5532 = vadd.f32 %v5435, %v5531
        %v5533 = vpop.f32.mrb[0].mxu0
        %5534 = vmatprep.mubr.bf16.mxu0 0
        %5535 = vmatmul.mubr.bf16.gmra.mrb[0].mxu0 %v5250
        %v5536 = vpop.f32.mrb[0].mxu0
        %v5537 = vadd.f32 %v5440, %v5536
        %v5538 = vpop.f32.mrb[0].mxu0
        %v5539 = vpop.f32.mrb[0].mxu0
        %v5540 = vadd.f32 %v5443, %v5539
        %v5541 = vpop.f32.mrb[0].mxu0
        %5542 = vdwg.mxu0
        %v5543 = vld [vmem:[%s5] sm:$0x1]
        %v5545 = vlaneseq
        %v5546 = vshrl.u32 %v5545, 7
        %v5547 = vsub.s32 0, %v5546
        %v5548 = vrot.slane %v5543, %v5547
        %v5550 = vmul.f32 %v5481, %v5548
        %v5551 = vmul.f32 %v5484, %v5548
        %v5552 = vmul.f32 %v5489, %v5548
        %v5553 = vmul.f32 %v5492, %v5548
        %v5554 = vmul.f32 %v5497, %v5548
        %v5555 = vmul.f32 %v5500, %v5548
        %v5556 = vmul.f32 %v5505, %v5548
        %v5557 = vmul.f32 %v5508, %v5548
        %v5558 = vmul.f32 %v5513, %v5548
        %v5559 = vmul.f32 %v5516, %v5548
        %v5560 = vmul.f32 %v5521, %v5548
        %v5561 = vmul.f32 %v5524, %v5548
        %v5562 = vmul.f32 %v5529, %v5548
        %v5563 = vmul.f32 %v5532, %v5548
        %v5564 = vmul.f32 %v5537, %v5548
        %v5565 = vmul.f32 %v5540, %v5548
        %v5566 = vld [vmem:[%s6] sm:$0x1]
        %v5568 = vlaneseq
        %v5569 = vshrl.u32 %v5568, 7
        %v5570 = vsub.s32 0, %v5569
        %v5571 = vrot.slane %v5566, %v5570
        %v5573 = vadd.f32 %v5550, %v5571
        %v5574 = vadd.f32 %v5551, %v5571
        %v5575 = vadd.f32 %v5552, %v5571
        %v5576 = vadd.f32 %v5553, %v5571
        %v5577 = vadd.f32 %v5554, %v5571
        %v5578 = vadd.f32 %v5555, %v5571
        %v5579 = vadd.f32 %v5556, %v5571
        %v5580 = vadd.f32 %v5557, %v5571
        %v5581 = vadd.f32 %v5558, %v5571
        %v5582 = vadd.f32 %v5559, %v5571
        %v5583 = vadd.f32 %v5560, %v5571
        %v5584 = vadd.f32 %v5561, %v5571
        %v5585 = vadd.f32 %v5562, %v5571
        %v5586 = vadd.f32 %v5563, %v5571
        %v5587 = vadd.f32 %v5564, %v5571
        %v5588 = vadd.f32 %v5565, %v5571
        %v5589 = vmax.f32 %v5573, 0.0
        %v5590 = vmax.f32 %v5574, 0.0
        %v5591 = vmax.f32 %v5575, 0.0
        %v5592 = vmax.f32 %v5576, 0.0
        %v5593 = vmax.f32 %v5577, 0.0
        %v5594 = vmax.f32 %v5578, 0.0
        %v5595 = vmax.f32 %v5579, 0.0
        %v5596 = vmax.f32 %v5580, 0.0
        %v5597 = vmax.f32 %v5581, 0.0
        %v5598 = vmax.f32 %v5582, 0.0
        %v5599 = vmax.f32 %v5583, 0.0
        %v5600 = vmax.f32 %v5584, 0.0
        %v5601 = vmax.f32 %v5585, 0.0
        %v5602 = vmax.f32 %v5586, 0.0
        %v5603 = vmax.f32 %v5587, 0.0
        %v5604 = vmax.f32 %v5588, 0.0
        %v5605 = vmax.f32 %v5589, %v5590
        %v5606 = vmax.f32 %v5591, %v5592
        %v5607 = vmax.f32 %v5593, %v5594
        %v5608 = vmax.f32 %v5595, %v5596
        %v5609 = vmax.f32 %v5597, %v5598
        %v5610 = vmax.f32 %v5599, %v5600
        %v5611 = vmax.f32 %v5601, %v5602
        %v5612 = vmax.f32 %v5603, %v5604
        %5613 = vst [vmem:[#allocation5] sm:$0xff] %v5605
        %5614 = vst [vmem:[#allocation5 + $0x8] sm:$0xff] %v5606
        %5615 = vst [vmem:[#allocation5 + $0x10] sm:$0xff] %v5607
        %5616 = vst [vmem:[#allocation5 + $0x18] sm:$0xff] %v5608
        %5617 = vst [vmem:[#allocation5 + $0x20] sm:$0xff] %v5609
        %5618 = vst [vmem:[#allocation5 + $0x28] sm:$0xff] %v5610
        %5619 = vst [vmem:[#allocation5 + $0x30] sm:$0xff] %v5611
        %5620 = vst [vmem:[#allocation5 + $0x38] sm:$0xff] %v5612
        %v5621 = vld [vmem:[#allocation5] ss:$2 sm:$0xf]
        %s5622 = scalar_lea.vmem [#allocation5], 8
        %v5623 = vld [vmem:[%s5622] ss:$2 sm:$0xf]
        %s5624 = scalar_lea.vmem [#allocation5], 16
        %v5625 = vld [vmem:[%s5624] ss:$2 sm:$0xf]
        %s5626 = scalar_lea.vmem [#allocation5], 24
        %v5627 = vld [vmem:[%s5626] ss:$2 sm:$0xf]
        %s5628 = scalar_lea.vmem [#allocation5], 32
        %v5629 = vld [vmem:[%s5628] ss:$2 sm:$0xf]
        %s5630 = scalar_lea.vmem [#allocation5], 40
        %v5631 = vld [vmem:[%s5630] ss:$2 sm:$0xf]
        %s5632 = scalar_lea.vmem [#allocation5], 48
        %v5633 = vld [vmem:[%s5632] ss:$2 sm:$0xf]
        %s5634 = scalar_lea.vmem [#allocation5], 56
        %v5635 = vld [vmem:[%s5634] ss:$2 sm:$0xf]
        %s5636 = scalar_lea.vmem [#allocation5], 1
        %v5637 = vld [vmem:[%s5636] ss:$2 sm:$0xf]
        %s5638 = scalar_lea.vmem [#allocation5], 9
        %v5639 = vld [vmem:[%s5638] ss:$2 sm:$0xf]
        %s5640 = scalar_lea.vmem [#allocation5], 17
        %v5641 = vld [vmem:[%s5640] ss:$2 sm:$0xf]
        %s5642 = scalar_lea.vmem [#allocation5], 25
        %v5643 = vld [vmem:[%s5642] ss:$2 sm:$0xf]
        %s5644 = scalar_lea.vmem [#allocation5], 33
        %v5645 = vld [vmem:[%s5644] ss:$2 sm:$0xf]
        %s5646 = scalar_lea.vmem [#allocation5], 41
        %v5647 = vld [vmem:[%s5646] ss:$2 sm:$0xf]
        %s5648 = scalar_lea.vmem [#allocation5], 49
        %v5649 = vld [vmem:[%s5648] ss:$2 sm:$0xf]
        %s5650 = scalar_lea.vmem [#allocation5], 57
        %v5651 = vld [vmem:[%s5650] ss:$2 sm:$0xf]
        %v5652 = vmax.f32 %v5621, %v5637
        %v5653 = vmax.f32 %v5623, %v5639
        %v5654 = vmax.f32 %v5625, %v5641
        %v5655 = vmax.f32 %v5627, %v5643
        %v5656 = vmax.f32 %v5629, %v5645
        %v5657 = vmax.f32 %v5631, %v5647
        %v5658 = vmax.f32 %v5633, %v5649
        %v5659 = vmax.f32 %v5635, %v5651
        %v5660 = vsel %vm3657, %v5652, 0.0
        %v5661 = vsel %vm3657, %v5653, 0.0
        %v5662 = vadd.f32 %v5660, %v5661
        %v5663 = vsel %vm3657, %v5654, 0.0
        %v5664 = vadd.f32 %v5662, %v5663
        %v5665 = vsel %vm3657, %v5655, 0.0
        %v5666 = vadd.f32 %v5664, %v5665
        %v5667 = vsel %vm3657, %v5656, 0.0
        %v5668 = vsel %vm3657, %v5657, 0.0
        %v5669 = vadd.f32 %v5667, %v5668
        %v5670 = vsel %vm3657, %v5658, 0.0
        %v5671 = vadd.f32 %v5669, %v5670
        %v5672 = vsel %vm3657, %v5659, 0.0
        %v5673 = vadd.f32 %v5671, %v5672
        %v5674 = vsel %vm3657, %v5666, 0.0
        %v5675 = vrot.slane %v5674, 4
        %v5676 = vadd.f32 %v5674, %v5675
        %v5677 = vrot.slane %v5676, 2
        %v5678 = vadd.f32 %v5676, %v5677
        %v5679 = vrot.slane %v5678, 1
        %v5680 = vadd.f32 %v5678, %v5679
        %v5681 = vsel %vm3657, %v5673, 0.0
        %v5682 = vrot.slane %v5681, 4
        %v5683 = vadd.f32 %v5681, %v5682
        %v5684 = vrot.slane %v5683, 2
        %v5685 = vadd.f32 %v5683, %v5684
        %v5686 = vrot.slane %v5685, 1
        %v5687 = vadd.f32 %v5685, %v5686
        %v5688 = vmul.f32 %v5680, 0.0625
        %v5689 = vmul.f32 %v5687, 0.0625
        %v5690 = vld [vmem:[%s7] sm:$0xff]
        %v5691 = vld [vmem:[%s7 + $0x8] sm:$0xff]
        %v5692 = vld [vmem:[%s7 + $0x10] sm:$0xff]
        %v5693 = vld [vmem:[%s7 + $0x18] sm:$0xff]
        %v5694 = vld [vmem:[%s7 + $0x20] sm:$0xff]
        %v5695 = vld [vmem:[%s7 + $0x28] sm:$0xff]
        %v5696 = vld [vmem:[%s7 + $0x30] sm:$0xff]
        %v5697 = vld [vmem:[%s7 + $0x38] sm:$0xff]
        %v5698 = vld [vmem:[%s7 + $0x40] sm:$0xff]
        %v5699 = vld [vmem:[%s7 + $0x48] sm:$0xff]
        %v5700 = vld [vmem:[%s7 + $0x50] sm:$0xff]
        %v5701 = vld [vmem:[%s7 + $0x58] sm:$0xff]
        %v5702 = vld [vmem:[%s7 + $0x60] sm:$0xff]
        %v5703 = vld [vmem:[%s7 + $0x68] sm:$0xff]
        %v5704 = vld [vmem:[%s7 + $0x70] sm:$0xff]
        %v5705 = vld [vmem:[%s7 + $0x78] sm:$0xff]
        %v5706 = vld [vmem:[%s8] sm:$0x1]
        %v5708 = vlaneseq
        %v5709 = vshrl.u32 %v5708, 7
        %v5710 = vsub.s32 0, %v5709
        %v5711 = vrot.slane %v5706, %v5710
        %vm5715 = vcmask 1041409
        %v5716 = vsel %vm5715, %v5689, %v5688
        %5718 = vmatprep.subr.mxu0 0.0
        %5719 = vmatpush1.msra.mxu0 %v5690
        %5720 = vmatprep.subr.mxu0 0.0
        %5721 = vmatpush1.msra.mxu0 %v5691
        %5722 = vmatprep.subr.mxu0 0.0
        %5723 = vmatpush1.msra.mxu0 %v5692
        %5724 = vmatprep.subr.mxu0 0.0
        %5725 = vmatpush1.msra.mxu0 %v5693
        %5726 = vmatprep.subr.mxu0 0.0
        %5727 = vmatpush1.msra.mxu0 %v5694
        %5728 = vmatprep.subr.mxu0 0.0
        %5729 = vmatpush1.msra.mxu0 %v5695
        %5730 = vmatprep.subr.mxu0 0.0
        %5731 = vmatpush1.msra.mxu0 %v5696
        %5732 = vmatprep.subr.mxu0 0.0
        %5733 = vmatpush1.msra.mxu0 %v5697
        %5734 = vmatprep.subr.mxu0 0.0
        %5735 = vmatpush1.msra.mxu0 %v5698
        %5736 = vmatprep.subr.mxu0 0.0
        %5737 = vmatpush1.msra.mxu0 %v5699
        %5738 = vmatprep.subr.mxu0 0.0
        %5739 = vmatpush1.msra.mxu0 %v5700
        %5740 = vmatprep.subr.mxu0 0.0
        %5741 = vmatpush1.msra.mxu0 %v5701
        %5742 = vmatprep.subr.mxu0 0.0
        %5743 = vmatpush1.msra.mxu0 %v5702
        %5744 = vmatprep.subr.mxu0 0.0
        %5745 = vmatpush1.msra.mxu0 %v5703
        %5746 = vmatprep.subr.mxu0 0.0
        %5747 = vmatpush1.msra.mxu0 %v5704
        %5748 = vmatprep.subr.mxu0 0.0
        %5749 = vmatpush1.msra.mxu0 %v5705
        %5750 = vmatprep.subr.mxu0 0.0
        %5751 = vmatpush1.msra.mxu0 0.0
        %5752 = vmatprep.subr.mxu0 0.0
        %5753 = vmatpush1.msra.mxu0 0.0
        %5754 = vmatprep.subr.mxu0 0.0
        %5755 = vmatpush1.msra.mxu0 0.0
        %5756 = vmatprep.subr.mxu0 0.0
        %5757 = vmatpush1.msra.mxu0 0.0
        %5758 = vmatprep.subr.mxu0 0.0
        %5759 = vmatpush1.msra.mxu0 0.0
        %5760 = vmatprep.subr.mxu0 0.0
        %5761 = vmatpush1.msra.mxu0 0.0
        %5762 = vmatprep.subr.mxu0 0.0
        %5763 = vmatpush1.msra.mxu0 0.0
        %5764 = vmatprep.subr.mxu0 0.0
        %5765 = vmatpush1.msra.mxu0 0.0
        %5766 = vmatprep.subr.mxu0 0.0
        %5767 = vmatpush1.msra.mxu0 0.0
        %5768 = vmatprep.subr.mxu0 0.0
        %5769 = vmatpush1.msra.mxu0 0.0
        %5770 = vmatprep.subr.mxu0 0.0
        %5771 = vmatpush1.msra.mxu0 0.0
        %5772 = vmatprep.subr.mxu0 0.0
        %5773 = vmatpush1.msra.mxu0 0.0
        %5774 = vmatprep.subr.mxu0 0.0
        %5775 = vmatpush1.msra.mxu0 0.0
        %5776 = vmatprep.subr.mxu0 0.0
        %5777 = vmatpush1.msra.mxu0 0.0
        %5778 = vmatprep.subr.mxu0 0.0
        %5779 = vmatpush1.msra.mxu0 0.0
        %5780 = vmatprep.subr.mxu0 0.0
        %5781 = vmatpush1.msra.mxu0 0.0
        %5782 = vmatprep.mubr.f32.mxu0 0.0
        %5783 = vmatmul.mubr.f32.gmra.mrb[0].mxu0 %v5716
        %v5784 = vpop.f32.mrb[0].mxu0
        %v5785 = vadd.f32 %v5711, %v5784
        %v5786 = vpop.f32.mrb[0].mxu0
        %5787 = vdwg.mxu0
        %vm5788 = vcmask 74752
        %5789 = vst.msk [vmem:[%s343] sm:$0x3] %vm5788, %v5785
        %s5790 = sand.u32 %s226, 1
        %s5791 = scalar_lea.sflag [#allocation8], %s5790
        %s5792 = sand.u32 %s226, 1
        %s5793 = smul.addr %s5792, 2
        %s5794 = scalar_lea.vmem [#allocation9], %s5793
        // Predicated region
        $region61: #{tpu_custom_call.1} parent=55 // pred_check
          %p5795 = pneg %p236
        $region62: #{tpu_custom_call.1} parent=55 // pred_check_branch
          %5797 = sbr.rel (%p5795) target = $region64
        $region63: #{tpu_custom_call.1} parent=55 // pred_region
          %s5799 = ssub.s32 32, 32
          %5800 = vsyncadd %s5791, %s5799
          %s5801 = smul.addr %s24, 32
          %s5802 = scalar_lea.hbm %s9, %s5801
          %s5804 = sshll.u32 %s5794, 4
          %s5805 = int_to_ptr.vmem [resolvable:$true] %s5804
          %5807 = dma.vmem_to_hbm [thread:$0]  %s5805, 32, %s5802, %s5791
        $region64: #{tpu_custom_call.1} parent=55 // pred_fallthru
          _
      $region56: #{tpu_custom_call.1} parent=5 // pred_fallthru
        _
      %p5808 = scmp.le.s32.totalorder 2, %s19
      // Predicated region
      $region65: #{tpu_custom_call.1} parent=5 // pred_check
        %p5809 = pneg %p5808
      $region66: #{tpu_custom_call.1} parent=5 // pred_check_branch
        %5811 = sbr.rel (%p5809) target = $region68
      $region67: #{tpu_custom_call.1} parent=5 // pred_region
        %s5812 = ssub.s32 %s19, 2
        // Predicated region
        $region69: #{tpu_custom_call.1} parent=67 // pred_check
          %p5813 = pneg %p242
        $region70: #{tpu_custom_call.1} parent=67 // pred_check_branch
          %5815 = sbr.rel (%p5813) target = $region72
        $region71: #{tpu_custom_call.1} parent=67 // pred_region
          %s5816 = sand.u32 %s227, 1
          %s5817 = scalar_lea.sflag [#allocation8], %s5816
          %s5818 = sand.u32 %s227, 1
          %s5819 = smul.addr %s5818, 2
          %s5820 = scalar_lea.vmem [#allocation9], %s5819
          %5821 = dma.done %s5817, 32
        $region72: #{tpu_custom_call.1} parent=67 // pred_fallthru
          _
      $region68: #{tpu_custom_call.1} parent=5 // pred_fallthru
        _
    $region6: #{tpu_custom_call.1} parent=1 // loop_footer
      %s23 = sadd.s32 1, %s19
    $region7: #{tpu_custom_call.1} parent=1 // loop_footer_branch
      %18 = sbr.rel target = $region3
    $region8: #{tpu_custom_call.1} parent=1 // loop_exit
      _
    %5822 = vsyncpa [#allocation7], 1
    %s5823 = scalar_lea.sflag [#allocation7], 1
    %5824 = vsyncpa %s5823, 1
    %5825 = vsyncpa [#allocation8], 1
    %s5826 = scalar_lea.sflag [#allocation8], 1
    %5827 = vsyncpa %s5826, 1

</llo_original>
